<compile_context>
chip_gen: v7x
topology: tpu7x:2x2x1
jax: 0.10.0
libtpu: 0.0.40
codegen_flags: <defaults>
</compile_context>

<pallas_src>
import jax
import jax.numpy as jnp
from jax import lax
from jax.experimental import pallas as pl
from jax.experimental.pallas import tpu as pltpu


# ----------------------------------------------------------------------------
# Fused kernel: embedding (one-hot matmul) + stacked GRU layers.
# All tensors time-major; activations are kept flat over (T*B, feature) so the
# serial loop only needs dynamic sublane slices (pl.ds) of VMEM buffers.
# ----------------------------------------------------------------------------
def _make_fused_gru_kernel(num_layers, T, B, E, H, V):
    N = T * B

    def kernel(ids_ref, table_ref, *refs):
        wih_refs = refs[0:num_layers]                 # each (E_in, 3H)
        whh_refs = refs[num_layers:2 * num_layers]    # each (H, 3H)
        bih_refs = refs[2 * num_layers:3 * num_layers]  # each (1, 3H)
        bhh_refs = refs[3 * num_layers:4 * num_layers]  # each (1, 3H)
        out_ref = refs[4 * num_layers]                # (N, H), flat time-major output
        state_ref = refs[4 * num_layers + 1]          # (L, B, H)
        gi_scr = refs[4 * num_layers + 2]             # (N, 3H) precomputed input gates
        h_scr = refs[4 * num_layers + 3]              # (B, H) running hidden state

        # ---- embedding lookup as a one-hot MXU matmul (vectorized gather) ----
        ids = ids_ref[...]                                                # (N, 1) int32
        onehot = jnp.where(
            ids == lax.broadcasted_iota(jnp.int32, (N, V), 1), 1.0, 0.0)  # (N, V) f32
        x = jnp.dot(onehot, table_ref[...],
                    preferred_element_type=jnp.float32)                   # (N, E)

        for l in range(num_layers):
            wih = wih_refs[l][...]     # (E_in, 3H)
            whh = whh_refs[l][...]     # (H, 3H)
            bih = bih_refs[l][...]     # (1, 3H)
            bhh = bhh_refs[l][...]     # (1, 3H)

            # Hoisted input projection for ALL timesteps (bias folded in):
            # one big matmul outside the recurrence.
            gi_scr[...] = jnp.dot(x, wih, preferred_element_type=jnp.float32) + bih

            h_scr[...] = jnp.zeros_like(h_scr)

            def step(t, carry, whh=whh, bhh=bhh):
                row = t * B
                gi = gi_scr[pl.ds(row, B), :]                             # (B, 3H)
                h = h_scr[...]                                            # (B, H)
                gh = jnp.dot(h, whh, preferred_element_type=jnp.float32) + bhh
                r = jax.nn.sigmoid(gi[:, 0:H] + gh[:, 0:H])
                z = jax.nn.sigmoid(gi[:, H:2 * H] + gh[:, H:2 * H])
                n = jnp.tanh(gi[:, 2 * H:3 * H] + r * gh[:, 2 * H:3 * H])
                h_new = (1.0 - z) * n + z * h
                h_scr[...] = h_new
                # out_ref is VMEM-resident during the kernel; it doubles as the
                # inter-layer activation buffer (overwritten in place per layer).
                out_ref[pl.ds(row, B), :] = h_new
                return carry

            lax.fori_loop(0, T, step, 0, unroll=True)

            state_ref[l] = h_scr[...]
            if l + 1 < num_layers:
                x = out_ref[...]   # layer output (fully written) -> next layer's input

    return kernel


# ----------------------------------------------------------------------------
# Wrapper: builds inputs, calls pallas_call once (grid-less), reshapes output.
# ----------------------------------------------------------------------------
def seq2seq_gru_forward(params, X):
    """X: (batch, num_steps) int token ids.
    Returns (outputs (T, B, H), state (num_layers, B, H))."""
    B, T = X.shape
    V, E = params["embedding"].shape
    H = params["layers"][0][1].shape[0]     # W_hh: (H, 3H)
    L = len(params["layers"])
    N = T * B

    # X.t() -> time-major ids, flattened row-major over (T, B): index = t*B + b.
    ids = jnp.transpose(X).astype(jnp.int32).reshape(N, 1)

    inputs = [ids, params["embedding"]]
    inputs += [lyr[0] for lyr in params["layers"]]   # W_ih  (E_in, 3H)
    inputs += [lyr[1] for lyr in params["layers"]]   # W_hh  (H, 3H)
    inputs += [lyr[2] for lyr in params["layers"]]   # b_ih  (1, 3H)
    inputs += [lyr[3] for lyr in params["layers"]]   # b_hh  (1, 3H)

    kernel = _make_fused_gru_kernel(L, T, B, E, H, V)
    out_flat, state = pl.pallas_call(
        kernel,
        out_shape=(
            jax.ShapeDtypeStruct((N, H), jnp.float32),
            jax.ShapeDtypeStruct((L, B, H), jnp.float32),
        ),
        in_specs=[pl.BlockSpec(memory_space=pltpu.MemorySpace.VMEM)
                  for _ in inputs],
        out_specs=(pl.BlockSpec(memory_space=pltpu.MemorySpace.VMEM),
                   pl.BlockSpec(memory_space=pltpu.MemorySpace.VMEM)),
        scratch_shapes=[
            pltpu.VMEM((N, 3 * H), jnp.float32),   # precomputed input gates
            pltpu.VMEM((B, H), jnp.float32),       # running hidden state
        ],
    )(*inputs)

    outputs = out_flat.reshape(T, B, H)
    return outputs, state


# ----------------------------------------------------------------------------
# Parameter init (fused-gate layout): W_ih -> (E_in, 3H), W_hh -> (H, 3H),
# biases -> (1, 3H); gate order along 3H is (r, z, n) as in PyTorch.
# ----------------------------------------------------------------------------
def xavier_uniform(key, fan_in, fan_out, shape):
    bound = (6.0 / (fan_in + fan_out)) ** 0.5
    return jax.random.uniform(key, shape, jnp.float32, -bound, bound)


def init_params(key, vocab_size, embed_size, num_hiddens, num_layers):
    keys = jax.random.split(key, 1 + 4 * num_layers)
    params = {"embedding": jax.random.normal(
        keys[0], (vocab_size, embed_size), jnp.float32)}
    layers = []
    kbound = 1.0 / (num_hiddens ** 0.5)
    for l in range(num_layers):
        e_in = embed_size if l == 0 else num_hiddens
        k_wih, k_whh, k_bih, k_bhh = keys[1 + 4 * l: 5 + 4 * l]
        wih = xavier_uniform(k_wih, e_in, 3 * num_hiddens, (e_in, 3 * num_hiddens))
        whh = xavier_uniform(k_whh, num_hiddens, 3 * num_hiddens,
                             (num_hiddens, 3 * num_hiddens))
        bih = jax.random.uniform(k_bih, (1, 3 * num_hiddens), jnp.float32,
                                 -kbound, kbound)
        bhh = jax.random.uniform(k_bhh, (1, 3 * num_hiddens), jnp.float32,
                                 -kbound, kbound)
        layers.append((wih, whh, bih, bhh))
    params["layers"] = layers
    return params


# ----------------------------------------------------------------------------
# Pure-JAX reference (lax.scan) for the correctness check.
# ----------------------------------------------------------------------------
def _gru_layer_ref(x, wih, whh, bih, bhh):
    H = whh.shape[0]

    def step(h, xt):
        gi = xt @ wih + bih[0]
        gh = h @ whh + bhh[0]
        r = jax.nn.sigmoid(gi[:, 0:H] + gh[:, 0:H])
        z = jax.nn.sigmoid(gi[:, H:2 * H] + gh[:, H:2 * H])
        n = jnp.tanh(gi[:, 2 * H:3 * H] + r * gh[:, 2 * H:3 * H])
        h_new = (1.0 - z) * n + z * h
        return h_new, h_new

    h0 = jnp.zeros((x.shape[1], H), jnp.float32)
    h_final, outs = lax.scan(step, h0, x)
    return outs, h_final


def seq2seq_gru_ref(params, X):
    ids = jnp.transpose(X).astype(jnp.int32)        # (T, B)
    embs = params["embedding"][ids]                 # (T, B, E)
    layer_in = embs
    states = []
    for (wih, whh, bih, bhh) in params["layers"]:
        layer_out, h_final = _gru_layer_ref(layer_in, wih, whh, bih, bhh)
        states.append(h_final)
        layer_in = layer_out
    return layer_in, jnp.stack(states, axis=0)


if __name__ == "__main__":
    vocab_size, embed_size, num_hiddens, num_layers = 40, 32, 32, 2
    batch, num_steps = 4, 8

    key = jax.random.PRNGKey(0)
    k_params, k_x = jax.random.split(key)
    params = init_params(k_params, vocab_size, embed_size, num_hiddens, num_layers)
    X = jax.random.randint(k_x, (batch, num_steps), 0, vocab_size, jnp.int32)

    outputs, state = seq2seq_gru_forward(params, X)
    outputs = jax.block_until_ready(outputs)
    state = jax.block_until_ready(state)

    # sanity check against pure-JAX reference
    ref_out, ref_state = seq2seq_gru_ref(params, X)
    assert outputs.shape == (num_steps, batch, num_hiddens)
    assert state.shape == (num_layers, batch, num_hiddens)
    assert jnp.allclose(outputs, ref_out, atol=1e-4, rtol=1e-4)
    assert jnp.allclose(state, ref_state, atol=1e-4, rtol=1e-4)

    print("KERNEL_OK")
</pallas_src>

<mosaic_0001>
module attributes {stable_mosaic.version = 11 : i64} {
  func.func @kernel(%arg0: memref<32x1xi32, #tpu.memory_space<vmem>>, %arg1: memref<40x32xf32, #tpu.memory_space<vmem>>, %arg2: memref<32x96xf32, #tpu.memory_space<vmem>>, %arg3: memref<32x96xf32, #tpu.memory_space<vmem>>, %arg4: memref<32x96xf32, #tpu.memory_space<vmem>>, %arg5: memref<32x96xf32, #tpu.memory_space<vmem>>, %arg6: memref<1x96xf32, #tpu.memory_space<vmem>>, %arg7: memref<1x96xf32, #tpu.memory_space<vmem>>, %arg8: memref<1x96xf32, #tpu.memory_space<vmem>>, %arg9: memref<1x96xf32, #tpu.memory_space<vmem>>, %arg10: memref<32x32xf32, #tpu.memory_space<vmem>>, %arg11: memref<2x4x32xf32, #tpu.memory_space<vmem>>, %arg12: memref<32x96xf32, #tpu.memory_space<vmem>>, %arg13: memref<4x32xf32, #tpu.memory_space<vmem>>) attributes {dimension_semantics = [], scalar_prefetch = 0 : i64, scratch_operands = 2 : i64, tpu.core_type = #tpu.core_type<tc>} {
    %c0 = arith.constant 0 : index
    %c0_0 = arith.constant 0 : index
    %0 = vector.load %arg0[%c0, %c0_0] : memref<32x1xi32, #tpu.memory_space<vmem>>, vector<32x1xi32>
    %1 = tpu.iota {dimensions = array<i32: 1>} : vector<32x40xi32>
    %2 = vector.broadcast %0 : vector<32x1xi32> to vector<32x40xi32>
    %3 = arith.cmpi eq, %2, %1 : vector<32x40xi32>
    %cst = arith.constant 1.000000e+00 : f32
    %cst_1 = arith.constant 0.000000e+00 : f32
    %4 = vector.broadcast %cst : f32 to vector<32x40xf32>
    %5 = vector.broadcast %cst_1 : f32 to vector<32x40xf32>
    %6 = arith.select %3, %4, %5 : vector<32x40xi1>, vector<32x40xf32>
    %c0_2 = arith.constant 0 : index
    %c0_3 = arith.constant 0 : index
    %7 = vector.load %arg1[%c0_2, %c0_3] : memref<40x32xf32, #tpu.memory_space<vmem>>, vector<40x32xf32>
    %cst_4 = arith.constant dense<0.000000e+00> : vector<32x32xf32>
    %8 = tpu.matmul %6, %7, %cst_4 {dimension_numbers = #tpu.dot_dimension_numbers<[1], [0], [0], [1], [0, 0, 1, 1], [], []>} : vector<32x40xf32>, vector<40x32xf32>, vector<32x32xf32> -> vector<32x32xf32>
    %c0_5 = arith.constant 0 : index
    %c0_6 = arith.constant 0 : index
    %9 = vector.load %arg2[%c0_5, %c0_6] : memref<32x96xf32, #tpu.memory_space<vmem>>, vector<32x96xf32>
    %c0_7 = arith.constant 0 : index
    %c0_8 = arith.constant 0 : index
    %10 = vector.load %arg4[%c0_7, %c0_8] : memref<32x96xf32, #tpu.memory_space<vmem>>, vector<32x96xf32>
    %c0_9 = arith.constant 0 : index
    %c0_10 = arith.constant 0 : index
    %11 = vector.load %arg6[%c0_9, %c0_10] : memref<1x96xf32, #tpu.memory_space<vmem>>, vector<1x96xf32>
    %c0_11 = arith.constant 0 : index
    %c0_12 = arith.constant 0 : index
    %12 = vector.load %arg8[%c0_11, %c0_12] : memref<1x96xf32, #tpu.memory_space<vmem>>, vector<1x96xf32>
    %cst_13 = arith.constant dense<0.000000e+00> : vector<32x96xf32>
    %13 = tpu.matmul %8, %9, %cst_13 {dimension_numbers = #tpu.dot_dimension_numbers<[1], [0], [0], [1], [0, 0, 1, 1], [], []>} : vector<32x32xf32>, vector<32x96xf32>, vector<32x96xf32> -> vector<32x96xf32>
    %14 = vector.broadcast %11 : vector<1x96xf32> to vector<32x96xf32>
    %15 = arith.addf %13, %14 : vector<32x96xf32>
    %c0_14 = arith.constant 0 : index
    %c0_15 = arith.constant 0 : index
    %16 = vector.load %arg12[%c0_14, %c0_15] : memref<32x96xf32, #tpu.memory_space<vmem>>, vector<32x96xf32>
    tpu.vector_store %arg12[%c0_14, %c0_15], %15 {strides = array<i32>} : memref<32x96xf32, #tpu.memory_space<vmem>>, vector<32x96xf32>,
    %cst_16 = arith.constant 0.000000e+00 : f32
    %17 = vector.broadcast %cst_16 : f32 to vector<4x32xf32>
    %c0_17 = arith.constant 0 : index
    %c0_18 = arith.constant 0 : index
    %18 = vector.load %arg13[%c0_17, %c0_18] : memref<4x32xf32, #tpu.memory_space<vmem>>, vector<4x32xf32>
    tpu.vector_store %arg13[%c0_17, %c0_18], %17 {strides = array<i32>} : memref<4x32xf32, #tpu.memory_space<vmem>>, vector<4x32xf32>,
    %c0_i32 = arith.constant 0 : i32
    %c4_i32 = arith.constant 4 : i32
    %19 = arith.muli %c0_i32, %c4_i32 : i32
    %20 = arith.index_cast %19 : i32 to index
    %c0_19 = arith.constant 0 : index
    %21 = vector.load %arg12[%20, %c0_19] : memref<32x96xf32, #tpu.memory_space<vmem>>, vector<4x96xf32>
    %c0_20 = arith.constant 0 : index
    %c0_21 = arith.constant 0 : index
    %22 = vector.load %arg13[%c0_20, %c0_21] : memref<4x32xf32, #tpu.memory_space<vmem>>, vector<4x32xf32>
    %cst_22 = arith.constant dense<0.000000e+00> : vector<4x96xf32>
    %23 = tpu.matmul %22, %10, %cst_22 {dimension_numbers = #tpu.dot_dimension_numbers<[1], [0], [0], [1], [0, 0, 1, 1], [], []>} : vector<4x32xf32>, vector<32x96xf32>, vector<4x96xf32> -> vector<4x96xf32>
    %24 = vector.broadcast %12 : vector<1x96xf32> to vector<4x96xf32>
    %25 = arith.addf %23, %24 : vector<4x96xf32>
    %26 = vector.extract_strided_slice %21 {offsets = [0, 0], sizes = [4, 32], strides = [1, 1]} : vector<4x96xf32> to vector<4x32xf32>
    %27 = vector.extract_strided_slice %25 {offsets = [0, 0], sizes = [4, 32], strides = [1, 1]} : vector<4x96xf32> to vector<4x32xf32>
    %28 = arith.addf %26, %27 : vector<4x32xf32>
    %29 = arith.negf %28 : vector<4x32xf32>
    %30 = math.exp %29 : vector<4x32xf32>
    %cst_23 = arith.constant 1.000000e+00 : f32
    %31 = vector.broadcast %cst_23 : f32 to vector<4x32xf32>
    %32 = arith.addf %31, %30 : vector<4x32xf32>
    %33 = arith.divf %31, %32 : vector<4x32xf32>
    %34 = vector.extract_strided_slice %21 {offsets = [0, 32], sizes = [4, 32], strides = [1, 1]} : vector<4x96xf32> to vector<4x32xf32>
    %35 = vector.extract_strided_slice %25 {offsets = [0, 32], sizes = [4, 32], strides = [1, 1]} : vector<4x96xf32> to vector<4x32xf32>
    %36 = arith.addf %34, %35 : vector<4x32xf32>
    %37 = arith.negf %36 : vector<4x32xf32>
    %38 = math.exp %37 : vector<4x32xf32>
    %cst_24 = arith.constant 1.000000e+00 : f32
    %39 = vector.broadcast %cst_24 : f32 to vector<4x32xf32>
    %40 = arith.addf %39, %38 : vector<4x32xf32>
    %41 = arith.divf %39, %40 : vector<4x32xf32>
    %42 = vector.extract_strided_slice %21 {offsets = [0, 64], sizes = [4, 32], strides = [1, 1]} : vector<4x96xf32> to vector<4x32xf32>
    %43 = vector.extract_strided_slice %25 {offsets = [0, 64], sizes = [4, 32], strides = [1, 1]} : vector<4x96xf32> to vector<4x32xf32>
    %44 = arith.mulf %33, %43 : vector<4x32xf32>
    %45 = arith.addf %42, %44 : vector<4x32xf32>
    %46 = math.tanh %45 : vector<4x32xf32>
    %cst_25 = arith.constant 1.000000e+00 : f32
    %47 = vector.broadcast %cst_25 : f32 to vector<4x32xf32>
    %48 = arith.subf %47, %41 : vector<4x32xf32>
    %49 = arith.mulf %48, %46 : vector<4x32xf32>
    %50 = arith.mulf %41, %22 : vector<4x32xf32>
    %51 = arith.addf %49, %50 : vector<4x32xf32>
    %c0_26 = arith.constant 0 : index
    %c0_27 = arith.constant 0 : index
    %52 = vector.load %arg13[%c0_26, %c0_27] : memref<4x32xf32, #tpu.memory_space<vmem>>, vector<4x32xf32>
    tpu.vector_store %arg13[%c0_26, %c0_27], %51 {strides = array<i32>} : memref<4x32xf32, #tpu.memory_space<vmem>>, vector<4x32xf32>,
    %53 = arith.index_cast %19 : i32 to index
    %c0_28 = arith.constant 0 : index
    %54 = vector.load %arg10[%53, %c0_28] : memref<32x32xf32, #tpu.memory_space<vmem>>, vector<4x32xf32>
    tpu.vector_store %arg10[%53, %c0_28], %51 {strides = array<i32>} : memref<32x32xf32, #tpu.memory_space<vmem>>, vector<4x32xf32>,
    %c1_i32 = arith.constant 1 : i32
    %c4_i32_29 = arith.constant 4 : i32
    %55 = arith.muli %c1_i32, %c4_i32_29 : i32
    %56 = arith.index_cast %55 : i32 to index
    %c0_30 = arith.constant 0 : index
    %57 = vector.load %arg12[%56, %c0_30] : memref<32x96xf32, #tpu.memory_space<vmem>>, vector<4x96xf32>
    %c0_31 = arith.constant 0 : index
    %c0_32 = arith.constant 0 : index
    %58 = vector.load %arg13[%c0_31, %c0_32] : memref<4x32xf32, #tpu.memory_space<vmem>>, vector<4x32xf32>
    %cst_33 = arith.constant dense<0.000000e+00> : vector<4x96xf32>
    %59 = tpu.matmul %58, %10, %cst_33 {dimension_numbers = #tpu.dot_dimension_numbers<[1], [0], [0], [1], [0, 0, 1, 1], [], []>} : vector<4x32xf32>, vector<32x96xf32>, vector<4x96xf32> -> vector<4x96xf32>
    %60 = vector.broadcast %12 : vector<1x96xf32> to vector<4x96xf32>
    %61 = arith.addf %59, %60 : vector<4x96xf32>
    %62 = vector.extract_strided_slice %57 {offsets = [0, 0], sizes = [4, 32], strides = [1, 1]} : vector<4x96xf32> to vector<4x32xf32>
    %63 = vector.extract_strided_slice %61 {offsets = [0, 0], sizes = [4, 32], strides = [1, 1]} : vector<4x96xf32> to vector<4x32xf32>
    %64 = arith.addf %62, %63 : vector<4x32xf32>
    %65 = arith.negf %64 : vector<4x32xf32>
    %66 = math.exp %65 : vector<4x32xf32>
    %cst_34 = arith.constant 1.000000e+00 : f32
    %67 = vector.broadcast %cst_34 : f32 to vector<4x32xf32>
    %68 = arith.addf %67, %66 : vector<4x32xf32>
    %69 = arith.divf %67, %68 : vector<4x32xf32>
    %70 = vector.extract_strided_slice %57 {offsets = [0, 32], sizes = [4, 32], strides = [1, 1]} : vector<4x96xf32> to vector<4x32xf32>
    %71 = vector.extract_strided_slice %61 {offsets = [0, 32], sizes = [4, 32], strides = [1, 1]} : vector<4x96xf32> to vector<4x32xf32>
    %72 = arith.addf %70, %71 : vector<4x32xf32>
    %73 = arith.negf %72 : vector<4x32xf32>
    %74 = math.exp %73 : vector<4x32xf32>
    %cst_35 = arith.constant 1.000000e+00 : f32
    %75 = vector.broadcast %cst_35 : f32 to vector<4x32xf32>
    %76 = arith.addf %75, %74 : vector<4x32xf32>
    %77 = arith.divf %75, %76 : vector<4x32xf32>
    %78 = vector.extract_strided_slice %57 {offsets = [0, 64], sizes = [4, 32], strides = [1, 1]} : vector<4x96xf32> to vector<4x32xf32>
    %79 = vector.extract_strided_slice %61 {offsets = [0, 64], sizes = [4, 32], strides = [1, 1]} : vector<4x96xf32> to vector<4x32xf32>
    %80 = arith.mulf %69, %79 : vector<4x32xf32>
    %81 = arith.addf %78, %80 : vector<4x32xf32>
    %82 = math.tanh %81 : vector<4x32xf32>
    %cst_36 = arith.constant 1.000000e+00 : f32
    %83 = vector.broadcast %cst_36 : f32 to vector<4x32xf32>
    %84 = arith.subf %83, %77 : vector<4x32xf32>
    %85 = arith.mulf %84, %82 : vector<4x32xf32>
    %86 = arith.mulf %77, %58 : vector<4x32xf32>
    %87 = arith.addf %85, %86 : vector<4x32xf32>
    %c0_37 = arith.constant 0 : index
    %c0_38 = arith.constant 0 : index
    %88 = vector.load %arg13[%c0_37, %c0_38] : memref<4x32xf32, #tpu.memory_space<vmem>>, vector<4x32xf32>
    tpu.vector_store %arg13[%c0_37, %c0_38], %87 {strides = array<i32>} : memref<4x32xf32, #tpu.memory_space<vmem>>, vector<4x32xf32>,
    %89 = arith.index_cast %55 : i32 to index
    %c0_39 = arith.constant 0 : index
    %90 = vector.load %arg10[%89, %c0_39] : memref<32x32xf32, #tpu.memory_space<vmem>>, vector<4x32xf32>
    tpu.vector_store %arg10[%89, %c0_39], %87 {strides = array<i32>} : memref<32x32xf32, #tpu.memory_space<vmem>>, vector<4x32xf32>,
    %c2_i32 = arith.constant 2 : i32
    %c4_i32_40 = arith.constant 4 : i32
    %91 = arith.muli %c2_i32, %c4_i32_40 : i32
    %92 = arith.index_cast %91 : i32 to index
    %c0_41 = arith.constant 0 : index
    %93 = vector.load %arg12[%92, %c0_41] : memref<32x96xf32, #tpu.memory_space<vmem>>, vector<4x96xf32>
    %c0_42 = arith.constant 0 : index
    %c0_43 = arith.constant 0 : index
    %94 = vector.load %arg13[%c0_42, %c0_43] : memref<4x32xf32, #tpu.memory_space<vmem>>, vector<4x32xf32>
    %cst_44 = arith.constant dense<0.000000e+00> : vector<4x96xf32>
    %95 = tpu.matmul %94, %10, %cst_44 {dimension_numbers = #tpu.dot_dimension_numbers<[1], [0], [0], [1], [0, 0, 1, 1], [], []>} : vector<4x32xf32>, vector<32x96xf32>, vector<4x96xf32> -> vector<4x96xf32>
    %96 = vector.broadcast %12 : vector<1x96xf32> to vector<4x96xf32>
    %97 = arith.addf %95, %96 : vector<4x96xf32>
    %98 = vector.extract_strided_slice %93 {offsets = [0, 0], sizes = [4, 32], strides = [1, 1]} : vector<4x96xf32> to vector<4x32xf32>
    %99 = vector.extract_strided_slice %97 {offsets = [0, 0], sizes = [4, 32], strides = [1, 1]} : vector<4x96xf32> to vector<4x32xf32>
    %100 = arith.addf %98, %99 : vector<4x32xf32>
    %101 = arith.negf %100 : vector<4x32xf32>
    %102 = math.exp %101 : vector<4x32xf32>
    %cst_45 = arith.constant 1.000000e+00 : f32
    %103 = vector.broadcast %cst_45 : f32 to vector<4x32xf32>
    %104 = arith.addf %103, %102 : vector<4x32xf32>
    %105 = arith.divf %103, %104 : vector<4x32xf32>
    %106 = vector.extract_strided_slice %93 {offsets = [0, 32], sizes = [4, 32], strides = [1, 1]} : vector<4x96xf32> to vector<4x32xf32>
    %107 = vector.extract_strided_slice %97 {offsets = [0, 32], sizes = [4, 32], strides = [1, 1]} : vector<4x96xf32> to vector<4x32xf32>
    %108 = arith.addf %106, %107 : vector<4x32xf32>
    %109 = arith.negf %108 : vector<4x32xf32>
    %110 = math.exp %109 : vector<4x32xf32>
    %cst_46 = arith.constant 1.000000e+00 : f32
    %111 = vector.broadcast %cst_46 : f32 to vector<4x32xf32>
    %112 = arith.addf %111, %110 : vector<4x32xf32>
    %113 = arith.divf %111, %112 : vector<4x32xf32>
    %114 = vector.extract_strided_slice %93 {offsets = [0, 64], sizes = [4, 32], strides = [1, 1]} : vector<4x96xf32> to vector<4x32xf32>
    %115 = vector.extract_strided_slice %97 {offsets = [0, 64], sizes = [4, 32], strides = [1, 1]} : vector<4x96xf32> to vector<4x32xf32>
    %116 = arith.mulf %105, %115 : vector<4x32xf32>
    %117 = arith.addf %114, %116 : vector<4x32xf32>
    %118 = math.tanh %117 : vector<4x32xf32>
    %cst_47 = arith.constant 1.000000e+00 : f32
    %119 = vector.broadcast %cst_47 : f32 to vector<4x32xf32>
    %120 = arith.subf %119, %113 : vector<4x32xf32>
    %121 = arith.mulf %120, %118 : vector<4x32xf32>
    %122 = arith.mulf %113, %94 : vector<4x32xf32>
    %123 = arith.addf %121, %122 : vector<4x32xf32>
    %c0_48 = arith.constant 0 : index
    %c0_49 = arith.constant 0 : index
    %124 = vector.load %arg13[%c0_48, %c0_49] : memref<4x32xf32, #tpu.memory_space<vmem>>, vector<4x32xf32>
    tpu.vector_store %arg13[%c0_48, %c0_49], %123 {strides = array<i32>} : memref<4x32xf32, #tpu.memory_space<vmem>>, vector<4x32xf32>,
    %125 = arith.index_cast %91 : i32 to index
    %c0_50 = arith.constant 0 : index
    %126 = vector.load %arg10[%125, %c0_50] : memref<32x32xf32, #tpu.memory_space<vmem>>, vector<4x32xf32>
    tpu.vector_store %arg10[%125, %c0_50], %123 {strides = array<i32>} : memref<32x32xf32, #tpu.memory_space<vmem>>, vector<4x32xf32>,
    %c3_i32 = arith.constant 3 : i32
    %c4_i32_51 = arith.constant 4 : i32
    %127 = arith.muli %c3_i32, %c4_i32_51 : i32
    %128 = arith.index_cast %127 : i32 to index
    %c0_52 = arith.constant 0 : index
    %129 = vector.load %arg12[%128, %c0_52] : memref<32x96xf32, #tpu.memory_space<vmem>>, vector<4x96xf32>
    %c0_53 = arith.constant 0 : index
    %c0_54 = arith.constant 0 : index
    %130 = vector.load %arg13[%c0_53, %c0_54] : memref<4x32xf32, #tpu.memory_space<vmem>>, vector<4x32xf32>
    %cst_55 = arith.constant dense<0.000000e+00> : vector<4x96xf32>
    %131 = tpu.matmul %130, %10, %cst_55 {dimension_numbers = #tpu.dot_dimension_numbers<[1], [0], [0], [1], [0, 0, 1, 1], [], []>} : vector<4x32xf32>, vector<32x96xf32>, vector<4x96xf32> -> vector<4x96xf32>
    %132 = vector.broadcast %12 : vector<1x96xf32> to vector<4x96xf32>
    %133 = arith.addf %131, %132 : vector<4x96xf32>
    %134 = vector.extract_strided_slice %129 {offsets = [0, 0], sizes = [4, 32], strides = [1, 1]} : vector<4x96xf32> to vector<4x32xf32>
    %135 = vector.extract_strided_slice %133 {offsets = [0, 0], sizes = [4, 32], strides = [1, 1]} : vector<4x96xf32> to vector<4x32xf32>
    %136 = arith.addf %134, %135 : vector<4x32xf32>
    %137 = arith.negf %136 : vector<4x32xf32>
    %138 = math.exp %137 : vector<4x32xf32>
    %cst_56 = arith.constant 1.000000e+00 : f32
    %139 = vector.broadcast %cst_56 : f32 to vector<4x32xf32>
    %140 = arith.addf %139, %138 : vector<4x32xf32>
    %141 = arith.divf %139, %140 : vector<4x32xf32>
    %142 = vector.extract_strided_slice %129 {offsets = [0, 32], sizes = [4, 32], strides = [1, 1]} : vector<4x96xf32> to vector<4x32xf32>
    %143 = vector.extract_strided_slice %133 {offsets = [0, 32], sizes = [4, 32], strides = [1, 1]} : vector<4x96xf32> to vector<4x32xf32>
    %144 = arith.addf %142, %143 : vector<4x32xf32>
    %145 = arith.negf %144 : vector<4x32xf32>
    %146 = math.exp %145 : vector<4x32xf32>
    %cst_57 = arith.constant 1.000000e+00 : f32
    %147 = vector.broadcast %cst_57 : f32 to vector<4x32xf32>
    %148 = arith.addf %147, %146 : vector<4x32xf32>
    %149 = arith.divf %147, %148 : vector<4x32xf32>
    %150 = vector.extract_strided_slice %129 {offsets = [0, 64], sizes = [4, 32], strides = [1, 1]} : vector<4x96xf32> to vector<4x32xf32>
    %151 = vector.extract_strided_slice %133 {offsets = [0, 64], sizes = [4, 32], strides = [1, 1]} : vector<4x96xf32> to vector<4x32xf32>
    %152 = arith.mulf %141, %151 : vector<4x32xf32>
    %153 = arith.addf %150, %152 : vector<4x32xf32>
    %154 = math.tanh %153 : vector<4x32xf32>
    %cst_58 = arith.constant 1.000000e+00 : f32
    %155 = vector.broadcast %cst_58 : f32 to vector<4x32xf32>
    %156 = arith.subf %155, %149 : vector<4x32xf32>
    %157 = arith.mulf %156, %154 : vector<4x32xf32>
    %158 = arith.mulf %149, %130 : vector<4x32xf32>
    %159 = arith.addf %157, %158 : vector<4x32xf32>
    %c0_59 = arith.constant 0 : index
    %c0_60 = arith.constant 0 : index
    %160 = vector.load %arg13[%c0_59, %c0_60] : memref<4x32xf32, #tpu.memory_space<vmem>>, vector<4x32xf32>
    tpu.vector_store %arg13[%c0_59, %c0_60], %159 {strides = array<i32>} : memref<4x32xf32, #tpu.memory_space<vmem>>, vector<4x32xf32>,
    %161 = arith.index_cast %127 : i32 to index
    %c0_61 = arith.constant 0 : index
    %162 = vector.load %arg10[%161, %c0_61] : memref<32x32xf32, #tpu.memory_space<vmem>>, vector<4x32xf32>
    tpu.vector_store %arg10[%161, %c0_61], %159 {strides = array<i32>} : memref<32x32xf32, #tpu.memory_space<vmem>>, vector<4x32xf32>,
    %c4_i32_62 = arith.constant 4 : i32
    %c4_i32_63 = arith.constant 4 : i32
    %163 = arith.muli %c4_i32_62, %c4_i32_63 : i32
    %164 = arith.index_cast %163 : i32 to index
    %c0_64 = arith.constant 0 : index
    %165 = vector.load %arg12[%164, %c0_64] : memref<32x96xf32, #tpu.memory_space<vmem>>, vector<4x96xf32>
    %c0_65 = arith.constant 0 : index
    %c0_66 = arith.constant 0 : index
    %166 = vector.load %arg13[%c0_65, %c0_66] : memref<4x32xf32, #tpu.memory_space<vmem>>, vector<4x32xf32>
    %cst_67 = arith.constant dense<0.000000e+00> : vector<4x96xf32>
    %167 = tpu.matmul %166, %10, %cst_67 {dimension_numbers = #tpu.dot_dimension_numbers<[1], [0], [0], [1], [0, 0, 1, 1], [], []>} : vector<4x32xf32>, vector<32x96xf32>, vector<4x96xf32> -> vector<4x96xf32>
    %168 = vector.broadcast %12 : vector<1x96xf32> to vector<4x96xf32>
    %169 = arith.addf %167, %168 : vector<4x96xf32>
    %170 = vector.extract_strided_slice %165 {offsets = [0, 0], sizes = [4, 32], strides = [1, 1]} : vector<4x96xf32> to vector<4x32xf32>
    %171 = vector.extract_strided_slice %169 {offsets = [0, 0], sizes = [4, 32], strides = [1, 1]} : vector<4x96xf32> to vector<4x32xf32>
    %172 = arith.addf %170, %171 : vector<4x32xf32>
    %173 = arith.negf %172 : vector<4x32xf32>
    %174 = math.exp %173 : vector<4x32xf32>
    %cst_68 = arith.constant 1.000000e+00 : f32
    %175 = vector.broadcast %cst_68 : f32 to vector<4x32xf32>
    %176 = arith.addf %175, %174 : vector<4x32xf32>
    %177 = arith.divf %175, %176 : vector<4x32xf32>
    %178 = vector.extract_strided_slice %165 {offsets = [0, 32], sizes = [4, 32], strides = [1, 1]} : vector<4x96xf32> to vector<4x32xf32>
    %179 = vector.extract_strided_slice %169 {offsets = [0, 32], sizes = [4, 32], strides = [1, 1]} : vector<4x96xf32> to vector<4x32xf32>
    %180 = arith.addf %178, %179 : vector<4x32xf32>
    %181 = arith.negf %180 : vector<4x32xf32>
    %182 = math.exp %181 : vector<4x32xf32>
    %cst_69 = arith.constant 1.000000e+00 : f32
    %183 = vector.broadcast %cst_69 : f32 to vector<4x32xf32>
    %184 = arith.addf %183, %182 : vector<4x32xf32>
    %185 = arith.divf %183, %184 : vector<4x32xf32>
    %186 = vector.extract_strided_slice %165 {offsets = [0, 64], sizes = [4, 32], strides = [1, 1]} : vector<4x96xf32> to vector<4x32xf32>
    %187 = vector.extract_strided_slice %169 {offsets = [0, 64], sizes = [4, 32], strides = [1, 1]} : vector<4x96xf32> to vector<4x32xf32>
    %188 = arith.mulf %177, %187 : vector<4x32xf32>
    %189 = arith.addf %186, %188 : vector<4x32xf32>
    %190 = math.tanh %189 : vector<4x32xf32>
    %cst_70 = arith.constant 1.000000e+00 : f32
    %191 = vector.broadcast %cst_70 : f32 to vector<4x32xf32>
    %192 = arith.subf %191, %185 : vector<4x32xf32>
    %193 = arith.mulf %192, %190 : vector<4x32xf32>
    %194 = arith.mulf %185, %166 : vector<4x32xf32>
    %195 = arith.addf %193, %194 : vector<4x32xf32>
    %c0_71 = arith.constant 0 : index
    %c0_72 = arith.constant 0 : index
    %196 = vector.load %arg13[%c0_71, %c0_72] : memref<4x32xf32, #tpu.memory_space<vmem>>, vector<4x32xf32>
    tpu.vector_store %arg13[%c0_71, %c0_72], %195 {strides = array<i32>} : memref<4x32xf32, #tpu.memory_space<vmem>>, vector<4x32xf32>,
    %197 = arith.index_cast %163 : i32 to index
    %c0_73 = arith.constant 0 : index
    %198 = vector.load %arg10[%197, %c0_73] : memref<32x32xf32, #tpu.memory_space<vmem>>, vector<4x32xf32>
    tpu.vector_store %arg10[%197, %c0_73], %195 {strides = array<i32>} : memref<32x32xf32, #tpu.memory_space<vmem>>, vector<4x32xf32>,
    %c5_i32 = arith.constant 5 : i32
    %c4_i32_74 = arith.constant 4 : i32
    %199 = arith.muli %c5_i32, %c4_i32_74 : i32
    %200 = arith.index_cast %199 : i32 to index
    %c0_75 = arith.constant 0 : index
    %201 = vector.load %arg12[%200, %c0_75] : memref<32x96xf32, #tpu.memory_space<vmem>>, vector<4x96xf32>
    %c0_76 = arith.constant 0 : index
    %c0_77 = arith.constant 0 : index
    %202 = vector.load %arg13[%c0_76, %c0_77] : memref<4x32xf32, #tpu.memory_space<vmem>>, vector<4x32xf32>
    %cst_78 = arith.constant dense<0.000000e+00> : vector<4x96xf32>
    %203 = tpu.matmul %202, %10, %cst_78 {dimension_numbers = #tpu.dot_dimension_numbers<[1], [0], [0], [1], [0, 0, 1, 1], [], []>} : vector<4x32xf32>, vector<32x96xf32>, vector<4x96xf32> -> vector<4x96xf32>
    %204 = vector.broadcast %12 : vector<1x96xf32> to vector<4x96xf32>
    %205 = arith.addf %203, %204 : vector<4x96xf32>
    %206 = vector.extract_strided_slice %201 {offsets = [0, 0], sizes = [4, 32], strides = [1, 1]} : vector<4x96xf32> to vector<4x32xf32>
    %207 = vector.extract_strided_slice %205 {offsets = [0, 0], sizes = [4, 32], strides = [1, 1]} : vector<4x96xf32> to vector<4x32xf32>
    %208 = arith.addf %206, %207 : vector<4x32xf32>
    %209 = arith.negf %208 : vector<4x32xf32>
    %210 = math.exp %209 : vector<4x32xf32>
    %cst_79 = arith.constant 1.000000e+00 : f32
    %211 = vector.broadcast %cst_79 : f32 to vector<4x32xf32>
    %212 = arith.addf %211, %210 : vector<4x32xf32>
    %213 = arith.divf %211, %212 : vector<4x32xf32>
    %214 = vector.extract_strided_slice %201 {offsets = [0, 32], sizes = [4, 32], strides = [1, 1]} : vector<4x96xf32> to vector<4x32xf32>
    %215 = vector.extract_strided_slice %205 {offsets = [0, 32], sizes = [4, 32], strides = [1, 1]} : vector<4x96xf32> to vector<4x32xf32>
    %216 = arith.addf %214, %215 : vector<4x32xf32>
    %217 = arith.negf %216 : vector<4x32xf32>
    %218 = math.exp %217 : vector<4x32xf32>
    %cst_80 = arith.constant 1.000000e+00 : f32
    %219 = vector.broadcast %cst_80 : f32 to vector<4x32xf32>
    %220 = arith.addf %219, %218 : vector<4x32xf32>
    %221 = arith.divf %219, %220 : vector<4x32xf32>
    %222 = vector.extract_strided_slice %201 {offsets = [0, 64], sizes = [4, 32], strides = [1, 1]} : vector<4x96xf32> to vector<4x32xf32>
    %223 = vector.extract_strided_slice %205 {offsets = [0, 64], sizes = [4, 32], strides = [1, 1]} : vector<4x96xf32> to vector<4x32xf32>
    %224 = arith.mulf %213, %223 : vector<4x32xf32>
    %225 = arith.addf %222, %224 : vector<4x32xf32>
    %226 = math.tanh %225 : vector<4x32xf32>
    %cst_81 = arith.constant 1.000000e+00 : f32
    %227 = vector.broadcast %cst_81 : f32 to vector<4x32xf32>
    %228 = arith.subf %227, %221 : vector<4x32xf32>
    %229 = arith.mulf %228, %226 : vector<4x32xf32>
    %230 = arith.mulf %221, %202 : vector<4x32xf32>
    %231 = arith.addf %229, %230 : vector<4x32xf32>
    %c0_82 = arith.constant 0 : index
    %c0_83 = arith.constant 0 : index
    %232 = vector.load %arg13[%c0_82, %c0_83] : memref<4x32xf32, #tpu.memory_space<vmem>>, vector<4x32xf32>
    tpu.vector_store %arg13[%c0_82, %c0_83], %231 {strides = array<i32>} : memref<4x32xf32, #tpu.memory_space<vmem>>, vector<4x32xf32>,
    %233 = arith.index_cast %199 : i32 to index
    %c0_84 = arith.constant 0 : index
    %234 = vector.load %arg10[%233, %c0_84] : memref<32x32xf32, #tpu.memory_space<vmem>>, vector<4x32xf32>
    tpu.vector_store %arg10[%233, %c0_84], %231 {strides = array<i32>} : memref<32x32xf32, #tpu.memory_space<vmem>>, vector<4x32xf32>,
    %c6_i32 = arith.constant 6 : i32
    %c4_i32_85 = arith.constant 4 : i32
    %235 = arith.muli %c6_i32, %c4_i32_85 : i32
    %236 = arith.index_cast %235 : i32 to index
    %c0_86 = arith.constant 0 : index
    %237 = vector.load %arg12[%236, %c0_86] : memref<32x96xf32, #tpu.memory_space<vmem>>, vector<4x96xf32>
    %c0_87 = arith.constant 0 : index
    %c0_88 = arith.constant 0 : index
    %238 = vector.load %arg13[%c0_87, %c0_88] : memref<4x32xf32, #tpu.memory_space<vmem>>, vector<4x32xf32>
    %cst_89 = arith.constant dense<0.000000e+00> : vector<4x96xf32>
    %239 = tpu.matmul %238, %10, %cst_89 {dimension_numbers = #tpu.dot_dimension_numbers<[1], [0], [0], [1], [0, 0, 1, 1], [], []>} : vector<4x32xf32>, vector<32x96xf32>, vector<4x96xf32> -> vector<4x96xf32>
    %240 = vector.broadcast %12 : vector<1x96xf32> to vector<4x96xf32>
    %241 = arith.addf %239, %240 : vector<4x96xf32>
    %242 = vector.extract_strided_slice %237 {offsets = [0, 0], sizes = [4, 32], strides = [1, 1]} : vector<4x96xf32> to vector<4x32xf32>
    %243 = vector.extract_strided_slice %241 {offsets = [0, 0], sizes = [4, 32], strides = [1, 1]} : vector<4x96xf32> to vector<4x32xf32>
    %244 = arith.addf %242, %243 : vector<4x32xf32>
    %245 = arith.negf %244 : vector<4x32xf32>
    %246 = math.exp %245 : vector<4x32xf32>
    %cst_90 = arith.constant 1.000000e+00 : f32
    %247 = vector.broadcast %cst_90 : f32 to vector<4x32xf32>
    %248 = arith.addf %247, %246 : vector<4x32xf32>
    %249 = arith.divf %247, %248 : vector<4x32xf32>
    %250 = vector.extract_strided_slice %237 {offsets = [0, 32], sizes = [4, 32], strides = [1, 1]} : vector<4x96xf32> to vector<4x32xf32>
    %251 = vector.extract_strided_slice %241 {offsets = [0, 32], sizes = [4, 32], strides = [1, 1]} : vector<4x96xf32> to vector<4x32xf32>
    %252 = arith.addf %250, %251 : vector<4x32xf32>
    %253 = arith.negf %252 : vector<4x32xf32>
    %254 = math.exp %253 : vector<4x32xf32>
    %cst_91 = arith.constant 1.000000e+00 : f32
    %255 = vector.broadcast %cst_91 : f32 to vector<4x32xf32>
    %256 = arith.addf %255, %254 : vector<4x32xf32>
    %257 = arith.divf %255, %256 : vector<4x32xf32>
    %258 = vector.extract_strided_slice %237 {offsets = [0, 64], sizes = [4, 32], strides = [1, 1]} : vector<4x96xf32> to vector<4x32xf32>
    %259 = vector.extract_strided_slice %241 {offsets = [0, 64], sizes = [4, 32], strides = [1, 1]} : vector<4x96xf32> to vector<4x32xf32>
    %260 = arith.mulf %249, %259 : vector<4x32xf32>
    %261 = arith.addf %258, %260 : vector<4x32xf32>
    %262 = math.tanh %261 : vector<4x32xf32>
    %cst_92 = arith.constant 1.000000e+00 : f32
    %263 = vector.broadcast %cst_92 : f32 to vector<4x32xf32>
    %264 = arith.subf %263, %257 : vector<4x32xf32>
    %265 = arith.mulf %264, %262 : vector<4x32xf32>
    %266 = arith.mulf %257, %238 : vector<4x32xf32>
    %267 = arith.addf %265, %266 : vector<4x32xf32>
    %c0_93 = arith.constant 0 : index
    %c0_94 = arith.constant 0 : index
    %268 = vector.load %arg13[%c0_93, %c0_94] : memref<4x32xf32, #tpu.memory_space<vmem>>, vector<4x32xf32>
    tpu.vector_store %arg13[%c0_93, %c0_94], %267 {strides = array<i32>} : memref<4x32xf32, #tpu.memory_space<vmem>>, vector<4x32xf32>,
    %269 = arith.index_cast %235 : i32 to index
    %c0_95 = arith.constant 0 : index
    %270 = vector.load %arg10[%269, %c0_95] : memref<32x32xf32, #tpu.memory_space<vmem>>, vector<4x32xf32>
    tpu.vector_store %arg10[%269, %c0_95], %267 {strides = array<i32>} : memref<32x32xf32, #tpu.memory_space<vmem>>, vector<4x32xf32>,
    %c7_i32 = arith.constant 7 : i32
    %c4_i32_96 = arith.constant 4 : i32
    %271 = arith.muli %c7_i32, %c4_i32_96 : i32
    %272 = arith.index_cast %271 : i32 to index
    %c0_97 = arith.constant 0 : index
    %273 = vector.load %arg12[%272, %c0_97] : memref<32x96xf32, #tpu.memory_space<vmem>>, vector<4x96xf32>
    %c0_98 = arith.constant 0 : index
    %c0_99 = arith.constant 0 : index
    %274 = vector.load %arg13[%c0_98, %c0_99] : memref<4x32xf32, #tpu.memory_space<vmem>>, vector<4x32xf32>
    %cst_100 = arith.constant dense<0.000000e+00> : vector<4x96xf32>
    %275 = tpu.matmul %274, %10, %cst_100 {dimension_numbers = #tpu.dot_dimension_numbers<[1], [0], [0], [1], [0, 0, 1, 1], [], []>} : vector<4x32xf32>, vector<32x96xf32>, vector<4x96xf32> -> vector<4x96xf32>
    %276 = vector.broadcast %12 : vector<1x96xf32> to vector<4x96xf32>
    %277 = arith.addf %275, %276 : vector<4x96xf32>
    %278 = vector.extract_strided_slice %273 {offsets = [0, 0], sizes = [4, 32], strides = [1, 1]} : vector<4x96xf32> to vector<4x32xf32>
    %279 = vector.extract_strided_slice %277 {offsets = [0, 0], sizes = [4, 32], strides = [1, 1]} : vector<4x96xf32> to vector<4x32xf32>
    %280 = arith.addf %278, %279 : vector<4x32xf32>
    %281 = arith.negf %280 : vector<4x32xf32>
    %282 = math.exp %281 : vector<4x32xf32>
    %cst_101 = arith.constant 1.000000e+00 : f32
    %283 = vector.broadcast %cst_101 : f32 to vector<4x32xf32>
    %284 = arith.addf %283, %282 : vector<4x32xf32>
    %285 = arith.divf %283, %284 : vector<4x32xf32>
    %286 = vector.extract_strided_slice %273 {offsets = [0, 32], sizes = [4, 32], strides = [1, 1]} : vector<4x96xf32> to vector<4x32xf32>
    %287 = vector.extract_strided_slice %277 {offsets = [0, 32], sizes = [4, 32], strides = [1, 1]} : vector<4x96xf32> to vector<4x32xf32>
    %288 = arith.addf %286, %287 : vector<4x32xf32>
    %289 = arith.negf %288 : vector<4x32xf32>
    %290 = math.exp %289 : vector<4x32xf32>
    %cst_102 = arith.constant 1.000000e+00 : f32
    %291 = vector.broadcast %cst_102 : f32 to vector<4x32xf32>
    %292 = arith.addf %291, %290 : vector<4x32xf32>
    %293 = arith.divf %291, %292 : vector<4x32xf32>
    %294 = vector.extract_strided_slice %273 {offsets = [0, 64], sizes = [4, 32], strides = [1, 1]} : vector<4x96xf32> to vector<4x32xf32>
    %295 = vector.extract_strided_slice %277 {offsets = [0, 64], sizes = [4, 32], strides = [1, 1]} : vector<4x96xf32> to vector<4x32xf32>
    %296 = arith.mulf %285, %295 : vector<4x32xf32>
    %297 = arith.addf %294, %296 : vector<4x32xf32>
    %298 = math.tanh %297 : vector<4x32xf32>
    %cst_103 = arith.constant 1.000000e+00 : f32
    %299 = vector.broadcast %cst_103 : f32 to vector<4x32xf32>
    %300 = arith.subf %299, %293 : vector<4x32xf32>
    %301 = arith.mulf %300, %298 : vector<4x32xf32>
    %302 = arith.mulf %293, %274 : vector<4x32xf32>
    %303 = arith.addf %301, %302 : vector<4x32xf32>
    %c0_104 = arith.constant 0 : index
    %c0_105 = arith.constant 0 : index
    %304 = vector.load %arg13[%c0_104, %c0_105] : memref<4x32xf32, #tpu.memory_space<vmem>>, vector<4x32xf32>
    tpu.vector_store %arg13[%c0_104, %c0_105], %303 {strides = array<i32>} : memref<4x32xf32, #tpu.memory_space<vmem>>, vector<4x32xf32>,
    %305 = arith.index_cast %271 : i32 to index
    %c0_106 = arith.constant 0 : index
    %306 = vector.load %arg10[%305, %c0_106] : memref<32x32xf32, #tpu.memory_space<vmem>>, vector<4x32xf32>
    tpu.vector_store %arg10[%305, %c0_106], %303 {strides = array<i32>} : memref<32x32xf32, #tpu.memory_space<vmem>>, vector<4x32xf32>,
    %c8_i32 = arith.constant 8 : i32
    %c0_107 = arith.constant 0 : index
    %c0_108 = arith.constant 0 : index
    %307 = vector.load %arg13[%c0_107, %c0_108] : memref<4x32xf32, #tpu.memory_space<vmem>>, vector<4x32xf32>
    %c0_109 = arith.constant 0 : index
    %c0_110 = arith.constant 0 : index
    %c0_111 = arith.constant 0 : index
    %308 = vector.load %arg11[%c0_109, %c0_110, %c0_111] : memref<2x4x32xf32, #tpu.memory_space<vmem>>, vector<1x4x32xf32>
    %309 = vector.shape_cast %308 : vector<1x4x32xf32> to vector<4x32xf32>
    %310 = vector.shape_cast %307 : vector<4x32xf32> to vector<1x4x32xf32>
    tpu.vector_store %arg11[%c0_109, %c0_110, %c0_111], %310 {strides = array<i32>} : memref<2x4x32xf32, #tpu.memory_space<vmem>>, vector<1x4x32xf32>,
    %c0_112 = arith.constant 0 : index
    %c0_113 = arith.constant 0 : index
    %311 = vector.load %arg10[%c0_112, %c0_113] : memref<32x32xf32, #tpu.memory_space<vmem>>, vector<32x32xf32>
    %c0_114 = arith.constant 0 : index
    %c0_115 = arith.constant 0 : index
    %312 = vector.load %arg3[%c0_114, %c0_115] : memref<32x96xf32, #tpu.memory_space<vmem>>, vector<32x96xf32>
    %c0_116 = arith.constant 0 : index
    %c0_117 = arith.constant 0 : index
    %313 = vector.load %arg5[%c0_116, %c0_117] : memref<32x96xf32, #tpu.memory_space<vmem>>, vector<32x96xf32>
    %c0_118 = arith.constant 0 : index
    %c0_119 = arith.constant 0 : index
    %314 = vector.load %arg7[%c0_118, %c0_119] : memref<1x96xf32, #tpu.memory_space<vmem>>, vector<1x96xf32>
    %c0_120 = arith.constant 0 : index
    %c0_121 = arith.constant 0 : index
    %315 = vector.load %arg9[%c0_120, %c0_121] : memref<1x96xf32, #tpu.memory_space<vmem>>, vector<1x96xf32>
    %cst_122 = arith.constant dense<0.000000e+00> : vector<32x96xf32>
    %316 = tpu.matmul %311, %312, %cst_122 {dimension_numbers = #tpu.dot_dimension_numbers<[1], [0], [0], [1], [0, 0, 1, 1], [], []>} : vector<32x32xf32>, vector<32x96xf32>, vector<32x96xf32> -> vector<32x96xf32>
    %317 = vector.broadcast %314 : vector<1x96xf32> to vector<32x96xf32>
    %318 = arith.addf %316, %317 : vector<32x96xf32>
    %c0_123 = arith.constant 0 : index
    %c0_124 = arith.constant 0 : index
    %319 = vector.load %arg12[%c0_123, %c0_124] : memref<32x96xf32, #tpu.memory_space<vmem>>, vector<32x96xf32>
    tpu.vector_store %arg12[%c0_123, %c0_124], %318 {strides = array<i32>} : memref<32x96xf32, #tpu.memory_space<vmem>>, vector<32x96xf32>,
    %cst_125 = arith.constant 0.000000e+00 : f32
    %320 = vector.broadcast %cst_125 : f32 to vector<4x32xf32>
    %c0_126 = arith.constant 0 : index
    %c0_127 = arith.constant 0 : index
    %321 = vector.load %arg13[%c0_126, %c0_127] : memref<4x32xf32, #tpu.memory_space<vmem>>, vector<4x32xf32>
    tpu.vector_store %arg13[%c0_126, %c0_127], %320 {strides = array<i32>} : memref<4x32xf32, #tpu.memory_space<vmem>>, vector<4x32xf32>,
    %c0_i32_128 = arith.constant 0 : i32
    %c4_i32_129 = arith.constant 4 : i32
    %322 = arith.muli %c0_i32_128, %c4_i32_129 : i32
    %323 = arith.index_cast %322 : i32 to index
    %c0_130 = arith.constant 0 : index
    %324 = vector.load %arg12[%323, %c0_130] : memref<32x96xf32, #tpu.memory_space<vmem>>, vector<4x96xf32>
    %c0_131 = arith.constant 0 : index
    %c0_132 = arith.constant 0 : index
    %325 = vector.load %arg13[%c0_131, %c0_132] : memref<4x32xf32, #tpu.memory_space<vmem>>, vector<4x32xf32>
    %cst_133 = arith.constant dense<0.000000e+00> : vector<4x96xf32>
    %326 = tpu.matmul %325, %313, %cst_133 {dimension_numbers = #tpu.dot_dimension_numbers<[1], [0], [0], [1], [0, 0, 1, 1], [], []>} : vector<4x32xf32>, vector<32x96xf32>, vector<4x96xf32> -> vector<4x96xf32>
    %327 = vector.broadcast %315 : vector<1x96xf32> to vector<4x96xf32>
    %328 = arith.addf %326, %327 : vector<4x96xf32>
    %329 = vector.extract_strided_slice %324 {offsets = [0, 0], sizes = [4, 32], strides = [1, 1]} : vector<4x96xf32> to vector<4x32xf32>
    %330 = vector.extract_strided_slice %328 {offsets = [0, 0], sizes = [4, 32], strides = [1, 1]} : vector<4x96xf32> to vector<4x32xf32>
    %331 = arith.addf %329, %330 : vector<4x32xf32>
    %332 = arith.negf %331 : vector<4x32xf32>
    %333 = math.exp %332 : vector<4x32xf32>
    %cst_134 = arith.constant 1.000000e+00 : f32
    %334 = vector.broadcast %cst_134 : f32 to vector<4x32xf32>
    %335 = arith.addf %334, %333 : vector<4x32xf32>
    %336 = arith.divf %334, %335 : vector<4x32xf32>
    %337 = vector.extract_strided_slice %324 {offsets = [0, 32], sizes = [4, 32], strides = [1, 1]} : vector<4x96xf32> to vector<4x32xf32>
    %338 = vector.extract_strided_slice %328 {offsets = [0, 32], sizes = [4, 32], strides = [1, 1]} : vector<4x96xf32> to vector<4x32xf32>
    %339 = arith.addf %337, %338 : vector<4x32xf32>
    %340 = arith.negf %339 : vector<4x32xf32>
    %341 = math.exp %340 : vector<4x32xf32>
    %cst_135 = arith.constant 1.000000e+00 : f32
    %342 = vector.broadcast %cst_135 : f32 to vector<4x32xf32>
    %343 = arith.addf %342, %341 : vector<4x32xf32>
    %344 = arith.divf %342, %343 : vector<4x32xf32>
    %345 = vector.extract_strided_slice %324 {offsets = [0, 64], sizes = [4, 32], strides = [1, 1]} : vector<4x96xf32> to vector<4x32xf32>
    %346 = vector.extract_strided_slice %328 {offsets = [0, 64], sizes = [4, 32], strides = [1, 1]} : vector<4x96xf32> to vector<4x32xf32>
    %347 = arith.mulf %336, %346 : vector<4x32xf32>
    %348 = arith.addf %345, %347 : vector<4x32xf32>
    %349 = math.tanh %348 : vector<4x32xf32>
    %cst_136 = arith.constant 1.000000e+00 : f32
    %350 = vector.broadcast %cst_136 : f32 to vector<4x32xf32>
    %351 = arith.subf %350, %344 : vector<4x32xf32>
    %352 = arith.mulf %351, %349 : vector<4x32xf32>
    %353 = arith.mulf %344, %325 : vector<4x32xf32>
    %354 = arith.addf %352, %353 : vector<4x32xf32>
    %c0_137 = arith.constant 0 : index
    %c0_138 = arith.constant 0 : index
    %355 = vector.load %arg13[%c0_137, %c0_138] : memref<4x32xf32, #tpu.memory_space<vmem>>, vector<4x32xf32>
    tpu.vector_store %arg13[%c0_137, %c0_138], %354 {strides = array<i32>} : memref<4x32xf32, #tpu.memory_space<vmem>>, vector<4x32xf32>,
    %356 = arith.index_cast %322 : i32 to index
    %c0_139 = arith.constant 0 : index
    %357 = vector.load %arg10[%356, %c0_139] : memref<32x32xf32, #tpu.memory_space<vmem>>, vector<4x32xf32>
    tpu.vector_store %arg10[%356, %c0_139], %354 {strides = array<i32>} : memref<32x32xf32, #tpu.memory_space<vmem>>, vector<4x32xf32>,
    %c1_i32_140 = arith.constant 1 : i32
    %c4_i32_141 = arith.constant 4 : i32
    %358 = arith.muli %c1_i32_140, %c4_i32_141 : i32
    %359 = arith.index_cast %358 : i32 to index
    %c0_142 = arith.constant 0 : index
    %360 = vector.load %arg12[%359, %c0_142] : memref<32x96xf32, #tpu.memory_space<vmem>>, vector<4x96xf32>
    %c0_143 = arith.constant 0 : index
    %c0_144 = arith.constant 0 : index
    %361 = vector.load %arg13[%c0_143, %c0_144] : memref<4x32xf32, #tpu.memory_space<vmem>>, vector<4x32xf32>
    %cst_145 = arith.constant dense<0.000000e+00> : vector<4x96xf32>
    %362 = tpu.matmul %361, %313, %cst_145 {dimension_numbers = #tpu.dot_dimension_numbers<[1], [0], [0], [1], [0, 0, 1, 1], [], []>} : vector<4x32xf32>, vector<32x96xf32>, vector<4x96xf32> -> vector<4x96xf32>
    %363 = vector.broadcast %315 : vector<1x96xf32> to vector<4x96xf32>
    %364 = arith.addf %362, %363 : vector<4x96xf32>
    %365 = vector.extract_strided_slice %360 {offsets = [0, 0], sizes = [4, 32], strides = [1, 1]} : vector<4x96xf32> to vector<4x32xf32>
    %366 = vector.extract_strided_slice %364 {offsets = [0, 0], sizes = [4, 32], strides = [1, 1]} : vector<4x96xf32> to vector<4x32xf32>
    %367 = arith.addf %365, %366 : vector<4x32xf32>
    %368 = arith.negf %367 : vector<4x32xf32>
    %369 = math.exp %368 : vector<4x32xf32>
    %cst_146 = arith.constant 1.000000e+00 : f32
    %370 = vector.broadcast %cst_146 : f32 to vector<4x32xf32>
    %371 = arith.addf %370, %369 : vector<4x32xf32>
    %372 = arith.divf %370, %371 : vector<4x32xf32>
    %373 = vector.extract_strided_slice %360 {offsets = [0, 32], sizes = [4, 32], strides = [1, 1]} : vector<4x96xf32> to vector<4x32xf32>
    %374 = vector.extract_strided_slice %364 {offsets = [0, 32], sizes = [4, 32], strides = [1, 1]} : vector<4x96xf32> to vector<4x32xf32>
    %375 = arith.addf %373, %374 : vector<4x32xf32>
    %376 = arith.negf %375 : vector<4x32xf32>
    %377 = math.exp %376 : vector<4x32xf32>
    %cst_147 = arith.constant 1.000000e+00 : f32
    %378 = vector.broadcast %cst_147 : f32 to vector<4x32xf32>
    %379 = arith.addf %378, %377 : vector<4x32xf32>
    %380 = arith.divf %378, %379 : vector<4x32xf32>
    %381 = vector.extract_strided_slice %360 {offsets = [0, 64], sizes = [4, 32], strides = [1, 1]} : vector<4x96xf32> to vector<4x32xf32>
    %382 = vector.extract_strided_slice %364 {offsets = [0, 64], sizes = [4, 32], strides = [1, 1]} : vector<4x96xf32> to vector<4x32xf32>
    %383 = arith.mulf %372, %382 : vector<4x32xf32>
    %384 = arith.addf %381, %383 : vector<4x32xf32>
    %385 = math.tanh %384 : vector<4x32xf32>
    %cst_148 = arith.constant 1.000000e+00 : f32
    %386 = vector.broadcast %cst_148 : f32 to vector<4x32xf32>
    %387 = arith.subf %386, %380 : vector<4x32xf32>
    %388 = arith.mulf %387, %385 : vector<4x32xf32>
    %389 = arith.mulf %380, %361 : vector<4x32xf32>
    %390 = arith.addf %388, %389 : vector<4x32xf32>
    %c0_149 = arith.constant 0 : index
    %c0_150 = arith.constant 0 : index
    %391 = vector.load %arg13[%c0_149, %c0_150] : memref<4x32xf32, #tpu.memory_space<vmem>>, vector<4x32xf32>
    tpu.vector_store %arg13[%c0_149, %c0_150], %390 {strides = array<i32>} : memref<4x32xf32, #tpu.memory_space<vmem>>, vector<4x32xf32>,
    %392 = arith.index_cast %358 : i32 to index
    %c0_151 = arith.constant 0 : index
    %393 = vector.load %arg10[%392, %c0_151] : memref<32x32xf32, #tpu.memory_space<vmem>>, vector<4x32xf32>
    tpu.vector_store %arg10[%392, %c0_151], %390 {strides = array<i32>} : memref<32x32xf32, #tpu.memory_space<vmem>>, vector<4x32xf32>,
    %c2_i32_152 = arith.constant 2 : i32
    %c4_i32_153 = arith.constant 4 : i32
    %394 = arith.muli %c2_i32_152, %c4_i32_153 : i32
    %395 = arith.index_cast %394 : i32 to index
    %c0_154 = arith.constant 0 : index
    %396 = vector.load %arg12[%395, %c0_154] : memref<32x96xf32, #tpu.memory_space<vmem>>, vector<4x96xf32>
    %c0_155 = arith.constant 0 : index
    %c0_156 = arith.constant 0 : index
    %397 = vector.load %arg13[%c0_155, %c0_156] : memref<4x32xf32, #tpu.memory_space<vmem>>, vector<4x32xf32>
    %cst_157 = arith.constant dense<0.000000e+00> : vector<4x96xf32>
    %398 = tpu.matmul %397, %313, %cst_157 {dimension_numbers = #tpu.dot_dimension_numbers<[1], [0], [0], [1], [0, 0, 1, 1], [], []>} : vector<4x32xf32>, vector<32x96xf32>, vector<4x96xf32> -> vector<4x96xf32>
    %399 = vector.broadcast %315 : vector<1x96xf32> to vector<4x96xf32>
    %400 = arith.addf %398, %399 : vector<4x96xf32>
    %401 = vector.extract_strided_slice %396 {offsets = [0, 0], sizes = [4, 32], strides = [1, 1]} : vector<4x96xf32> to vector<4x32xf32>
    %402 = vector.extract_strided_slice %400 {offsets = [0, 0], sizes = [4, 32], strides = [1, 1]} : vector<4x96xf32> to vector<4x32xf32>
    %403 = arith.addf %401, %402 : vector<4x32xf32>
    %404 = arith.negf %403 : vector<4x32xf32>
    %405 = math.exp %404 : vector<4x32xf32>
    %cst_158 = arith.constant 1.000000e+00 : f32
    %406 = vector.broadcast %cst_158 : f32 to vector<4x32xf32>
    %407 = arith.addf %406, %405 : vector<4x32xf32>
    %408 = arith.divf %406, %407 : vector<4x32xf32>
    %409 = vector.extract_strided_slice %396 {offsets = [0, 32], sizes = [4, 32], strides = [1, 1]} : vector<4x96xf32> to vector<4x32xf32>
    %410 = vector.extract_strided_slice %400 {offsets = [0, 32], sizes = [4, 32], strides = [1, 1]} : vector<4x96xf32> to vector<4x32xf32>
    %411 = arith.addf %409, %410 : vector<4x32xf32>
    %412 = arith.negf %411 : vector<4x32xf32>
    %413 = math.exp %412 : vector<4x32xf32>
    %cst_159 = arith.constant 1.000000e+00 : f32
    %414 = vector.broadcast %cst_159 : f32 to vector<4x32xf32>
    %415 = arith.addf %414, %413 : vector<4x32xf32>
    %416 = arith.divf %414, %415 : vector<4x32xf32>
    %417 = vector.extract_strided_slice %396 {offsets = [0, 64], sizes = [4, 32], strides = [1, 1]} : vector<4x96xf32> to vector<4x32xf32>
    %418 = vector.extract_strided_slice %400 {offsets = [0, 64], sizes = [4, 32], strides = [1, 1]} : vector<4x96xf32> to vector<4x32xf32>
    %419 = arith.mulf %408, %418 : vector<4x32xf32>
    %420 = arith.addf %417, %419 : vector<4x32xf32>
    %421 = math.tanh %420 : vector<4x32xf32>
    %cst_160 = arith.constant 1.000000e+00 : f32
    %422 = vector.broadcast %cst_160 : f32 to vector<4x32xf32>
    %423 = arith.subf %422, %416 : vector<4x32xf32>
    %424 = arith.mulf %423, %421 : vector<4x32xf32>
    %425 = arith.mulf %416, %397 : vector<4x32xf32>
    %426 = arith.addf %424, %425 : vector<4x32xf32>
    %c0_161 = arith.constant 0 : index
    %c0_162 = arith.constant 0 : index
    %427 = vector.load %arg13[%c0_161, %c0_162] : memref<4x32xf32, #tpu.memory_space<vmem>>, vector<4x32xf32>
    tpu.vector_store %arg13[%c0_161, %c0_162], %426 {strides = array<i32>} : memref<4x32xf32, #tpu.memory_space<vmem>>, vector<4x32xf32>,
    %428 = arith.index_cast %394 : i32 to index
    %c0_163 = arith.constant 0 : index
    %429 = vector.load %arg10[%428, %c0_163] : memref<32x32xf32, #tpu.memory_space<vmem>>, vector<4x32xf32>
    tpu.vector_store %arg10[%428, %c0_163], %426 {strides = array<i32>} : memref<32x32xf32, #tpu.memory_space<vmem>>, vector<4x32xf32>,
    %c3_i32_164 = arith.constant 3 : i32
    %c4_i32_165 = arith.constant 4 : i32
    %430 = arith.muli %c3_i32_164, %c4_i32_165 : i32
    %431 = arith.index_cast %430 : i32 to index
    %c0_166 = arith.constant 0 : index
    %432 = vector.load %arg12[%431, %c0_166] : memref<32x96xf32, #tpu.memory_space<vmem>>, vector<4x96xf32>
    %c0_167 = arith.constant 0 : index
    %c0_168 = arith.constant 0 : index
    %433 = vector.load %arg13[%c0_167, %c0_168] : memref<4x32xf32, #tpu.memory_space<vmem>>, vector<4x32xf32>
    %cst_169 = arith.constant dense<0.000000e+00> : vector<4x96xf32>
    %434 = tpu.matmul %433, %313, %cst_169 {dimension_numbers = #tpu.dot_dimension_numbers<[1], [0], [0], [1], [0, 0, 1, 1], [], []>} : vector<4x32xf32>, vector<32x96xf32>, vector<4x96xf32> -> vector<4x96xf32>
    %435 = vector.broadcast %315 : vector<1x96xf32> to vector<4x96xf32>
    %436 = arith.addf %434, %435 : vector<4x96xf32>
    %437 = vector.extract_strided_slice %432 {offsets = [0, 0], sizes = [4, 32], strides = [1, 1]} : vector<4x96xf32> to vector<4x32xf32>
    %438 = vector.extract_strided_slice %436 {offsets = [0, 0], sizes = [4, 32], strides = [1, 1]} : vector<4x96xf32> to vector<4x32xf32>
    %439 = arith.addf %437, %438 : vector<4x32xf32>
    %440 = arith.negf %439 : vector<4x32xf32>
    %441 = math.exp %440 : vector<4x32xf32>
    %cst_170 = arith.constant 1.000000e+00 : f32
    %442 = vector.broadcast %cst_170 : f32 to vector<4x32xf32>
    %443 = arith.addf %442, %441 : vector<4x32xf32>
    %444 = arith.divf %442, %443 : vector<4x32xf32>
    %445 = vector.extract_strided_slice %432 {offsets = [0, 32], sizes = [4, 32], strides = [1, 1]} : vector<4x96xf32> to vector<4x32xf32>
    %446 = vector.extract_strided_slice %436 {offsets = [0, 32], sizes = [4, 32], strides = [1, 1]} : vector<4x96xf32> to vector<4x32xf32>
    %447 = arith.addf %445, %446 : vector<4x32xf32>
    %448 = arith.negf %447 : vector<4x32xf32>
    %449 = math.exp %448 : vector<4x32xf32>
    %cst_171 = arith.constant 1.000000e+00 : f32
    %450 = vector.broadcast %cst_171 : f32 to vector<4x32xf32>
    %451 = arith.addf %450, %449 : vector<4x32xf32>
    %452 = arith.divf %450, %451 : vector<4x32xf32>
    %453 = vector.extract_strided_slice %432 {offsets = [0, 64], sizes = [4, 32], strides = [1, 1]} : vector<4x96xf32> to vector<4x32xf32>
    %454 = vector.extract_strided_slice %436 {offsets = [0, 64], sizes = [4, 32], strides = [1, 1]} : vector<4x96xf32> to vector<4x32xf32>
    %455 = arith.mulf %444, %454 : vector<4x32xf32>
    %456 = arith.addf %453, %455 : vector<4x32xf32>
    %457 = math.tanh %456 : vector<4x32xf32>
    %cst_172 = arith.constant 1.000000e+00 : f32
    %458 = vector.broadcast %cst_172 : f32 to vector<4x32xf32>
    %459 = arith.subf %458, %452 : vector<4x32xf32>
    %460 = arith.mulf %459, %457 : vector<4x32xf32>
    %461 = arith.mulf %452, %433 : vector<4x32xf32>
    %462 = arith.addf %460, %461 : vector<4x32xf32>
    %c0_173 = arith.constant 0 : index
    %c0_174 = arith.constant 0 : index
    %463 = vector.load %arg13[%c0_173, %c0_174] : memref<4x32xf32, #tpu.memory_space<vmem>>, vector<4x32xf32>
    tpu.vector_store %arg13[%c0_173, %c0_174], %462 {strides = array<i32>} : memref<4x32xf32, #tpu.memory_space<vmem>>, vector<4x32xf32>,
    %464 = arith.index_cast %430 : i32 to index
    %c0_175 = arith.constant 0 : index
    %465 = vector.load %arg10[%464, %c0_175] : memref<32x32xf32, #tpu.memory_space<vmem>>, vector<4x32xf32>
    tpu.vector_store %arg10[%464, %c0_175], %462 {strides = array<i32>} : memref<32x32xf32, #tpu.memory_space<vmem>>, vector<4x32xf32>,
    %c4_i32_176 = arith.constant 4 : i32
    %c4_i32_177 = arith.constant 4 : i32
    %466 = arith.muli %c4_i32_176, %c4_i32_177 : i32
    %467 = arith.index_cast %466 : i32 to index
    %c0_178 = arith.constant 0 : index
    %468 = vector.load %arg12[%467, %c0_178] : memref<32x96xf32, #tpu.memory_space<vmem>>, vector<4x96xf32>
    %c0_179 = arith.constant 0 : index
    %c0_180 = arith.constant 0 : index
    %469 = vector.load %arg13[%c0_179, %c0_180] : memref<4x32xf32, #tpu.memory_space<vmem>>, vector<4x32xf32>
    %cst_181 = arith.constant dense<0.000000e+00> : vector<4x96xf32>
    %470 = tpu.matmul %469, %313, %cst_181 {dimension_numbers = #tpu.dot_dimension_numbers<[1], [0], [0], [1], [0, 0, 1, 1], [], []>} : vector<4x32xf32>, vector<32x96xf32>, vector<4x96xf32> -> vector<4x96xf32>
    %471 = vector.broadcast %315 : vector<1x96xf32> to vector<4x96xf32>
    %472 = arith.addf %470, %471 : vector<4x96xf32>
    %473 = vector.extract_strided_slice %468 {offsets = [0, 0], sizes = [4, 32], strides = [1, 1]} : vector<4x96xf32> to vector<4x32xf32>
    %474 = vector.extract_strided_slice %472 {offsets = [0, 0], sizes = [4, 32], strides = [1, 1]} : vector<4x96xf32> to vector<4x32xf32>
    %475 = arith.addf %473, %474 : vector<4x32xf32>
    %476 = arith.negf %475 : vector<4x32xf32>
    %477 = math.exp %476 : vector<4x32xf32>
    %cst_182 = arith.constant 1.000000e+00 : f32
    %478 = vector.broadcast %cst_182 : f32 to vector<4x32xf32>
    %479 = arith.addf %478, %477 : vector<4x32xf32>
    %480 = arith.divf %478, %479 : vector<4x32xf32>
    %481 = vector.extract_strided_slice %468 {offsets = [0, 32], sizes = [4, 32], strides = [1, 1]} : vector<4x96xf32> to vector<4x32xf32>
    %482 = vector.extract_strided_slice %472 {offsets = [0, 32], sizes = [4, 32], strides = [1, 1]} : vector<4x96xf32> to vector<4x32xf32>
    %483 = arith.addf %481, %482 : vector<4x32xf32>
    %484 = arith.negf %483 : vector<4x32xf32>
    %485 = math.exp %484 : vector<4x32xf32>
    %cst_183 = arith.constant 1.000000e+00 : f32
    %486 = vector.broadcast %cst_183 : f32 to vector<4x32xf32>
    %487 = arith.addf %486, %485 : vector<4x32xf32>
    %488 = arith.divf %486, %487 : vector<4x32xf32>
    %489 = vector.extract_strided_slice %468 {offsets = [0, 64], sizes = [4, 32], strides = [1, 1]} : vector<4x96xf32> to vector<4x32xf32>
    %490 = vector.extract_strided_slice %472 {offsets = [0, 64], sizes = [4, 32], strides = [1, 1]} : vector<4x96xf32> to vector<4x32xf32>
    %491 = arith.mulf %480, %490 : vector<4x32xf32>
    %492 = arith.addf %489, %491 : vector<4x32xf32>
    %493 = math.tanh %492 : vector<4x32xf32>
    %cst_184 = arith.constant 1.000000e+00 : f32
    %494 = vector.broadcast %cst_184 : f32 to vector<4x32xf32>
    %495 = arith.subf %494, %488 : vector<4x32xf32>
    %496 = arith.mulf %495, %493 : vector<4x32xf32>
    %497 = arith.mulf %488, %469 : vector<4x32xf32>
    %498 = arith.addf %496, %497 : vector<4x32xf32>
    %c0_185 = arith.constant 0 : index
    %c0_186 = arith.constant 0 : index
    %499 = vector.load %arg13[%c0_185, %c0_186] : memref<4x32xf32, #tpu.memory_space<vmem>>, vector<4x32xf32>
    tpu.vector_store %arg13[%c0_185, %c0_186], %498 {strides = array<i32>} : memref<4x32xf32, #tpu.memory_space<vmem>>, vector<4x32xf32>,
    %500 = arith.index_cast %466 : i32 to index
    %c0_187 = arith.constant 0 : index
    %501 = vector.load %arg10[%500, %c0_187] : memref<32x32xf32, #tpu.memory_space<vmem>>, vector<4x32xf32>
    tpu.vector_store %arg10[%500, %c0_187], %498 {strides = array<i32>} : memref<32x32xf32, #tpu.memory_space<vmem>>, vector<4x32xf32>,
    %c5_i32_188 = arith.constant 5 : i32
    %c4_i32_189 = arith.constant 4 : i32
    %502 = arith.muli %c5_i32_188, %c4_i32_189 : i32
    %503 = arith.index_cast %502 : i32 to index
    %c0_190 = arith.constant 0 : index
    %504 = vector.load %arg12[%503, %c0_190] : memref<32x96xf32, #tpu.memory_space<vmem>>, vector<4x96xf32>
    %c0_191 = arith.constant 0 : index
    %c0_192 = arith.constant 0 : index
    %505 = vector.load %arg13[%c0_191, %c0_192] : memref<4x32xf32, #tpu.memory_space<vmem>>, vector<4x32xf32>
    %cst_193 = arith.constant dense<0.000000e+00> : vector<4x96xf32>
    %506 = tpu.matmul %505, %313, %cst_193 {dimension_numbers = #tpu.dot_dimension_numbers<[1], [0], [0], [1], [0, 0, 1, 1], [], []>} : vector<4x32xf32>, vector<32x96xf32>, vector<4x96xf32> -> vector<4x96xf32>
    %507 = vector.broadcast %315 : vector<1x96xf32> to vector<4x96xf32>
    %508 = arith.addf %506, %507 : vector<4x96xf32>
    %509 = vector.extract_strided_slice %504 {offsets = [0, 0], sizes = [4, 32], strides = [1, 1]} : vector<4x96xf32> to vector<4x32xf32>
    %510 = vector.extract_strided_slice %508 {offsets = [0, 0], sizes = [4, 32], strides = [1, 1]} : vector<4x96xf32> to vector<4x32xf32>
    %511 = arith.addf %509, %510 : vector<4x32xf32>
    %512 = arith.negf %511 : vector<4x32xf32>
    %513 = math.exp %512 : vector<4x32xf32>
    %cst_194 = arith.constant 1.000000e+00 : f32
    %514 = vector.broadcast %cst_194 : f32 to vector<4x32xf32>
    %515 = arith.addf %514, %513 : vector<4x32xf32>
    %516 = arith.divf %514, %515 : vector<4x32xf32>
    %517 = vector.extract_strided_slice %504 {offsets = [0, 32], sizes = [4, 32], strides = [1, 1]} : vector<4x96xf32> to vector<4x32xf32>
    %518 = vector.extract_strided_slice %508 {offsets = [0, 32], sizes = [4, 32], strides = [1, 1]} : vector<4x96xf32> to vector<4x32xf32>
    %519 = arith.addf %517, %518 : vector<4x32xf32>
    %520 = arith.negf %519 : vector<4x32xf32>
    %521 = math.exp %520 : vector<4x32xf32>
    %cst_195 = arith.constant 1.000000e+00 : f32
    %522 = vector.broadcast %cst_195 : f32 to vector<4x32xf32>
    %523 = arith.addf %522, %521 : vector<4x32xf32>
    %524 = arith.divf %522, %523 : vector<4x32xf32>
    %525 = vector.extract_strided_slice %504 {offsets = [0, 64], sizes = [4, 32], strides = [1, 1]} : vector<4x96xf32> to vector<4x32xf32>
    %526 = vector.extract_strided_slice %508 {offsets = [0, 64], sizes = [4, 32], strides = [1, 1]} : vector<4x96xf32> to vector<4x32xf32>
    %527 = arith.mulf %516, %526 : vector<4x32xf32>
    %528 = arith.addf %525, %527 : vector<4x32xf32>
    %529 = math.tanh %528 : vector<4x32xf32>
    %cst_196 = arith.constant 1.000000e+00 : f32
    %530 = vector.broadcast %cst_196 : f32 to vector<4x32xf32>
    %531 = arith.subf %530, %524 : vector<4x32xf32>
    %532 = arith.mulf %531, %529 : vector<4x32xf32>
    %533 = arith.mulf %524, %505 : vector<4x32xf32>
    %534 = arith.addf %532, %533 : vector<4x32xf32>
    %c0_197 = arith.constant 0 : index
    %c0_198 = arith.constant 0 : index
    %535 = vector.load %arg13[%c0_197, %c0_198] : memref<4x32xf32, #tpu.memory_space<vmem>>, vector<4x32xf32>
    tpu.vector_store %arg13[%c0_197, %c0_198], %534 {strides = array<i32>} : memref<4x32xf32, #tpu.memory_space<vmem>>, vector<4x32xf32>,
    %536 = arith.index_cast %502 : i32 to index
    %c0_199 = arith.constant 0 : index
    %537 = vector.load %arg10[%536, %c0_199] : memref<32x32xf32, #tpu.memory_space<vmem>>, vector<4x32xf32>
    tpu.vector_store %arg10[%536, %c0_199], %534 {strides = array<i32>} : memref<32x32xf32, #tpu.memory_space<vmem>>, vector<4x32xf32>,
    %c6_i32_200 = arith.constant 6 : i32
    %c4_i32_201 = arith.constant 4 : i32
    %538 = arith.muli %c6_i32_200, %c4_i32_201 : i32
    %539 = arith.index_cast %538 : i32 to index
    %c0_202 = arith.constant 0 : index
    %540 = vector.load %arg12[%539, %c0_202] : memref<32x96xf32, #tpu.memory_space<vmem>>, vector<4x96xf32>
    %c0_203 = arith.constant 0 : index
    %c0_204 = arith.constant 0 : index
    %541 = vector.load %arg13[%c0_203, %c0_204] : memref<4x32xf32, #tpu.memory_space<vmem>>, vector<4x32xf32>
    %cst_205 = arith.constant dense<0.000000e+00> : vector<4x96xf32>
    %542 = tpu.matmul %541, %313, %cst_205 {dimension_numbers = #tpu.dot_dimension_numbers<[1], [0], [0], [1], [0, 0, 1, 1], [], []>} : vector<4x32xf32>, vector<32x96xf32>, vector<4x96xf32> -> vector<4x96xf32>
    %543 = vector.broadcast %315 : vector<1x96xf32> to vector<4x96xf32>
    %544 = arith.addf %542, %543 : vector<4x96xf32>
    %545 = vector.extract_strided_slice %540 {offsets = [0, 0], sizes = [4, 32], strides = [1, 1]} : vector<4x96xf32> to vector<4x32xf32>
    %546 = vector.extract_strided_slice %544 {offsets = [0, 0], sizes = [4, 32], strides = [1, 1]} : vector<4x96xf32> to vector<4x32xf32>
    %547 = arith.addf %545, %546 : vector<4x32xf32>
    %548 = arith.negf %547 : vector<4x32xf32>
    %549 = math.exp %548 : vector<4x32xf32>
    %cst_206 = arith.constant 1.000000e+00 : f32
    %550 = vector.broadcast %cst_206 : f32 to vector<4x32xf32>
    %551 = arith.addf %550, %549 : vector<4x32xf32>
    %552 = arith.divf %550, %551 : vector<4x32xf32>
    %553 = vector.extract_strided_slice %540 {offsets = [0, 32], sizes = [4, 32], strides = [1, 1]} : vector<4x96xf32> to vector<4x32xf32>
    %554 = vector.extract_strided_slice %544 {offsets = [0, 32], sizes = [4, 32], strides = [1, 1]} : vector<4x96xf32> to vector<4x32xf32>
    %555 = arith.addf %553, %554 : vector<4x32xf32>
    %556 = arith.negf %555 : vector<4x32xf32>
    %557 = math.exp %556 : vector<4x32xf32>
    %cst_207 = arith.constant 1.000000e+00 : f32
    %558 = vector.broadcast %cst_207 : f32 to vector<4x32xf32>
    %559 = arith.addf %558, %557 : vector<4x32xf32>
    %560 = arith.divf %558, %559 : vector<4x32xf32>
    %561 = vector.extract_strided_slice %540 {offsets = [0, 64], sizes = [4, 32], strides = [1, 1]} : vector<4x96xf32> to vector<4x32xf32>
    %562 = vector.extract_strided_slice %544 {offsets = [0, 64], sizes = [4, 32], strides = [1, 1]} : vector<4x96xf32> to vector<4x32xf32>
    %563 = arith.mulf %552, %562 : vector<4x32xf32>
    %564 = arith.addf %561, %563 : vector<4x32xf32>
    %565 = math.tanh %564 : vector<4x32xf32>
    %cst_208 = arith.constant 1.000000e+00 : f32
    %566 = vector.broadcast %cst_208 : f32 to vector<4x32xf32>
    %567 = arith.subf %566, %560 : vector<4x32xf32>
    %568 = arith.mulf %567, %565 : vector<4x32xf32>
    %569 = arith.mulf %560, %541 : vector<4x32xf32>
    %570 = arith.addf %568, %569 : vector<4x32xf32>
    %c0_209 = arith.constant 0 : index
    %c0_210 = arith.constant 0 : index
    %571 = vector.load %arg13[%c0_209, %c0_210] : memref<4x32xf32, #tpu.memory_space<vmem>>, vector<4x32xf32>
    tpu.vector_store %arg13[%c0_209, %c0_210], %570 {strides = array<i32>} : memref<4x32xf32, #tpu.memory_space<vmem>>, vector<4x32xf32>,
    %572 = arith.index_cast %538 : i32 to index
    %c0_211 = arith.constant 0 : index
    %573 = vector.load %arg10[%572, %c0_211] : memref<32x32xf32, #tpu.memory_space<vmem>>, vector<4x32xf32>
    tpu.vector_store %arg10[%572, %c0_211], %570 {strides = array<i32>} : memref<32x32xf32, #tpu.memory_space<vmem>>, vector<4x32xf32>,
    %c7_i32_212 = arith.constant 7 : i32
    %c4_i32_213 = arith.constant 4 : i32
    %574 = arith.muli %c7_i32_212, %c4_i32_213 : i32
    %575 = arith.index_cast %574 : i32 to index
    %c0_214 = arith.constant 0 : index
    %576 = vector.load %arg12[%575, %c0_214] : memref<32x96xf32, #tpu.memory_space<vmem>>, vector<4x96xf32>
    %c0_215 = arith.constant 0 : index
    %c0_216 = arith.constant 0 : index
    %577 = vector.load %arg13[%c0_215, %c0_216] : memref<4x32xf32, #tpu.memory_space<vmem>>, vector<4x32xf32>
    %cst_217 = arith.constant dense<0.000000e+00> : vector<4x96xf32>
    %578 = tpu.matmul %577, %313, %cst_217 {dimension_numbers = #tpu.dot_dimension_numbers<[1], [0], [0], [1], [0, 0, 1, 1], [], []>} : vector<4x32xf32>, vector<32x96xf32>, vector<4x96xf32> -> vector<4x96xf32>
    %579 = vector.broadcast %315 : vector<1x96xf32> to vector<4x96xf32>
    %580 = arith.addf %578, %579 : vector<4x96xf32>
    %581 = vector.extract_strided_slice %576 {offsets = [0, 0], sizes = [4, 32], strides = [1, 1]} : vector<4x96xf32> to vector<4x32xf32>
    %582 = vector.extract_strided_slice %580 {offsets = [0, 0], sizes = [4, 32], strides = [1, 1]} : vector<4x96xf32> to vector<4x32xf32>
    %583 = arith.addf %581, %582 : vector<4x32xf32>
    %584 = arith.negf %583 : vector<4x32xf32>
    %585 = math.exp %584 : vector<4x32xf32>
    %cst_218 = arith.constant 1.000000e+00 : f32
    %586 = vector.broadcast %cst_218 : f32 to vector<4x32xf32>
    %587 = arith.addf %586, %585 : vector<4x32xf32>
    %588 = arith.divf %586, %587 : vector<4x32xf32>
    %589 = vector.extract_strided_slice %576 {offsets = [0, 32], sizes = [4, 32], strides = [1, 1]} : vector<4x96xf32> to vector<4x32xf32>
    %590 = vector.extract_strided_slice %580 {offsets = [0, 32], sizes = [4, 32], strides = [1, 1]} : vector<4x96xf32> to vector<4x32xf32>
    %591 = arith.addf %589, %590 : vector<4x32xf32>
    %592 = arith.negf %591 : vector<4x32xf32>
    %593 = math.exp %592 : vector<4x32xf32>
    %cst_219 = arith.constant 1.000000e+00 : f32
    %594 = vector.broadcast %cst_219 : f32 to vector<4x32xf32>
    %595 = arith.addf %594, %593 : vector<4x32xf32>
    %596 = arith.divf %594, %595 : vector<4x32xf32>
    %597 = vector.extract_strided_slice %576 {offsets = [0, 64], sizes = [4, 32], strides = [1, 1]} : vector<4x96xf32> to vector<4x32xf32>
    %598 = vector.extract_strided_slice %580 {offsets = [0, 64], sizes = [4, 32], strides = [1, 1]} : vector<4x96xf32> to vector<4x32xf32>
    %599 = arith.mulf %588, %598 : vector<4x32xf32>
    %600 = arith.addf %597, %599 : vector<4x32xf32>
    %601 = math.tanh %600 : vector<4x32xf32>
    %cst_220 = arith.constant 1.000000e+00 : f32
    %602 = vector.broadcast %cst_220 : f32 to vector<4x32xf32>
    %603 = arith.subf %602, %596 : vector<4x32xf32>
    %604 = arith.mulf %603, %601 : vector<4x32xf32>
    %605 = arith.mulf %596, %577 : vector<4x32xf32>
    %606 = arith.addf %604, %605 : vector<4x32xf32>
    %c0_221 = arith.constant 0 : index
    %c0_222 = arith.constant 0 : index
    %607 = vector.load %arg13[%c0_221, %c0_222] : memref<4x32xf32, #tpu.memory_space<vmem>>, vector<4x32xf32>
    tpu.vector_store %arg13[%c0_221, %c0_222], %606 {strides = array<i32>} : memref<4x32xf32, #tpu.memory_space<vmem>>, vector<4x32xf32>,
    %608 = arith.index_cast %574 : i32 to index
    %c0_223 = arith.constant 0 : index
    %609 = vector.load %arg10[%608, %c0_223] : memref<32x32xf32, #tpu.memory_space<vmem>>, vector<4x32xf32>
    tpu.vector_store %arg10[%608, %c0_223], %606 {strides = array<i32>} : memref<32x32xf32, #tpu.memory_space<vmem>>, vector<4x32xf32>,
    %c8_i32_224 = arith.constant 8 : i32
    %c0_225 = arith.constant 0 : index
    %c0_226 = arith.constant 0 : index
    %610 = vector.load %arg13[%c0_225, %c0_226] : memref<4x32xf32, #tpu.memory_space<vmem>>, vector<4x32xf32>
    %c1 = arith.constant 1 : index
    %c0_227 = arith.constant 0 : index
    %c0_228 = arith.constant 0 : index
    %611 = vector.load %arg11[%c1, %c0_227, %c0_228] : memref<2x4x32xf32, #tpu.memory_space<vmem>>, vector<1x4x32xf32>
    %612 = vector.shape_cast %611 : vector<1x4x32xf32> to vector<4x32xf32>
    %613 = vector.shape_cast %610 : vector<4x32xf32> to vector<1x4x32xf32>
    tpu.vector_store %arg11[%c1, %c0_227, %c0_228], %613 {strides = array<i32>} : memref<2x4x32xf32, #tpu.memory_space<vmem>>, vector<1x4x32xf32>,
    return
  }
}

</mosaic_0001>

<llo_original>
// kernel: tpu_custom_call.1
$region0: #{tpu_custom_call.1}
  #allocation0 [shape = 'u32[]', space=smem, size = 0x4, offset = 0x4, fixed_abs, tag = 'smem constant byte address 0x4 - core index']
  #allocation1 [shape = 'u32[144,128]{1,0:T(1,128)}', space=vmem, size = 0x12000, scoped, tag = 'internal scratch']
  #allocation2 [shape = 'f32[32,96]{1,0:T(8,128)}', space=vmem, size = 0x4000, scoped, tag = 'scratch operand']
  #allocation3 [shape = 'f32[4,32]{1,0:T(4,128)}', space=vmem, size = 0x800, scoped, tag = 'scratch operand']
  %s0 = inlined_call_operand.vmem [shape: s32[32,1], index: 0, kind: input, shape index: {}]
  %s1 = inlined_call_operand.vmem [shape: f32[40,32], index: 1, kind: input, shape index: {}]
  %s2 = inlined_call_operand.vmem [shape: f32[32,96], index: 2, kind: input, shape index: {}]
  %s3 = inlined_call_operand.vmem [shape: f32[32,96], index: 3, kind: input, shape index: {}]
  %s4 = inlined_call_operand.vmem [shape: f32[32,96], index: 4, kind: input, shape index: {}]
  %s5 = inlined_call_operand.hbm [shape: f32[32,96], index: 5, kind: input, shape index: {}]
  %s6 = inlined_call_operand.vmem [shape: f32[1,96], index: 6, kind: input, shape index: {}]
  %s7 = inlined_call_operand.vmem [shape: f32[1,96], index: 7, kind: input, shape index: {}]
  %s8 = inlined_call_operand.vmem [shape: f32[1,96], index: 8, kind: input, shape index: {}]
  %s9 = inlined_call_operand.vmem [shape: f32[1,96], index: 9, kind: input, shape index: {}]
  %s10 = inlined_call_operand.hbm [shape: f32[32,32], index: 10, kind: output, shape index: {0}]
  %s11 = inlined_call_operand.hbm [shape: f32[2,4,32], index: 11, kind: output, shape index: {1}]
  %12 = xla_tuple %s10, %s11
  %s13 = sld [smem:[#allocation0]]
  $region62: #{tpu_custom_call.1} parent=0
    _
  %s15 = ssub.s32 1, %s13
  %s16 = scalar_select 0, %s15, %s13
  $region1: #{tpu_custom_call.1} parent=0
    #allocation4 [shape = 'u8[16384]{0}', space=vmem, size = 0x4000, scoped, tag = 'input window, operand 5, single buffered']
    #allocation5 [shape = 's32[1]{0}', space=sflag, size = 0x4, scoped, tag = 'scoped memory for tpu_custom_call.1']
    #allocation6 [shape = 's32[1]{0}', space=sflag, size = 0x4, scoped, tag = 'scoped memory for tpu_custom_call.1']
    #allocation7 [shape = 'u8[16384]{0}', space=vmem, size = 0x4000, scoped, tag = 'output window, operand 0, single buffered']
    #allocation8 [shape = 'u8[4096]{0}', space=vmem, size = 0x1000, scoped, tag = 'output window, operand 1, single buffered']
    #allocation9 [shape = 's32[1]{0}', space=sflag, size = 0x4, scoped, tag = 'scoped memory for tpu_custom_call.1']
    %17 = vsyncpa [#allocation5], 0
    %18 = vsyncpa [#allocation6], 0
    %19 = vsyncpa [#allocation9], 0
    // Predicated region
    $region2: #{tpu_custom_call.1} parent=1 // pred_check
      _
    $region3: #{tpu_custom_call.1} parent=1 // pred_check_branch
      %21 = sbr.rel (0) target = $region5
    $region4: #{tpu_custom_call.1} parent=1 // pred_region
      _
    $region5: #{tpu_custom_call.1} parent=1 // pred_fallthru
      _
    // Predicated region
    $region6: #{tpu_custom_call.1} parent=1 // pred_check
      _
    $region7: #{tpu_custom_call.1} parent=1 // pred_check_branch
      %23 = sbr.rel (0) target = $region9
    $region8: #{tpu_custom_call.1} parent=1 // pred_region
      _
    $region9: #{tpu_custom_call.1} parent=1 // pred_fallthru
      _
    // Predicated region
    $region10: #{tpu_custom_call.1} parent=1 // pred_check
      _
    $region11: #{tpu_custom_call.1} parent=1 // pred_check_branch
      %25 = sbr.rel (0) target = $region13
    $region12: #{tpu_custom_call.1} parent=1 // pred_region
      _
    $region13: #{tpu_custom_call.1} parent=1 // pred_fallthru
      _
    // Predicated region
    $region14: #{tpu_custom_call.1} parent=1 // pred_check
      _
    $region15: #{tpu_custom_call.1} parent=1 // pred_check_branch
      %27 = sbr.rel (0) target = $region17
    $region16: #{tpu_custom_call.1} parent=1 // pred_region
      _
    $region17: #{tpu_custom_call.1} parent=1 // pred_fallthru
      _
    // Predicated region
    $region18: #{tpu_custom_call.1} parent=1 // pred_check
      _
    $region19: #{tpu_custom_call.1} parent=1 // pred_check_branch
      %29 = sbr.rel (0) target = $region21
    $region20: #{tpu_custom_call.1} parent=1 // pred_region
      _
    $region21: #{tpu_custom_call.1} parent=1 // pred_fallthru
      _
    // Predicated region
    $region22: #{tpu_custom_call.1} parent=1 // pred_check
      _
    $region23: #{tpu_custom_call.1} parent=1 // pred_check_branch
      %31 = sbr.rel (0) target = $region25
    $region24: #{tpu_custom_call.1} parent=1 // pred_region
      %s33 = ssub.s32 512, 512
      %34 = vsyncadd [#allocation5], %s33
      %s35 = sshll.u32 [#allocation4], 4
      %s36 = int_to_ptr.vmem [resolvable:$true] %s35
      %41 = dma.hbm_to_vmem [thread:$0]  %s5, 512, %s36, [#allocation5], 128, 128, 8
    $region25: #{tpu_custom_call.1} parent=1 // pred_fallthru
      _
    // Predicated region
    $region26: #{tpu_custom_call.1} parent=1 // pred_check
      _
    $region27: #{tpu_custom_call.1} parent=1 // pred_check_branch
      %43 = sbr.rel (0) target = $region29
    $region28: #{tpu_custom_call.1} parent=1 // pred_region
      _
    $region29: #{tpu_custom_call.1} parent=1 // pred_fallthru
      _
    // Predicated region
    $region30: #{tpu_custom_call.1} parent=1 // pred_check
      _
    $region31: #{tpu_custom_call.1} parent=1 // pred_check_branch
      %45 = sbr.rel (0) target = $region33
    $region32: #{tpu_custom_call.1} parent=1 // pred_region
      _
    $region33: #{tpu_custom_call.1} parent=1 // pred_fallthru
      _
    // Predicated region
    $region34: #{tpu_custom_call.1} parent=1 // pred_check
      _
    $region35: #{tpu_custom_call.1} parent=1 // pred_check_branch
      %47 = sbr.rel (0) target = $region37
    $region36: #{tpu_custom_call.1} parent=1 // pred_region
      _
    $region37: #{tpu_custom_call.1} parent=1 // pred_fallthru
      _
    // Predicated region
    $region38: #{tpu_custom_call.1} parent=1 // pred_check
      _
    $region39: #{tpu_custom_call.1} parent=1 // pred_check_branch
      %49 = sbr.rel (0) target = $region41
    $region40: #{tpu_custom_call.1} parent=1 // pred_region
      _
    $region41: #{tpu_custom_call.1} parent=1 // pred_fallthru
      _
    // Predicated region
    $region42: #{tpu_custom_call.1} parent=1 // pred_check
      _
    $region43: #{tpu_custom_call.1} parent=1 // pred_check_branch
      %51 = sbr.rel (0) target = $region45
    $region44: #{tpu_custom_call.1} parent=1 // pred_region
      %52 = dma.done [#allocation5], 512
    $region45: #{tpu_custom_call.1} parent=1 // pred_fallthru
      _
    %v53 = vld [vmem:[%s0] sm:$0xff]
    %v54 = vld [vmem:[%s0 + $0x8] sm:$0xff]
    %v55 = vld [vmem:[%s0 + $0x10] sm:$0xff]
    %v56 = vld [vmem:[%s0 + $0x18] sm:$0xff]
    %v57 = vlaneseq
    %v58 = vand.u32 %v57, 127
    %59 = vset.pattern.permute.xlu0 0
    %60 = vperm.xlu0 %59, %v53
    %v61 = vpop.permute.xlu0 %60
    %62 = vset.pattern.permute.xlu0 0
    %63 = vperm.xlu0 %62, %v54
    %v64 = vpop.permute.xlu0 %63
    %65 = vset.pattern.permute.xlu0 0
    %66 = vperm.xlu0 %65, %v55
    %v67 = vpop.permute.xlu0 %66
    %68 = vset.pattern.permute.xlu0 0
    %69 = vperm.xlu0 %68, %v56
    %v70 = vpop.permute.xlu0 %69
    %vm71 = vcmp.eq.s32.totalorder %v61, %v58
    %vm72 = vcmp.eq.s32.totalorder %v64, %v58
    %vm73 = vcmp.eq.s32.totalorder %v67, %v58
    %vm74 = vcmp.eq.s32.totalorder %v70, %v58
    %v75 = vsel %vm71, 1.0, 0.0
    %v76 = vsel %vm72, 1.0, 0.0
    %v77 = vsel %vm73, 1.0, 0.0
    %v78 = vsel %vm74, 1.0, 0.0
    %v79 = vld [vmem:[%s1] sm:$0xff]
    %v80 = vld [vmem:[%s1 + $0x8] sm:$0xff]
    %v81 = vld [vmem:[%s1 + $0x10] sm:$0xff]
    %v82 = vld [vmem:[%s1 + $0x18] sm:$0xff]
    %v83 = vld [vmem:[%s1 + $0x20] sm:$0xff]
    %vm84 = vcmask 326656
    %v86 = vsel %vm84, %v75, 0
    %v89 = vsel %vm84, %v76, 0
    %v92 = vsel %vm84, %v77, 0
    %v95 = vsel %vm84, %v78, 0
    %97 = vmatprep.subr.mxu0 0.0
    %98 = vmatpush1.msra.mxu0 %v79
    %99 = vmatprep.subr.mxu0 0.0
    %100 = vmatpush1.msra.mxu0 %v80
    %101 = vmatprep.subr.mxu0 0.0
    %102 = vmatpush1.msra.mxu0 %v81
    %103 = vmatprep.subr.mxu0 0.0
    %104 = vmatpush1.msra.mxu0 %v82
    %105 = vmatprep.subr.mxu0 0.0
    %106 = vmatpush1.msra.mxu0 %v83
    %107 = vmatprep.subr.mxu0 0.0
    %108 = vmatpush1.msra.mxu0 0.0
    %109 = vmatprep.subr.mxu0 0.0
    %110 = vmatpush1.msra.mxu0 0.0
    %111 = vmatprep.subr.mxu0 0.0
    %112 = vmatpush1.msra.mxu0 0.0
    %113 = vmatprep.subr.mxu0 0.0
    %114 = vmatpush1.msra.mxu0 0.0
    %115 = vmatprep.subr.mxu0 0.0
    %116 = vmatpush1.msra.mxu0 0.0
    %117 = vmatprep.subr.mxu0 0.0
    %118 = vmatpush1.msra.mxu0 0.0
    %119 = vmatprep.subr.mxu0 0.0
    %120 = vmatpush1.msra.mxu0 0.0
    %121 = vmatprep.subr.mxu0 0.0
    %122 = vmatpush1.msra.mxu0 0.0
    %123 = vmatprep.subr.mxu0 0.0
    %124 = vmatpush1.msra.mxu0 0.0
    %125 = vmatprep.subr.mxu0 0.0
    %126 = vmatpush1.msra.mxu0 0.0
    %127 = vmatprep.subr.mxu0 0.0
    %128 = vmatpush1.msra.mxu0 0.0
    %129 = vmatprep.subr.mxu0 0.0
    %130 = vmatpush1.msra.mxu0 0.0
    %131 = vmatprep.subr.mxu0 0.0
    %132 = vmatpush1.msra.mxu0 0.0
    %133 = vmatprep.subr.mxu0 0.0
    %134 = vmatpush1.msra.mxu0 0.0
    %135 = vmatprep.subr.mxu0 0.0
    %136 = vmatpush1.msra.mxu0 0.0
    %137 = vmatprep.subr.mxu0 0.0
    %138 = vmatpush1.msra.mxu0 0.0
    %139 = vmatprep.subr.mxu0 0.0
    %140 = vmatpush1.msra.mxu0 0.0
    %141 = vmatprep.subr.mxu0 0.0
    %142 = vmatpush1.msra.mxu0 0.0
    %143 = vmatprep.subr.mxu0 0.0
    %144 = vmatpush1.msra.mxu0 0.0
    %145 = vmatprep.subr.mxu0 0.0
    %146 = vmatpush1.msra.mxu0 0.0
    %147 = vmatprep.subr.mxu0 0.0
    %148 = vmatpush1.msra.mxu0 0.0
    %149 = vmatprep.subr.mxu0 0.0
    %150 = vmatpush1.msra.mxu0 0.0
    %151 = vmatprep.subr.mxu0 0.0
    %152 = vmatpush1.msra.mxu0 0.0
    %153 = vmatprep.subr.mxu0 0.0
    %154 = vmatpush1.msra.mxu0 0.0
    %155 = vmatprep.subr.mxu0 0.0
    %156 = vmatpush1.msra.mxu0 0.0
    %157 = vmatprep.subr.mxu0 0.0
    %158 = vmatpush1.msra.mxu0 0.0
    %159 = vmatprep.subr.mxu0 0.0
    %160 = vmatpush1.msra.mxu0 0.0
    %161 = vmatprep.mubr.f32.mxu0 0.0
    %162 = vmatmul.mubr.f32.gmra.mrb[0].mxu0 %v86
    %v163 = vpop.f32.mrb[0].mxu0
    %v164 = vadd.f32 0.0, %v163
    %v165 = vpop.f32.mrb[0].mxu0
    %166 = vmatprep.mubr.f32.mxu0 0.0
    %167 = vmatmul.mubr.f32.gmra.mrb[0].mxu0 %v89
    %v168 = vpop.f32.mrb[0].mxu0
    %v169 = vadd.f32 0.0, %v168
    %v170 = vpop.f32.mrb[0].mxu0
    %171 = vmatprep.mubr.f32.mxu0 0.0
    %172 = vmatmul.mubr.f32.gmra.mrb[0].mxu0 %v92
    %v173 = vpop.f32.mrb[0].mxu0
    %v174 = vadd.f32 0.0, %v173
    %v175 = vpop.f32.mrb[0].mxu0
    %176 = vmatprep.mubr.f32.mxu0 0.0
    %177 = vmatmul.mubr.f32.gmra.mrb[0].mxu0 %v95
    %v178 = vpop.f32.mrb[0].mxu0
    %v179 = vadd.f32 0.0, %v178
    %v180 = vpop.f32.mrb[0].mxu0
    %181 = vdwg.mxu0
    %v182 = vld [vmem:[%s2] sm:$0xff]
    %v183 = vld [vmem:[%s2 + $0x8] sm:$0xff]
    %v184 = vld [vmem:[%s2 + $0x10] sm:$0xff]
    %v185 = vld [vmem:[%s2 + $0x18] sm:$0xff]
    %v186 = vld [vmem:[%s4] sm:$0xff]
    %v187 = vld [vmem:[%s4 + $0x8] sm:$0xff]
    %v188 = vld [vmem:[%s4 + $0x10] sm:$0xff]
    %v189 = vld [vmem:[%s4 + $0x18] sm:$0xff]
    %v190 = vld [vmem:[%s6] sm:$0x1]
    %v191 = vld [vmem:[%s8] sm:$0x1]
    %v193 = vlaneseq
    %v194 = vshrl.u32 %v193, 7
    %v195 = vsub.s32 0, %v194
    %v196 = vrot.slane %v190, %v195
    %vm198 = vcmask 261120
    %v200 = vsel %vm198, %v164, 0
    %v203 = vsel %vm198, %v169, 0
    %v206 = vsel %vm198, %v174, 0
    %v209 = vsel %vm198, %v179, 0
    %211 = vmatprep.subr.mxu0 0.0
    %212 = vmatpush1.msra.mxu0 %v182
    %213 = vmatprep.subr.mxu0 0.0
    %214 = vmatpush1.msra.mxu0 %v183
    %215 = vmatprep.subr.mxu0 0.0
    %216 = vmatpush1.msra.mxu0 %v184
    %217 = vmatprep.subr.mxu0 0.0
    %218 = vmatpush1.msra.mxu0 %v185
    %219 = vmatprep.subr.mxu0 0.0
    %220 = vmatpush1.msra.mxu0 0.0
    %221 = vmatprep.subr.mxu0 0.0
    %222 = vmatpush1.msra.mxu0 0.0
    %223 = vmatprep.subr.mxu0 0.0
    %224 = vmatpush1.msra.mxu0 0.0
    %225 = vmatprep.subr.mxu0 0.0
    %226 = vmatpush1.msra.mxu0 0.0
    %227 = vmatprep.subr.mxu0 0.0
    %228 = vmatpush1.msra.mxu0 0.0
    %229 = vmatprep.subr.mxu0 0.0
    %230 = vmatpush1.msra.mxu0 0.0
    %231 = vmatprep.subr.mxu0 0.0
    %232 = vmatpush1.msra.mxu0 0.0
    %233 = vmatprep.subr.mxu0 0.0
    %234 = vmatpush1.msra.mxu0 0.0
    %235 = vmatprep.subr.mxu0 0.0
    %236 = vmatpush1.msra.mxu0 0.0
    %237 = vmatprep.subr.mxu0 0.0
    %238 = vmatpush1.msra.mxu0 0.0
    %239 = vmatprep.subr.mxu0 0.0
    %240 = vmatpush1.msra.mxu0 0.0
    %241 = vmatprep.subr.mxu0 0.0
    %242 = vmatpush1.msra.mxu0 0.0
    %243 = vmatprep.subr.mxu0 0.0
    %244 = vmatpush1.msra.mxu0 0.0
    %245 = vmatprep.subr.mxu0 0.0
    %246 = vmatpush1.msra.mxu0 0.0
    %247 = vmatprep.subr.mxu0 0.0
    %248 = vmatpush1.msra.mxu0 0.0
    %249 = vmatprep.subr.mxu0 0.0
    %250 = vmatpush1.msra.mxu0 0.0
    %251 = vmatprep.subr.mxu0 0.0
    %252 = vmatpush1.msra.mxu0 0.0
    %253 = vmatprep.subr.mxu0 0.0
    %254 = vmatpush1.msra.mxu0 0.0
    %255 = vmatprep.subr.mxu0 0.0
    %256 = vmatpush1.msra.mxu0 0.0
    %257 = vmatprep.subr.mxu0 0.0
    %258 = vmatpush1.msra.mxu0 0.0
    %259 = vmatprep.subr.mxu0 0.0
    %260 = vmatpush1.msra.mxu0 0.0
    %261 = vmatprep.subr.mxu0 0.0
    %262 = vmatpush1.msra.mxu0 0.0
    %263 = vmatprep.subr.mxu0 0.0
    %264 = vmatpush1.msra.mxu0 0.0
    %265 = vmatprep.subr.mxu0 0.0
    %266 = vmatpush1.msra.mxu0 0.0
    %267 = vmatprep.subr.mxu0 0.0
    %268 = vmatpush1.msra.mxu0 0.0
    %269 = vmatprep.subr.mxu0 0.0
    %270 = vmatpush1.msra.mxu0 0.0
    %271 = vmatprep.subr.mxu0 0.0
    %272 = vmatpush1.msra.mxu0 0.0
    %273 = vmatprep.subr.mxu0 0.0
    %274 = vmatpush1.msra.mxu0 0.0
    %275 = vmatprep.mubr.f32.mxu0 0.0
    %276 = vmatmul.mubr.f32.gmra.mrb[0].mxu0 %v200
    %v277 = vpop.f32.mrb[0].mxu0
    %v278 = vadd.f32 %v196, %v277
    %v279 = vpop.f32.mrb[0].mxu0
    %280 = vmatprep.mubr.f32.mxu0 0.0
    %281 = vmatmul.mubr.f32.gmra.mrb[0].mxu0 %v203
    %v282 = vpop.f32.mrb[0].mxu0
    %v283 = vadd.f32 %v196, %v282
    %v284 = vpop.f32.mrb[0].mxu0
    %285 = vmatprep.mubr.f32.mxu0 0.0
    %286 = vmatmul.mubr.f32.gmra.mrb[0].mxu0 %v206
    %v287 = vpop.f32.mrb[0].mxu0
    %v288 = vadd.f32 %v196, %v287
    %v289 = vpop.f32.mrb[0].mxu0
    %290 = vmatprep.mubr.f32.mxu0 0.0
    %291 = vmatmul.mubr.f32.gmra.mrb[0].mxu0 %v209
    %v292 = vpop.f32.mrb[0].mxu0
    %v293 = vadd.f32 %v196, %v292
    %v294 = vpop.f32.mrb[0].mxu0
    %295 = vdwg.mxu0
    %vm296 = vcmask 785408
    %297 = vst.msk [vmem:[#allocation2] sm:$0xff] %vm296, %v278
    %298 = vst.msk [vmem:[#allocation2 + $0x8] sm:$0xff] %vm296, %v283
    %299 = vst.msk [vmem:[#allocation2 + $0x10] sm:$0xff] %vm296, %v288
    %300 = vst.msk [vmem:[#allocation2 + $0x18] sm:$0xff] %vm296, %v293
    %vm301 = vcmask 257024
    %302 = vst.msk [vmem:[#allocation3] sm:$0xf] %vm301, 0.0
    %v303 = vld [vmem:[#allocation2] sm:$0xf]
    %v304 = vld [vmem:[#allocation3] sm:$0xf]
    %v306 = vlaneseq
    %v307 = vshrl.u32 %v306, 7
    %v308 = vsub.s32 0, %v307
    %v309 = vrot.slane %v191, %v308
    %v312 = vsel %vm198, %v304, 0
    %314 = vmatprep.subr.mxu0 0.0
    %315 = vmatpush1.msra.mxu0 %v186
    %316 = vmatprep.subr.mxu0 0.0
    %317 = vmatpush1.msra.mxu0 %v187
    %318 = vmatprep.subr.mxu0 0.0
    %319 = vmatpush1.msra.mxu0 %v188
    %320 = vmatprep.subr.mxu0 0.0
    %321 = vmatpush1.msra.mxu0 %v189
    %322 = vmatprep.subr.mxu0 0.0
    %323 = vmatpush1.msra.mxu0 0.0
    %324 = vmatprep.subr.mxu0 0.0
    %325 = vmatpush1.msra.mxu0 0.0
    %326 = vmatprep.subr.mxu0 0.0
    %327 = vmatpush1.msra.mxu0 0.0
    %328 = vmatprep.subr.mxu0 0.0
    %329 = vmatpush1.msra.mxu0 0.0
    %330 = vmatprep.subr.mxu0 0.0
    %331 = vmatpush1.msra.mxu0 0.0
    %332 = vmatprep.subr.mxu0 0.0
    %333 = vmatpush1.msra.mxu0 0.0
    %334 = vmatprep.subr.mxu0 0.0
    %335 = vmatpush1.msra.mxu0 0.0
    %336 = vmatprep.subr.mxu0 0.0
    %337 = vmatpush1.msra.mxu0 0.0
    %338 = vmatprep.subr.mxu0 0.0
    %339 = vmatpush1.msra.mxu0 0.0
    %340 = vmatprep.subr.mxu0 0.0
    %341 = vmatpush1.msra.mxu0 0.0
    %342 = vmatprep.subr.mxu0 0.0
    %343 = vmatpush1.msra.mxu0 0.0
    %344 = vmatprep.subr.mxu0 0.0
    %345 = vmatpush1.msra.mxu0 0.0
    %346 = vmatprep.subr.mxu0 0.0
    %347 = vmatpush1.msra.mxu0 0.0
    %348 = vmatprep.subr.mxu0 0.0
    %349 = vmatpush1.msra.mxu0 0.0
    %350 = vmatprep.subr.mxu0 0.0
    %351 = vmatpush1.msra.mxu0 0.0
    %352 = vmatprep.subr.mxu0 0.0
    %353 = vmatpush1.msra.mxu0 0.0
    %354 = vmatprep.subr.mxu0 0.0
    %355 = vmatpush1.msra.mxu0 0.0
    %356 = vmatprep.subr.mxu0 0.0
    %357 = vmatpush1.msra.mxu0 0.0
    %358 = vmatprep.subr.mxu0 0.0
    %359 = vmatpush1.msra.mxu0 0.0
    %360 = vmatprep.subr.mxu0 0.0
    %361 = vmatpush1.msra.mxu0 0.0
    %362 = vmatprep.subr.mxu0 0.0
    %363 = vmatpush1.msra.mxu0 0.0
    %364 = vmatprep.subr.mxu0 0.0
    %365 = vmatpush1.msra.mxu0 0.0
    %366 = vmatprep.subr.mxu0 0.0
    %367 = vmatpush1.msra.mxu0 0.0
    %368 = vmatprep.subr.mxu0 0.0
    %369 = vmatpush1.msra.mxu0 0.0
    %370 = vmatprep.subr.mxu0 0.0
    %371 = vmatpush1.msra.mxu0 0.0
    %372 = vmatprep.subr.mxu0 0.0
    %373 = vmatpush1.msra.mxu0 0.0
    %374 = vmatprep.subr.mxu0 0.0
    %375 = vmatpush1.msra.mxu0 0.0
    %376 = vmatprep.subr.mxu0 0.0
    %377 = vmatpush1.msra.mxu0 0.0
    %378 = vmatprep.mubr.f32.mxu0 0.0
    %379 = vmatmul.mubr.f32.gmra.mrb[0].mxu0 %v312
    %v380 = vpop.f32.mrb[0].mxu0
    %v381 = vadd.f32 %v309, %v380
    %v382 = vpop.f32.mrb[0].mxu0
    %383 = vdwg.mxu0
    %v384 = vadd.f32 %v303, %v381
    %v385 = vxor.u32 %v384, 2147483648
    %v386 = vmul.f32 %v385, 1.442695
    %v387 = vpow.pop %v386
    %v388 = vadd.f32 %v387, 1.0
    %v389 = vrcp.pop %v388
    %v390 = vmul.f32 1.0, %v389
    %392 = vrot.lane.b32.xlu0 %v381, 64
    %v393 = vpop.permute.xlu0 %392
    %v395 = vmul.f32 %v390, %v393
    %397 = vrot.lane.b32.xlu0 %v395, 64
    %v398 = vpop.permute.xlu0 %397
    %v400 = vadd.f32 %v303, %v398
    %v401 = vtanh.pop %v400
    %v402 = vsub.f32 1.0, %v390
    %404 = vrot.lane.b32.xlu0 %v401, 96
    %v405 = vpop.permute.xlu0 %404
    %v407 = vmul.f32 %v402, %v405
    %408 = vrot.lane.b32.xlu0 %v304, 32
    %v409 = vpop.permute.xlu0 %408
    %v411 = vmul.f32 %v390, %v409
    %v412 = vadd.f32 %v407, %v411
    %414 = vrot.lane.b32.xlu0 %v412, 96
    %v415 = vpop.permute.xlu0 %414
    %417 = vst.msk [vmem:[#allocation3] sm:$0xf] %vm301, %v415
    %418 = vst.msk [vmem:[#allocation7] sm:$0xf] %vm301, %v415
    %v419 = vld [vmem:[#allocation2 + $0x4] sm:$0xf]
    %v420 = vld [vmem:[#allocation3] sm:$0xf]
    %v422 = vsel %vm198, %v420, 0
    %424 = vmatprep.subr.mxu0 0.0
    %425 = vmatpush1.msra.mxu0 %v186
    %426 = vmatprep.subr.mxu0 0.0
    %427 = vmatpush1.msra.mxu0 %v187
    %428 = vmatprep.subr.mxu0 0.0
    %429 = vmatpush1.msra.mxu0 %v188
    %430 = vmatprep.subr.mxu0 0.0
    %431 = vmatpush1.msra.mxu0 %v189
    %432 = vmatprep.subr.mxu0 0.0
    %433 = vmatpush1.msra.mxu0 0.0
    %434 = vmatprep.subr.mxu0 0.0
    %435 = vmatpush1.msra.mxu0 0.0
    %436 = vmatprep.subr.mxu0 0.0
    %437 = vmatpush1.msra.mxu0 0.0
    %438 = vmatprep.subr.mxu0 0.0
    %439 = vmatpush1.msra.mxu0 0.0
    %440 = vmatprep.subr.mxu0 0.0
    %441 = vmatpush1.msra.mxu0 0.0
    %442 = vmatprep.subr.mxu0 0.0
    %443 = vmatpush1.msra.mxu0 0.0
    %444 = vmatprep.subr.mxu0 0.0
    %445 = vmatpush1.msra.mxu0 0.0
    %446 = vmatprep.subr.mxu0 0.0
    %447 = vmatpush1.msra.mxu0 0.0
    %448 = vmatprep.subr.mxu0 0.0
    %449 = vmatpush1.msra.mxu0 0.0
    %450 = vmatprep.subr.mxu0 0.0
    %451 = vmatpush1.msra.mxu0 0.0
    %452 = vmatprep.subr.mxu0 0.0
    %453 = vmatpush1.msra.mxu0 0.0
    %454 = vmatprep.subr.mxu0 0.0
    %455 = vmatpush1.msra.mxu0 0.0
    %456 = vmatprep.subr.mxu0 0.0
    %457 = vmatpush1.msra.mxu0 0.0
    %458 = vmatprep.subr.mxu0 0.0
    %459 = vmatpush1.msra.mxu0 0.0
    %460 = vmatprep.subr.mxu0 0.0
    %461 = vmatpush1.msra.mxu0 0.0
    %462 = vmatprep.subr.mxu0 0.0
    %463 = vmatpush1.msra.mxu0 0.0
    %464 = vmatprep.subr.mxu0 0.0
    %465 = vmatpush1.msra.mxu0 0.0
    %466 = vmatprep.subr.mxu0 0.0
    %467 = vmatpush1.msra.mxu0 0.0
    %468 = vmatprep.subr.mxu0 0.0
    %469 = vmatpush1.msra.mxu0 0.0
    %470 = vmatprep.subr.mxu0 0.0
    %471 = vmatpush1.msra.mxu0 0.0
    %472 = vmatprep.subr.mxu0 0.0
    %473 = vmatpush1.msra.mxu0 0.0
    %474 = vmatprep.subr.mxu0 0.0
    %475 = vmatpush1.msra.mxu0 0.0
    %476 = vmatprep.subr.mxu0 0.0
    %477 = vmatpush1.msra.mxu0 0.0
    %478 = vmatprep.subr.mxu0 0.0
    %479 = vmatpush1.msra.mxu0 0.0
    %480 = vmatprep.subr.mxu0 0.0
    %481 = vmatpush1.msra.mxu0 0.0
    %482 = vmatprep.subr.mxu0 0.0
    %483 = vmatpush1.msra.mxu0 0.0
    %484 = vmatprep.subr.mxu0 0.0
    %485 = vmatpush1.msra.mxu0 0.0
    %486 = vmatprep.subr.mxu0 0.0
    %487 = vmatpush1.msra.mxu0 0.0
    %488 = vmatprep.mubr.f32.mxu0 0.0
    %489 = vmatmul.mubr.f32.gmra.mrb[0].mxu0 %v422
    %v490 = vpop.f32.mrb[0].mxu0
    %v491 = vadd.f32 %v309, %v490
    %v492 = vpop.f32.mrb[0].mxu0
    %493 = vdwg.mxu0
    %v494 = vadd.f32 %v419, %v491
    %v495 = vxor.u32 %v494, 2147483648
    %v496 = vmul.f32 %v495, 1.442695
    %v497 = vpow.pop %v496
    %v498 = vadd.f32 %v497, 1.0
    %v499 = vrcp.pop %v498
    %v500 = vmul.f32 1.0, %v499
    %502 = vrot.lane.b32.xlu0 %v491, 64
    %v503 = vpop.permute.xlu0 %502
    %v505 = vmul.f32 %v500, %v503
    %507 = vrot.lane.b32.xlu0 %v505, 64
    %v508 = vpop.permute.xlu0 %507
    %v510 = vadd.f32 %v419, %v508
    %v511 = vtanh.pop %v510
    %v512 = vsub.f32 1.0, %v500
    %514 = vrot.lane.b32.xlu0 %v511, 96
    %v515 = vpop.permute.xlu0 %514
    %v517 = vmul.f32 %v512, %v515
    %518 = vrot.lane.b32.xlu0 %v420, 32
    %v519 = vpop.permute.xlu0 %518
    %v521 = vmul.f32 %v500, %v519
    %v522 = vadd.f32 %v517, %v521
    %524 = vrot.lane.b32.xlu0 %v522, 96
    %v525 = vpop.permute.xlu0 %524
    %527 = vst.msk [vmem:[#allocation3] sm:$0xf] %vm301, %v525
    %528 = vst.msk [vmem:[#allocation7 + $0x4] sm:$0xf] %vm301, %v525
    %v529 = vld [vmem:[#allocation2 + $0x8] sm:$0xf]
    %v530 = vld [vmem:[#allocation3] sm:$0xf]
    %v532 = vsel %vm198, %v530, 0
    %534 = vmatprep.subr.mxu0 0.0
    %535 = vmatpush1.msra.mxu0 %v186
    %536 = vmatprep.subr.mxu0 0.0
    %537 = vmatpush1.msra.mxu0 %v187
    %538 = vmatprep.subr.mxu0 0.0
    %539 = vmatpush1.msra.mxu0 %v188
    %540 = vmatprep.subr.mxu0 0.0
    %541 = vmatpush1.msra.mxu0 %v189
    %542 = vmatprep.subr.mxu0 0.0
    %543 = vmatpush1.msra.mxu0 0.0
    %544 = vmatprep.subr.mxu0 0.0
    %545 = vmatpush1.msra.mxu0 0.0
    %546 = vmatprep.subr.mxu0 0.0
    %547 = vmatpush1.msra.mxu0 0.0
    %548 = vmatprep.subr.mxu0 0.0
    %549 = vmatpush1.msra.mxu0 0.0
    %550 = vmatprep.subr.mxu0 0.0
    %551 = vmatpush1.msra.mxu0 0.0
    %552 = vmatprep.subr.mxu0 0.0
    %553 = vmatpush1.msra.mxu0 0.0
    %554 = vmatprep.subr.mxu0 0.0
    %555 = vmatpush1.msra.mxu0 0.0
    %556 = vmatprep.subr.mxu0 0.0
    %557 = vmatpush1.msra.mxu0 0.0
    %558 = vmatprep.subr.mxu0 0.0
    %559 = vmatpush1.msra.mxu0 0.0
    %560 = vmatprep.subr.mxu0 0.0
    %561 = vmatpush1.msra.mxu0 0.0
    %562 = vmatprep.subr.mxu0 0.0
    %563 = vmatpush1.msra.mxu0 0.0
    %564 = vmatprep.subr.mxu0 0.0
    %565 = vmatpush1.msra.mxu0 0.0
    %566 = vmatprep.subr.mxu0 0.0
    %567 = vmatpush1.msra.mxu0 0.0
    %568 = vmatprep.subr.mxu0 0.0
    %569 = vmatpush1.msra.mxu0 0.0
    %570 = vmatprep.subr.mxu0 0.0
    %571 = vmatpush1.msra.mxu0 0.0
    %572 = vmatprep.subr.mxu0 0.0
    %573 = vmatpush1.msra.mxu0 0.0
    %574 = vmatprep.subr.mxu0 0.0
    %575 = vmatpush1.msra.mxu0 0.0
    %576 = vmatprep.subr.mxu0 0.0
    %577 = vmatpush1.msra.mxu0 0.0
    %578 = vmatprep.subr.mxu0 0.0
    %579 = vmatpush1.msra.mxu0 0.0
    %580 = vmatprep.subr.mxu0 0.0
    %581 = vmatpush1.msra.mxu0 0.0
    %582 = vmatprep.subr.mxu0 0.0
    %583 = vmatpush1.msra.mxu0 0.0
    %584 = vmatprep.subr.mxu0 0.0
    %585 = vmatpush1.msra.mxu0 0.0
    %586 = vmatprep.subr.mxu0 0.0
    %587 = vmatpush1.msra.mxu0 0.0
    %588 = vmatprep.subr.mxu0 0.0
    %589 = vmatpush1.msra.mxu0 0.0
    %590 = vmatprep.subr.mxu0 0.0
    %591 = vmatpush1.msra.mxu0 0.0
    %592 = vmatprep.subr.mxu0 0.0
    %593 = vmatpush1.msra.mxu0 0.0
    %594 = vmatprep.subr.mxu0 0.0
    %595 = vmatpush1.msra.mxu0 0.0
    %596 = vmatprep.subr.mxu0 0.0
    %597 = vmatpush1.msra.mxu0 0.0
    %598 = vmatprep.mubr.f32.mxu0 0.0
    %599 = vmatmul.mubr.f32.gmra.mrb[0].mxu0 %v532
    %v600 = vpop.f32.mrb[0].mxu0
    %v601 = vadd.f32 %v309, %v600
    %v602 = vpop.f32.mrb[0].mxu0
    %603 = vdwg.mxu0
    %v604 = vadd.f32 %v529, %v601
    %v605 = vxor.u32 %v604, 2147483648
    %v606 = vmul.f32 %v605, 1.442695
    %v607 = vpow.pop %v606
    %v608 = vadd.f32 %v607, 1.0
    %v609 = vrcp.pop %v608
    %v610 = vmul.f32 1.0, %v609
    %612 = vrot.lane.b32.xlu0 %v601, 64
    %v613 = vpop.permute.xlu0 %612
    %v615 = vmul.f32 %v610, %v613
    %617 = vrot.lane.b32.xlu0 %v615, 64
    %v618 = vpop.permute.xlu0 %617
    %v620 = vadd.f32 %v529, %v618
    %v621 = vtanh.pop %v620
    %v622 = vsub.f32 1.0, %v610
    %624 = vrot.lane.b32.xlu0 %v621, 96
    %v625 = vpop.permute.xlu0 %624
    %v627 = vmul.f32 %v622, %v625
    %628 = vrot.lane.b32.xlu0 %v530, 32
    %v629 = vpop.permute.xlu0 %628
    %v631 = vmul.f32 %v610, %v629
    %v632 = vadd.f32 %v627, %v631
    %634 = vrot.lane.b32.xlu0 %v632, 96
    %v635 = vpop.permute.xlu0 %634
    %637 = vst.msk [vmem:[#allocation3] sm:$0xf] %vm301, %v635
    %638 = vst.msk [vmem:[#allocation7 + $0x8] sm:$0xf] %vm301, %v635
    %v639 = vld [vmem:[#allocation2 + $0xc] sm:$0xf]
    %v640 = vld [vmem:[#allocation3] sm:$0xf]
    %v642 = vsel %vm198, %v640, 0
    %644 = vmatprep.subr.mxu0 0.0
    %645 = vmatpush1.msra.mxu0 %v186
    %646 = vmatprep.subr.mxu0 0.0
    %647 = vmatpush1.msra.mxu0 %v187
    %648 = vmatprep.subr.mxu0 0.0
    %649 = vmatpush1.msra.mxu0 %v188
    %650 = vmatprep.subr.mxu0 0.0
    %651 = vmatpush1.msra.mxu0 %v189
    %652 = vmatprep.subr.mxu0 0.0
    %653 = vmatpush1.msra.mxu0 0.0
    %654 = vmatprep.subr.mxu0 0.0
    %655 = vmatpush1.msra.mxu0 0.0
    %656 = vmatprep.subr.mxu0 0.0
    %657 = vmatpush1.msra.mxu0 0.0
    %658 = vmatprep.subr.mxu0 0.0
    %659 = vmatpush1.msra.mxu0 0.0
    %660 = vmatprep.subr.mxu0 0.0
    %661 = vmatpush1.msra.mxu0 0.0
    %662 = vmatprep.subr.mxu0 0.0
    %663 = vmatpush1.msra.mxu0 0.0
    %664 = vmatprep.subr.mxu0 0.0
    %665 = vmatpush1.msra.mxu0 0.0
    %666 = vmatprep.subr.mxu0 0.0
    %667 = vmatpush1.msra.mxu0 0.0
    %668 = vmatprep.subr.mxu0 0.0
    %669 = vmatpush1.msra.mxu0 0.0
    %670 = vmatprep.subr.mxu0 0.0
    %671 = vmatpush1.msra.mxu0 0.0
    %672 = vmatprep.subr.mxu0 0.0
    %673 = vmatpush1.msra.mxu0 0.0
    %674 = vmatprep.subr.mxu0 0.0
    %675 = vmatpush1.msra.mxu0 0.0
    %676 = vmatprep.subr.mxu0 0.0
    %677 = vmatpush1.msra.mxu0 0.0
    %678 = vmatprep.subr.mxu0 0.0
    %679 = vmatpush1.msra.mxu0 0.0
    %680 = vmatprep.subr.mxu0 0.0
    %681 = vmatpush1.msra.mxu0 0.0
    %682 = vmatprep.subr.mxu0 0.0
    %683 = vmatpush1.msra.mxu0 0.0
    %684 = vmatprep.subr.mxu0 0.0
    %685 = vmatpush1.msra.mxu0 0.0
    %686 = vmatprep.subr.mxu0 0.0
    %687 = vmatpush1.msra.mxu0 0.0
    %688 = vmatprep.subr.mxu0 0.0
    %689 = vmatpush1.msra.mxu0 0.0
    %690 = vmatprep.subr.mxu0 0.0
    %691 = vmatpush1.msra.mxu0 0.0
    %692 = vmatprep.subr.mxu0 0.0
    %693 = vmatpush1.msra.mxu0 0.0
    %694 = vmatprep.subr.mxu0 0.0
    %695 = vmatpush1.msra.mxu0 0.0
    %696 = vmatprep.subr.mxu0 0.0
    %697 = vmatpush1.msra.mxu0 0.0
    %698 = vmatprep.subr.mxu0 0.0
    %699 = vmatpush1.msra.mxu0 0.0
    %700 = vmatprep.subr.mxu0 0.0
    %701 = vmatpush1.msra.mxu0 0.0
    %702 = vmatprep.subr.mxu0 0.0
    %703 = vmatpush1.msra.mxu0 0.0
    %704 = vmatprep.subr.mxu0 0.0
    %705 = vmatpush1.msra.mxu0 0.0
    %706 = vmatprep.subr.mxu0 0.0
    %707 = vmatpush1.msra.mxu0 0.0
    %708 = vmatprep.mubr.f32.mxu0 0.0
    %709 = vmatmul.mubr.f32.gmra.mrb[0].mxu0 %v642
    %v710 = vpop.f32.mrb[0].mxu0
    %v711 = vadd.f32 %v309, %v710
    %v712 = vpop.f32.mrb[0].mxu0
    %713 = vdwg.mxu0
    %v714 = vadd.f32 %v639, %v711
    %v715 = vxor.u32 %v714, 2147483648
    %v716 = vmul.f32 %v715, 1.442695
    %v717 = vpow.pop %v716
    %v718 = vadd.f32 %v717, 1.0
    %v719 = vrcp.pop %v718
    %v720 = vmul.f32 1.0, %v719
    %722 = vrot.lane.b32.xlu0 %v711, 64
    %v723 = vpop.permute.xlu0 %722
    %v725 = vmul.f32 %v720, %v723
    %727 = vrot.lane.b32.xlu0 %v725, 64
    %v728 = vpop.permute.xlu0 %727
    %v730 = vadd.f32 %v639, %v728
    %v731 = vtanh.pop %v730
    %v732 = vsub.f32 1.0, %v720
    %734 = vrot.lane.b32.xlu0 %v731, 96
    %v735 = vpop.permute.xlu0 %734
    %v737 = vmul.f32 %v732, %v735
    %738 = vrot.lane.b32.xlu0 %v640, 32
    %v739 = vpop.permute.xlu0 %738
    %v741 = vmul.f32 %v720, %v739
    %v742 = vadd.f32 %v737, %v741
    %744 = vrot.lane.b32.xlu0 %v742, 96
    %v745 = vpop.permute.xlu0 %744
    %747 = vst.msk [vmem:[#allocation3] sm:$0xf] %vm301, %v745
    %748 = vst.msk [vmem:[#allocation7 + $0xc] sm:$0xf] %vm301, %v745
    %v749 = vld [vmem:[#allocation2 + $0x10] sm:$0xf]
    %v750 = vld [vmem:[#allocation3] sm:$0xf]
    %v752 = vsel %vm198, %v750, 0
    %754 = vmatprep.subr.mxu0 0.0
    %755 = vmatpush1.msra.mxu0 %v186
    %756 = vmatprep.subr.mxu0 0.0
    %757 = vmatpush1.msra.mxu0 %v187
    %758 = vmatprep.subr.mxu0 0.0
    %759 = vmatpush1.msra.mxu0 %v188
    %760 = vmatprep.subr.mxu0 0.0
    %761 = vmatpush1.msra.mxu0 %v189
    %762 = vmatprep.subr.mxu0 0.0
    %763 = vmatpush1.msra.mxu0 0.0
    %764 = vmatprep.subr.mxu0 0.0
    %765 = vmatpush1.msra.mxu0 0.0
    %766 = vmatprep.subr.mxu0 0.0
    %767 = vmatpush1.msra.mxu0 0.0
    %768 = vmatprep.subr.mxu0 0.0
    %769 = vmatpush1.msra.mxu0 0.0
    %770 = vmatprep.subr.mxu0 0.0
    %771 = vmatpush1.msra.mxu0 0.0
    %772 = vmatprep.subr.mxu0 0.0
    %773 = vmatpush1.msra.mxu0 0.0
    %774 = vmatprep.subr.mxu0 0.0
    %775 = vmatpush1.msra.mxu0 0.0
    %776 = vmatprep.subr.mxu0 0.0
    %777 = vmatpush1.msra.mxu0 0.0
    %778 = vmatprep.subr.mxu0 0.0
    %779 = vmatpush1.msra.mxu0 0.0
    %780 = vmatprep.subr.mxu0 0.0
    %781 = vmatpush1.msra.mxu0 0.0
    %782 = vmatprep.subr.mxu0 0.0
    %783 = vmatpush1.msra.mxu0 0.0
    %784 = vmatprep.subr.mxu0 0.0
    %785 = vmatpush1.msra.mxu0 0.0
    %786 = vmatprep.subr.mxu0 0.0
    %787 = vmatpush1.msra.mxu0 0.0
    %788 = vmatprep.subr.mxu0 0.0
    %789 = vmatpush1.msra.mxu0 0.0
    %790 = vmatprep.subr.mxu0 0.0
    %791 = vmatpush1.msra.mxu0 0.0
    %792 = vmatprep.subr.mxu0 0.0
    %793 = vmatpush1.msra.mxu0 0.0
    %794 = vmatprep.subr.mxu0 0.0
    %795 = vmatpush1.msra.mxu0 0.0
    %796 = vmatprep.subr.mxu0 0.0
    %797 = vmatpush1.msra.mxu0 0.0
    %798 = vmatprep.subr.mxu0 0.0
    %799 = vmatpush1.msra.mxu0 0.0
    %800 = vmatprep.subr.mxu0 0.0
    %801 = vmatpush1.msra.mxu0 0.0
    %802 = vmatprep.subr.mxu0 0.0
    %803 = vmatpush1.msra.mxu0 0.0
    %804 = vmatprep.subr.mxu0 0.0
    %805 = vmatpush1.msra.mxu0 0.0
    %806 = vmatprep.subr.mxu0 0.0
    %807 = vmatpush1.msra.mxu0 0.0
    %808 = vmatprep.subr.mxu0 0.0
    %809 = vmatpush1.msra.mxu0 0.0
    %810 = vmatprep.subr.mxu0 0.0
    %811 = vmatpush1.msra.mxu0 0.0
    %812 = vmatprep.subr.mxu0 0.0
    %813 = vmatpush1.msra.mxu0 0.0
    %814 = vmatprep.subr.mxu0 0.0
    %815 = vmatpush1.msra.mxu0 0.0
    %816 = vmatprep.subr.mxu0 0.0
    %817 = vmatpush1.msra.mxu0 0.0
    %818 = vmatprep.mubr.f32.mxu0 0.0
    %819 = vmatmul.mubr.f32.gmra.mrb[0].mxu0 %v752
    %v820 = vpop.f32.mrb[0].mxu0
    %v821 = vadd.f32 %v309, %v820
    %v822 = vpop.f32.mrb[0].mxu0
    %823 = vdwg.mxu0
    %v824 = vadd.f32 %v749, %v821
    %v825 = vxor.u32 %v824, 2147483648
    %v826 = vmul.f32 %v825, 1.442695
    %v827 = vpow.pop %v826
    %v828 = vadd.f32 %v827, 1.0
    %v829 = vrcp.pop %v828
    %v830 = vmul.f32 1.0, %v829
    %832 = vrot.lane.b32.xlu0 %v821, 64
    %v833 = vpop.permute.xlu0 %832
    %v835 = vmul.f32 %v830, %v833
    %837 = vrot.lane.b32.xlu0 %v835, 64
    %v838 = vpop.permute.xlu0 %837
    %v840 = vadd.f32 %v749, %v838
    %v841 = vtanh.pop %v840
    %v842 = vsub.f32 1.0, %v830
    %844 = vrot.lane.b32.xlu0 %v841, 96
    %v845 = vpop.permute.xlu0 %844
    %v847 = vmul.f32 %v842, %v845
    %848 = vrot.lane.b32.xlu0 %v750, 32
    %v849 = vpop.permute.xlu0 %848
    %v851 = vmul.f32 %v830, %v849
    %v852 = vadd.f32 %v847, %v851
    %854 = vrot.lane.b32.xlu0 %v852, 96
    %v855 = vpop.permute.xlu0 %854
    %857 = vst.msk [vmem:[#allocation3] sm:$0xf] %vm301, %v855
    %858 = vst.msk [vmem:[#allocation7 + $0x10] sm:$0xf] %vm301, %v855
    %v859 = vld [vmem:[#allocation2 + $0x14] sm:$0xf]
    %v860 = vld [vmem:[#allocation3] sm:$0xf]
    %v862 = vsel %vm198, %v860, 0
    %864 = vmatprep.subr.mxu0 0.0
    %865 = vmatpush1.msra.mxu0 %v186
    %866 = vmatprep.subr.mxu0 0.0
    %867 = vmatpush1.msra.mxu0 %v187
    %868 = vmatprep.subr.mxu0 0.0
    %869 = vmatpush1.msra.mxu0 %v188
    %870 = vmatprep.subr.mxu0 0.0
    %871 = vmatpush1.msra.mxu0 %v189
    %872 = vmatprep.subr.mxu0 0.0
    %873 = vmatpush1.msra.mxu0 0.0
    %874 = vmatprep.subr.mxu0 0.0
    %875 = vmatpush1.msra.mxu0 0.0
    %876 = vmatprep.subr.mxu0 0.0
    %877 = vmatpush1.msra.mxu0 0.0
    %878 = vmatprep.subr.mxu0 0.0
    %879 = vmatpush1.msra.mxu0 0.0
    %880 = vmatprep.subr.mxu0 0.0
    %881 = vmatpush1.msra.mxu0 0.0
    %882 = vmatprep.subr.mxu0 0.0
    %883 = vmatpush1.msra.mxu0 0.0
    %884 = vmatprep.subr.mxu0 0.0
    %885 = vmatpush1.msra.mxu0 0.0
    %886 = vmatprep.subr.mxu0 0.0
    %887 = vmatpush1.msra.mxu0 0.0
    %888 = vmatprep.subr.mxu0 0.0
    %889 = vmatpush1.msra.mxu0 0.0
    %890 = vmatprep.subr.mxu0 0.0
    %891 = vmatpush1.msra.mxu0 0.0
    %892 = vmatprep.subr.mxu0 0.0
    %893 = vmatpush1.msra.mxu0 0.0
    %894 = vmatprep.subr.mxu0 0.0
    %895 = vmatpush1.msra.mxu0 0.0
    %896 = vmatprep.subr.mxu0 0.0
    %897 = vmatpush1.msra.mxu0 0.0
    %898 = vmatprep.subr.mxu0 0.0
    %899 = vmatpush1.msra.mxu0 0.0
    %900 = vmatprep.subr.mxu0 0.0
    %901 = vmatpush1.msra.mxu0 0.0
    %902 = vmatprep.subr.mxu0 0.0
    %903 = vmatpush1.msra.mxu0 0.0
    %904 = vmatprep.subr.mxu0 0.0
    %905 = vmatpush1.msra.mxu0 0.0
    %906 = vmatprep.subr.mxu0 0.0
    %907 = vmatpush1.msra.mxu0 0.0
    %908 = vmatprep.subr.mxu0 0.0
    %909 = vmatpush1.msra.mxu0 0.0
    %910 = vmatprep.subr.mxu0 0.0
    %911 = vmatpush1.msra.mxu0 0.0
    %912 = vmatprep.subr.mxu0 0.0
    %913 = vmatpush1.msra.mxu0 0.0
    %914 = vmatprep.subr.mxu0 0.0
    %915 = vmatpush1.msra.mxu0 0.0
    %916 = vmatprep.subr.mxu0 0.0
    %917 = vmatpush1.msra.mxu0 0.0
    %918 = vmatprep.subr.mxu0 0.0
    %919 = vmatpush1.msra.mxu0 0.0
    %920 = vmatprep.subr.mxu0 0.0
    %921 = vmatpush1.msra.mxu0 0.0
    %922 = vmatprep.subr.mxu0 0.0
    %923 = vmatpush1.msra.mxu0 0.0
    %924 = vmatprep.subr.mxu0 0.0
    %925 = vmatpush1.msra.mxu0 0.0
    %926 = vmatprep.subr.mxu0 0.0
    %927 = vmatpush1.msra.mxu0 0.0
    %928 = vmatprep.mubr.f32.mxu0 0.0
    %929 = vmatmul.mubr.f32.gmra.mrb[0].mxu0 %v862
    %v930 = vpop.f32.mrb[0].mxu0
    %v931 = vadd.f32 %v309, %v930
    %v932 = vpop.f32.mrb[0].mxu0
    %933 = vdwg.mxu0
    %v934 = vadd.f32 %v859, %v931
    %v935 = vxor.u32 %v934, 2147483648
    %v936 = vmul.f32 %v935, 1.442695
    %v937 = vpow.pop %v936
    %v938 = vadd.f32 %v937, 1.0
    %v939 = vrcp.pop %v938
    %v940 = vmul.f32 1.0, %v939
    %942 = vrot.lane.b32.xlu0 %v931, 64
    %v943 = vpop.permute.xlu0 %942
    %v945 = vmul.f32 %v940, %v943
    %947 = vrot.lane.b32.xlu0 %v945, 64
    %v948 = vpop.permute.xlu0 %947
    %v950 = vadd.f32 %v859, %v948
    %v951 = vtanh.pop %v950
    %v952 = vsub.f32 1.0, %v940
    %954 = vrot.lane.b32.xlu0 %v951, 96
    %v955 = vpop.permute.xlu0 %954
    %v957 = vmul.f32 %v952, %v955
    %958 = vrot.lane.b32.xlu0 %v860, 32
    %v959 = vpop.permute.xlu0 %958
    %v961 = vmul.f32 %v940, %v959
    %v962 = vadd.f32 %v957, %v961
    %964 = vrot.lane.b32.xlu0 %v962, 96
    %v965 = vpop.permute.xlu0 %964
    %967 = vst.msk [vmem:[#allocation3] sm:$0xf] %vm301, %v965
    %968 = vst.msk [vmem:[#allocation7 + $0x14] sm:$0xf] %vm301, %v965
    %v969 = vld [vmem:[#allocation2 + $0x18] sm:$0xf]
    %v970 = vld [vmem:[#allocation3] sm:$0xf]
    %v972 = vsel %vm198, %v970, 0
    %974 = vmatprep.subr.mxu0 0.0
    %975 = vmatpush1.msra.mxu0 %v186
    %976 = vmatprep.subr.mxu0 0.0
    %977 = vmatpush1.msra.mxu0 %v187
    %978 = vmatprep.subr.mxu0 0.0
    %979 = vmatpush1.msra.mxu0 %v188
    %980 = vmatprep.subr.mxu0 0.0
    %981 = vmatpush1.msra.mxu0 %v189
    %982 = vmatprep.subr.mxu0 0.0
    %983 = vmatpush1.msra.mxu0 0.0
    %984 = vmatprep.subr.mxu0 0.0
    %985 = vmatpush1.msra.mxu0 0.0
    %986 = vmatprep.subr.mxu0 0.0
    %987 = vmatpush1.msra.mxu0 0.0
    %988 = vmatprep.subr.mxu0 0.0
    %989 = vmatpush1.msra.mxu0 0.0
    %990 = vmatprep.subr.mxu0 0.0
    %991 = vmatpush1.msra.mxu0 0.0
    %992 = vmatprep.subr.mxu0 0.0
    %993 = vmatpush1.msra.mxu0 0.0
    %994 = vmatprep.subr.mxu0 0.0
    %995 = vmatpush1.msra.mxu0 0.0
    %996 = vmatprep.subr.mxu0 0.0
    %997 = vmatpush1.msra.mxu0 0.0
    %998 = vmatprep.subr.mxu0 0.0
    %999 = vmatpush1.msra.mxu0 0.0
    %1000 = vmatprep.subr.mxu0 0.0
    %1001 = vmatpush1.msra.mxu0 0.0
    %1002 = vmatprep.subr.mxu0 0.0
    %1003 = vmatpush1.msra.mxu0 0.0
    %1004 = vmatprep.subr.mxu0 0.0
    %1005 = vmatpush1.msra.mxu0 0.0
    %1006 = vmatprep.subr.mxu0 0.0
    %1007 = vmatpush1.msra.mxu0 0.0
    %1008 = vmatprep.subr.mxu0 0.0
    %1009 = vmatpush1.msra.mxu0 0.0
    %1010 = vmatprep.subr.mxu0 0.0
    %1011 = vmatpush1.msra.mxu0 0.0
    %1012 = vmatprep.subr.mxu0 0.0
    %1013 = vmatpush1.msra.mxu0 0.0
    %1014 = vmatprep.subr.mxu0 0.0
    %1015 = vmatpush1.msra.mxu0 0.0
    %1016 = vmatprep.subr.mxu0 0.0
    %1017 = vmatpush1.msra.mxu0 0.0
    %1018 = vmatprep.subr.mxu0 0.0
    %1019 = vmatpush1.msra.mxu0 0.0
    %1020 = vmatprep.subr.mxu0 0.0
    %1021 = vmatpush1.msra.mxu0 0.0
    %1022 = vmatprep.subr.mxu0 0.0
    %1023 = vmatpush1.msra.mxu0 0.0
    %1024 = vmatprep.subr.mxu0 0.0
    %1025 = vmatpush1.msra.mxu0 0.0
    %1026 = vmatprep.subr.mxu0 0.0
    %1027 = vmatpush1.msra.mxu0 0.0
    %1028 = vmatprep.subr.mxu0 0.0
    %1029 = vmatpush1.msra.mxu0 0.0
    %1030 = vmatprep.subr.mxu0 0.0
    %1031 = vmatpush1.msra.mxu0 0.0
    %1032 = vmatprep.subr.mxu0 0.0
    %1033 = vmatpush1.msra.mxu0 0.0
    %1034 = vmatprep.subr.mxu0 0.0
    %1035 = vmatpush1.msra.mxu0 0.0
    %1036 = vmatprep.subr.mxu0 0.0
    %1037 = vmatpush1.msra.mxu0 0.0
    %1038 = vmatprep.mubr.f32.mxu0 0.0
    %1039 = vmatmul.mubr.f32.gmra.mrb[0].mxu0 %v972
    %v1040 = vpop.f32.mrb[0].mxu0
    %v1041 = vadd.f32 %v309, %v1040
    %v1042 = vpop.f32.mrb[0].mxu0
    %1043 = vdwg.mxu0
    %v1044 = vadd.f32 %v969, %v1041
    %v1045 = vxor.u32 %v1044, 2147483648
    %v1046 = vmul.f32 %v1045, 1.442695
    %v1047 = vpow.pop %v1046
    %v1048 = vadd.f32 %v1047, 1.0
    %v1049 = vrcp.pop %v1048
    %v1050 = vmul.f32 1.0, %v1049
    %1052 = vrot.lane.b32.xlu0 %v1041, 64
    %v1053 = vpop.permute.xlu0 %1052
    %v1055 = vmul.f32 %v1050, %v1053
    %1057 = vrot.lane.b32.xlu0 %v1055, 64
    %v1058 = vpop.permute.xlu0 %1057
    %v1060 = vadd.f32 %v969, %v1058
    %v1061 = vtanh.pop %v1060
    %v1062 = vsub.f32 1.0, %v1050
    %1064 = vrot.lane.b32.xlu0 %v1061, 96
    %v1065 = vpop.permute.xlu0 %1064
    %v1067 = vmul.f32 %v1062, %v1065
    %1068 = vrot.lane.b32.xlu0 %v970, 32
    %v1069 = vpop.permute.xlu0 %1068
    %v1071 = vmul.f32 %v1050, %v1069
    %v1072 = vadd.f32 %v1067, %v1071
    %1074 = vrot.lane.b32.xlu0 %v1072, 96
    %v1075 = vpop.permute.xlu0 %1074
    %1077 = vst.msk [vmem:[#allocation3] sm:$0xf] %vm301, %v1075
    %1078 = vst.msk [vmem:[#allocation7 + $0x18] sm:$0xf] %vm301, %v1075
    %v1079 = vld [vmem:[#allocation2 + $0x1c] sm:$0xf]
    %v1080 = vld [vmem:[#allocation3] sm:$0xf]
    %v1082 = vsel %vm198, %v1080, 0
    %1084 = vmatprep.subr.mxu0 0.0
    %1085 = vmatpush1.msra.mxu0 %v186
    %1086 = vmatprep.subr.mxu0 0.0
    %1087 = vmatpush1.msra.mxu0 %v187
    %1088 = vmatprep.subr.mxu0 0.0
    %1089 = vmatpush1.msra.mxu0 %v188
    %1090 = vmatprep.subr.mxu0 0.0
    %1091 = vmatpush1.msra.mxu0 %v189
    %1092 = vmatprep.subr.mxu0 0.0
    %1093 = vmatpush1.msra.mxu0 0.0
    %1094 = vmatprep.subr.mxu0 0.0
    %1095 = vmatpush1.msra.mxu0 0.0
    %1096 = vmatprep.subr.mxu0 0.0
    %1097 = vmatpush1.msra.mxu0 0.0
    %1098 = vmatprep.subr.mxu0 0.0
    %1099 = vmatpush1.msra.mxu0 0.0
    %1100 = vmatprep.subr.mxu0 0.0
    %1101 = vmatpush1.msra.mxu0 0.0
    %1102 = vmatprep.subr.mxu0 0.0
    %1103 = vmatpush1.msra.mxu0 0.0
    %1104 = vmatprep.subr.mxu0 0.0
    %1105 = vmatpush1.msra.mxu0 0.0
    %1106 = vmatprep.subr.mxu0 0.0
    %1107 = vmatpush1.msra.mxu0 0.0
    %1108 = vmatprep.subr.mxu0 0.0
    %1109 = vmatpush1.msra.mxu0 0.0
    %1110 = vmatprep.subr.mxu0 0.0
    %1111 = vmatpush1.msra.mxu0 0.0
    %1112 = vmatprep.subr.mxu0 0.0
    %1113 = vmatpush1.msra.mxu0 0.0
    %1114 = vmatprep.subr.mxu0 0.0
    %1115 = vmatpush1.msra.mxu0 0.0
    %1116 = vmatprep.subr.mxu0 0.0
    %1117 = vmatpush1.msra.mxu0 0.0
    %1118 = vmatprep.subr.mxu0 0.0
    %1119 = vmatpush1.msra.mxu0 0.0
    %1120 = vmatprep.subr.mxu0 0.0
    %1121 = vmatpush1.msra.mxu0 0.0
    %1122 = vmatprep.subr.mxu0 0.0
    %1123 = vmatpush1.msra.mxu0 0.0
    %1124 = vmatprep.subr.mxu0 0.0
    %1125 = vmatpush1.msra.mxu0 0.0
    %1126 = vmatprep.subr.mxu0 0.0
    %1127 = vmatpush1.msra.mxu0 0.0
    %1128 = vmatprep.subr.mxu0 0.0
    %1129 = vmatpush1.msra.mxu0 0.0
    %1130 = vmatprep.subr.mxu0 0.0
    %1131 = vmatpush1.msra.mxu0 0.0
    %1132 = vmatprep.subr.mxu0 0.0
    %1133 = vmatpush1.msra.mxu0 0.0
    %1134 = vmatprep.subr.mxu0 0.0
    %1135 = vmatpush1.msra.mxu0 0.0
    %1136 = vmatprep.subr.mxu0 0.0
    %1137 = vmatpush1.msra.mxu0 0.0
    %1138 = vmatprep.subr.mxu0 0.0
    %1139 = vmatpush1.msra.mxu0 0.0
    %1140 = vmatprep.subr.mxu0 0.0
    %1141 = vmatpush1.msra.mxu0 0.0
    %1142 = vmatprep.subr.mxu0 0.0
    %1143 = vmatpush1.msra.mxu0 0.0
    %1144 = vmatprep.subr.mxu0 0.0
    %1145 = vmatpush1.msra.mxu0 0.0
    %1146 = vmatprep.subr.mxu0 0.0
    %1147 = vmatpush1.msra.mxu0 0.0
    %1148 = vmatprep.mubr.f32.mxu0 0.0
    %1149 = vmatmul.mubr.f32.gmra.mrb[0].mxu0 %v1082
    %v1150 = vpop.f32.mrb[0].mxu0
    %v1151 = vadd.f32 %v309, %v1150
    %v1152 = vpop.f32.mrb[0].mxu0
    %1153 = vdwg.mxu0
    %v1154 = vadd.f32 %v1079, %v1151
    %v1155 = vxor.u32 %v1154, 2147483648
    %v1156 = vmul.f32 %v1155, 1.442695
    %v1157 = vpow.pop %v1156
    %v1158 = vadd.f32 %v1157, 1.0
    %v1159 = vrcp.pop %v1158
    %v1160 = vmul.f32 1.0, %v1159
    %1162 = vrot.lane.b32.xlu0 %v1151, 64
    %v1163 = vpop.permute.xlu0 %1162
    %v1165 = vmul.f32 %v1160, %v1163
    %1167 = vrot.lane.b32.xlu0 %v1165, 64
    %v1168 = vpop.permute.xlu0 %1167
    %v1170 = vadd.f32 %v1079, %v1168
    %v1171 = vtanh.pop %v1170
    %v1172 = vsub.f32 1.0, %v1160
    %1174 = vrot.lane.b32.xlu0 %v1171, 96
    %v1175 = vpop.permute.xlu0 %1174
    %v1177 = vmul.f32 %v1172, %v1175
    %1178 = vrot.lane.b32.xlu0 %v1080, 32
    %v1179 = vpop.permute.xlu0 %1178
    %v1181 = vmul.f32 %v1160, %v1179
    %v1182 = vadd.f32 %v1177, %v1181
    %1184 = vrot.lane.b32.xlu0 %v1182, 96
    %v1185 = vpop.permute.xlu0 %1184
    %1187 = vst.msk [vmem:[#allocation3] sm:$0xf] %vm301, %v1185
    %1188 = vst.msk [vmem:[#allocation7 + $0x1c] sm:$0xf] %vm301, %v1185
    %v1189 = vld [vmem:[#allocation3] sm:$0xf]
    %1190 = vst.msk [vmem:[#allocation8] sm:$0xf] %vm301, %v1189
    %v1191 = vld [vmem:[#allocation7] sm:$0xff]
    %v1192 = vld [vmem:[#allocation7 + $0x8] sm:$0xff]
    %v1193 = vld [vmem:[#allocation7 + $0x10] sm:$0xff]
    %v1194 = vld [vmem:[#allocation7 + $0x18] sm:$0xff]
    %v1195 = vld [vmem:[%s3] sm:$0xff]
    %v1196 = vld [vmem:[%s3 + $0x8] sm:$0xff]
    %v1197 = vld [vmem:[%s3 + $0x10] sm:$0xff]
    %v1198 = vld [vmem:[%s3 + $0x18] sm:$0xff]
    %v1199 = vld [vmem:[#allocation4] sm:$0xff]
    %v1200 = vld [vmem:[#allocation4 + $0x8] sm:$0xff]
    %v1201 = vld [vmem:[#allocation4 + $0x10] sm:$0xff]
    %v1202 = vld [vmem:[#allocation4 + $0x18] sm:$0xff]
    %v1203 = vld [vmem:[%s7] sm:$0x1]
    %v1204 = vld [vmem:[%s9] sm:$0x1]
    %v1206 = vlaneseq
    %v1207 = vshrl.u32 %v1206, 7
    %v1208 = vsub.s32 0, %v1207
    %v1209 = vrot.slane %v1203, %v1208
    %v1212 = vsel %vm198, %v1191, 0
    %v1215 = vsel %vm198, %v1192, 0
    %v1218 = vsel %vm198, %v1193, 0
    %v1221 = vsel %vm198, %v1194, 0
    %1223 = vmatprep.subr.mxu0 0.0
    %1224 = vmatpush1.msra.mxu0 %v1195
    %1225 = vmatprep.subr.mxu0 0.0
    %1226 = vmatpush1.msra.mxu0 %v1196
    %1227 = vmatprep.subr.mxu0 0.0
    %1228 = vmatpush1.msra.mxu0 %v1197
    %1229 = vmatprep.subr.mxu0 0.0
    %1230 = vmatpush1.msra.mxu0 %v1198
    %1231 = vmatprep.subr.mxu0 0.0
    %1232 = vmatpush1.msra.mxu0 0.0
    %1233 = vmatprep.subr.mxu0 0.0
    %1234 = vmatpush1.msra.mxu0 0.0
    %1235 = vmatprep.subr.mxu0 0.0
    %1236 = vmatpush1.msra.mxu0 0.0
    %1237 = vmatprep.subr.mxu0 0.0
    %1238 = vmatpush1.msra.mxu0 0.0
    %1239 = vmatprep.subr.mxu0 0.0
    %1240 = vmatpush1.msra.mxu0 0.0
    %1241 = vmatprep.subr.mxu0 0.0
    %1242 = vmatpush1.msra.mxu0 0.0
    %1243 = vmatprep.subr.mxu0 0.0
    %1244 = vmatpush1.msra.mxu0 0.0
    %1245 = vmatprep.subr.mxu0 0.0
    %1246 = vmatpush1.msra.mxu0 0.0
    %1247 = vmatprep.subr.mxu0 0.0
    %1248 = vmatpush1.msra.mxu0 0.0
    %1249 = vmatprep.subr.mxu0 0.0
    %1250 = vmatpush1.msra.mxu0 0.0
    %1251 = vmatprep.subr.mxu0 0.0
    %1252 = vmatpush1.msra.mxu0 0.0
    %1253 = vmatprep.subr.mxu0 0.0
    %1254 = vmatpush1.msra.mxu0 0.0
    %1255 = vmatprep.subr.mxu0 0.0
    %1256 = vmatpush1.msra.mxu0 0.0
    %1257 = vmatprep.subr.mxu0 0.0
    %1258 = vmatpush1.msra.mxu0 0.0
    %1259 = vmatprep.subr.mxu0 0.0
    %1260 = vmatpush1.msra.mxu0 0.0
    %1261 = vmatprep.subr.mxu0 0.0
    %1262 = vmatpush1.msra.mxu0 0.0
    %1263 = vmatprep.subr.mxu0 0.0
    %1264 = vmatpush1.msra.mxu0 0.0
    %1265 = vmatprep.subr.mxu0 0.0
    %1266 = vmatpush1.msra.mxu0 0.0
    %1267 = vmatprep.subr.mxu0 0.0
    %1268 = vmatpush1.msra.mxu0 0.0
    %1269 = vmatprep.subr.mxu0 0.0
    %1270 = vmatpush1.msra.mxu0 0.0
    %1271 = vmatprep.subr.mxu0 0.0
    %1272 = vmatpush1.msra.mxu0 0.0
    %1273 = vmatprep.subr.mxu0 0.0
    %1274 = vmatpush1.msra.mxu0 0.0
    %1275 = vmatprep.subr.mxu0 0.0
    %1276 = vmatpush1.msra.mxu0 0.0
    %1277 = vmatprep.subr.mxu0 0.0
    %1278 = vmatpush1.msra.mxu0 0.0
    %1279 = vmatprep.subr.mxu0 0.0
    %1280 = vmatpush1.msra.mxu0 0.0
    %1281 = vmatprep.subr.mxu0 0.0
    %1282 = vmatpush1.msra.mxu0 0.0
    %1283 = vmatprep.subr.mxu0 0.0
    %1284 = vmatpush1.msra.mxu0 0.0
    %1285 = vmatprep.subr.mxu0 0.0
    %1286 = vmatpush1.msra.mxu0 0.0
    %1287 = vmatprep.mubr.f32.mxu0 0.0
    %1288 = vmatmul.mubr.f32.gmra.mrb[0].mxu0 %v1212
    %v1289 = vpop.f32.mrb[0].mxu0
    %v1290 = vadd.f32 %v1209, %v1289
    %v1291 = vpop.f32.mrb[0].mxu0
    %1292 = vmatprep.mubr.f32.mxu0 0.0
    %1293 = vmatmul.mubr.f32.gmra.mrb[0].mxu0 %v1215
    %v1294 = vpop.f32.mrb[0].mxu0
    %v1295 = vadd.f32 %v1209, %v1294
    %v1296 = vpop.f32.mrb[0].mxu0
    %1297 = vmatprep.mubr.f32.mxu0 0.0
    %1298 = vmatmul.mubr.f32.gmra.mrb[0].mxu0 %v1218
    %v1299 = vpop.f32.mrb[0].mxu0
    %v1300 = vadd.f32 %v1209, %v1299
    %v1301 = vpop.f32.mrb[0].mxu0
    %1302 = vmatprep.mubr.f32.mxu0 0.0
    %1303 = vmatmul.mubr.f32.gmra.mrb[0].mxu0 %v1221
    %v1304 = vpop.f32.mrb[0].mxu0
    %v1305 = vadd.f32 %v1209, %v1304
    %v1306 = vpop.f32.mrb[0].mxu0
    %1307 = vdwg.mxu0
    %1308 = vst.msk [vmem:[#allocation2] sm:$0xff] %vm296, %v1290
    %1309 = vst.msk [vmem:[#allocation2 + $0x8] sm:$0xff] %vm296, %v1295
    %1310 = vst.msk [vmem:[#allocation2 + $0x10] sm:$0xff] %vm296, %v1300
    %1311 = vst.msk [vmem:[#allocation2 + $0x18] sm:$0xff] %vm296, %v1305
    %1312 = vst.msk [vmem:[#allocation3] sm:$0xf] %vm301, 0.0
    %v1313 = vld [vmem:[#allocation2] sm:$0xf]
    %v1314 = vld [vmem:[#allocation3] sm:$0xf]
    %v1316 = vlaneseq
    %v1317 = vshrl.u32 %v1316, 7
    %v1318 = vsub.s32 0, %v1317
    %v1319 = vrot.slane %v1204, %v1318
    %v1322 = vsel %vm198, %v1314, 0
    %1324 = vmatprep.subr.mxu0 0.0
    %1325 = vmatpush1.msra.mxu0 %v1199
    %1326 = vmatprep.subr.mxu0 0.0
    %1327 = vmatpush1.msra.mxu0 %v1200
    %1328 = vmatprep.subr.mxu0 0.0
    %1329 = vmatpush1.msra.mxu0 %v1201
    %1330 = vmatprep.subr.mxu0 0.0
    %1331 = vmatpush1.msra.mxu0 %v1202
    %1332 = vmatprep.subr.mxu0 0.0
    %1333 = vmatpush1.msra.mxu0 0.0
    %1334 = vmatprep.subr.mxu0 0.0
    %1335 = vmatpush1.msra.mxu0 0.0
    %1336 = vmatprep.subr.mxu0 0.0
    %1337 = vmatpush1.msra.mxu0 0.0
    %1338 = vmatprep.subr.mxu0 0.0
    %1339 = vmatpush1.msra.mxu0 0.0
    %1340 = vmatprep.subr.mxu0 0.0
    %1341 = vmatpush1.msra.mxu0 0.0
    %1342 = vmatprep.subr.mxu0 0.0
    %1343 = vmatpush1.msra.mxu0 0.0
    %1344 = vmatprep.subr.mxu0 0.0
    %1345 = vmatpush1.msra.mxu0 0.0
    %1346 = vmatprep.subr.mxu0 0.0
    %1347 = vmatpush1.msra.mxu0 0.0
    %1348 = vmatprep.subr.mxu0 0.0
    %1349 = vmatpush1.msra.mxu0 0.0
    %1350 = vmatprep.subr.mxu0 0.0
    %1351 = vmatpush1.msra.mxu0 0.0
    %1352 = vmatprep.subr.mxu0 0.0
    %1353 = vmatpush1.msra.mxu0 0.0
    %1354 = vmatprep.subr.mxu0 0.0
    %1355 = vmatpush1.msra.mxu0 0.0
    %1356 = vmatprep.subr.mxu0 0.0
    %1357 = vmatpush1.msra.mxu0 0.0
    %1358 = vmatprep.subr.mxu0 0.0
    %1359 = vmatpush1.msra.mxu0 0.0
    %1360 = vmatprep.subr.mxu0 0.0
    %1361 = vmatpush1.msra.mxu0 0.0
    %1362 = vmatprep.subr.mxu0 0.0
    %1363 = vmatpush1.msra.mxu0 0.0
    %1364 = vmatprep.subr.mxu0 0.0
    %1365 = vmatpush1.msra.mxu0 0.0
    %1366 = vmatprep.subr.mxu0 0.0
    %1367 = vmatpush1.msra.mxu0 0.0
    %1368 = vmatprep.subr.mxu0 0.0
    %1369 = vmatpush1.msra.mxu0 0.0
    %1370 = vmatprep.subr.mxu0 0.0
    %1371 = vmatpush1.msra.mxu0 0.0
    %1372 = vmatprep.subr.mxu0 0.0
    %1373 = vmatpush1.msra.mxu0 0.0
    %1374 = vmatprep.subr.mxu0 0.0
    %1375 = vmatpush1.msra.mxu0 0.0
    %1376 = vmatprep.subr.mxu0 0.0
    %1377 = vmatpush1.msra.mxu0 0.0
    %1378 = vmatprep.subr.mxu0 0.0
    %1379 = vmatpush1.msra.mxu0 0.0
    %1380 = vmatprep.subr.mxu0 0.0
    %1381 = vmatpush1.msra.mxu0 0.0
    %1382 = vmatprep.subr.mxu0 0.0
    %1383 = vmatpush1.msra.mxu0 0.0
    %1384 = vmatprep.subr.mxu0 0.0
    %1385 = vmatpush1.msra.mxu0 0.0
    %1386 = vmatprep.subr.mxu0 0.0
    %1387 = vmatpush1.msra.mxu0 0.0
    %1388 = vmatprep.mubr.f32.mxu0 0.0
    %1389 = vmatmul.mubr.f32.gmra.mrb[0].mxu0 %v1322
    %v1390 = vpop.f32.mrb[0].mxu0
    %v1391 = vadd.f32 %v1319, %v1390
    %v1392 = vpop.f32.mrb[0].mxu0
    %1393 = vdwg.mxu0
    %v1394 = vadd.f32 %v1313, %v1391
    %v1395 = vxor.u32 %v1394, 2147483648
    %v1396 = vmul.f32 %v1395, 1.442695
    %v1397 = vpow.pop %v1396
    %v1398 = vadd.f32 %v1397, 1.0
    %v1399 = vrcp.pop %v1398
    %v1400 = vmul.f32 1.0, %v1399
    %1402 = vrot.lane.b32.xlu0 %v1391, 64
    %v1403 = vpop.permute.xlu0 %1402
    %v1405 = vmul.f32 %v1400, %v1403
    %1407 = vrot.lane.b32.xlu0 %v1405, 64
    %v1408 = vpop.permute.xlu0 %1407
    %v1410 = vadd.f32 %v1313, %v1408
    %v1411 = vtanh.pop %v1410
    %v1412 = vsub.f32 1.0, %v1400
    %1414 = vrot.lane.b32.xlu0 %v1411, 96
    %v1415 = vpop.permute.xlu0 %1414
    %v1417 = vmul.f32 %v1412, %v1415
    %1418 = vrot.lane.b32.xlu0 %v1314, 32
    %v1419 = vpop.permute.xlu0 %1418
    %v1421 = vmul.f32 %v1400, %v1419
    %v1422 = vadd.f32 %v1417, %v1421
    %1424 = vrot.lane.b32.xlu0 %v1422, 96
    %v1425 = vpop.permute.xlu0 %1424
    %1427 = vst.msk [vmem:[#allocation3] sm:$0xf] %vm301, %v1425
    %1428 = vst.msk [vmem:[#allocation7] sm:$0xf] %vm301, %v1425
    %v1429 = vld [vmem:[#allocation2 + $0x4] sm:$0xf]
    %v1430 = vld [vmem:[#allocation3] sm:$0xf]
    %v1432 = vsel %vm198, %v1430, 0
    %1434 = vmatprep.subr.mxu0 0.0
    %1435 = vmatpush1.msra.mxu0 %v1199
    %1436 = vmatprep.subr.mxu0 0.0
    %1437 = vmatpush1.msra.mxu0 %v1200
    %1438 = vmatprep.subr.mxu0 0.0
    %1439 = vmatpush1.msra.mxu0 %v1201
    %1440 = vmatprep.subr.mxu0 0.0
    %1441 = vmatpush1.msra.mxu0 %v1202
    %1442 = vmatprep.subr.mxu0 0.0
    %1443 = vmatpush1.msra.mxu0 0.0
    %1444 = vmatprep.subr.mxu0 0.0
    %1445 = vmatpush1.msra.mxu0 0.0
    %1446 = vmatprep.subr.mxu0 0.0
    %1447 = vmatpush1.msra.mxu0 0.0
    %1448 = vmatprep.subr.mxu0 0.0
    %1449 = vmatpush1.msra.mxu0 0.0
    %1450 = vmatprep.subr.mxu0 0.0
    %1451 = vmatpush1.msra.mxu0 0.0
    %1452 = vmatprep.subr.mxu0 0.0
    %1453 = vmatpush1.msra.mxu0 0.0
    %1454 = vmatprep.subr.mxu0 0.0
    %1455 = vmatpush1.msra.mxu0 0.0
    %1456 = vmatprep.subr.mxu0 0.0
    %1457 = vmatpush1.msra.mxu0 0.0
    %1458 = vmatprep.subr.mxu0 0.0
    %1459 = vmatpush1.msra.mxu0 0.0
    %1460 = vmatprep.subr.mxu0 0.0
    %1461 = vmatpush1.msra.mxu0 0.0
    %1462 = vmatprep.subr.mxu0 0.0
    %1463 = vmatpush1.msra.mxu0 0.0
    %1464 = vmatprep.subr.mxu0 0.0
    %1465 = vmatpush1.msra.mxu0 0.0
    %1466 = vmatprep.subr.mxu0 0.0
    %1467 = vmatpush1.msra.mxu0 0.0
    %1468 = vmatprep.subr.mxu0 0.0
    %1469 = vmatpush1.msra.mxu0 0.0
    %1470 = vmatprep.subr.mxu0 0.0
    %1471 = vmatpush1.msra.mxu0 0.0
    %1472 = vmatprep.subr.mxu0 0.0
    %1473 = vmatpush1.msra.mxu0 0.0
    %1474 = vmatprep.subr.mxu0 0.0
    %1475 = vmatpush1.msra.mxu0 0.0
    %1476 = vmatprep.subr.mxu0 0.0
    %1477 = vmatpush1.msra.mxu0 0.0
    %1478 = vmatprep.subr.mxu0 0.0
    %1479 = vmatpush1.msra.mxu0 0.0
    %1480 = vmatprep.subr.mxu0 0.0
    %1481 = vmatpush1.msra.mxu0 0.0
    %1482 = vmatprep.subr.mxu0 0.0
    %1483 = vmatpush1.msra.mxu0 0.0
    %1484 = vmatprep.subr.mxu0 0.0
    %1485 = vmatpush1.msra.mxu0 0.0
    %1486 = vmatprep.subr.mxu0 0.0
    %1487 = vmatpush1.msra.mxu0 0.0
    %1488 = vmatprep.subr.mxu0 0.0
    %1489 = vmatpush1.msra.mxu0 0.0
    %1490 = vmatprep.subr.mxu0 0.0
    %1491 = vmatpush1.msra.mxu0 0.0
    %1492 = vmatprep.subr.mxu0 0.0
    %1493 = vmatpush1.msra.mxu0 0.0
    %1494 = vmatprep.subr.mxu0 0.0
    %1495 = vmatpush1.msra.mxu0 0.0
    %1496 = vmatprep.subr.mxu0 0.0
    %1497 = vmatpush1.msra.mxu0 0.0
    %1498 = vmatprep.mubr.f32.mxu0 0.0
    %1499 = vmatmul.mubr.f32.gmra.mrb[0].mxu0 %v1432
    %v1500 = vpop.f32.mrb[0].mxu0
    %v1501 = vadd.f32 %v1319, %v1500
    %v1502 = vpop.f32.mrb[0].mxu0
    %1503 = vdwg.mxu0
    %v1504 = vadd.f32 %v1429, %v1501
    %v1505 = vxor.u32 %v1504, 2147483648
    %v1506 = vmul.f32 %v1505, 1.442695
    %v1507 = vpow.pop %v1506
    %v1508 = vadd.f32 %v1507, 1.0
    %v1509 = vrcp.pop %v1508
    %v1510 = vmul.f32 1.0, %v1509
    %1512 = vrot.lane.b32.xlu0 %v1501, 64
    %v1513 = vpop.permute.xlu0 %1512
    %v1515 = vmul.f32 %v1510, %v1513
    %1517 = vrot.lane.b32.xlu0 %v1515, 64
    %v1518 = vpop.permute.xlu0 %1517
    %v1520 = vadd.f32 %v1429, %v1518
    %v1521 = vtanh.pop %v1520
    %v1522 = vsub.f32 1.0, %v1510
    %1524 = vrot.lane.b32.xlu0 %v1521, 96
    %v1525 = vpop.permute.xlu0 %1524
    %v1527 = vmul.f32 %v1522, %v1525
    %1528 = vrot.lane.b32.xlu0 %v1430, 32
    %v1529 = vpop.permute.xlu0 %1528
    %v1531 = vmul.f32 %v1510, %v1529
    %v1532 = vadd.f32 %v1527, %v1531
    %1534 = vrot.lane.b32.xlu0 %v1532, 96
    %v1535 = vpop.permute.xlu0 %1534
    %1537 = vst.msk [vmem:[#allocation3] sm:$0xf] %vm301, %v1535
    %1538 = vst.msk [vmem:[#allocation7 + $0x4] sm:$0xf] %vm301, %v1535
    %v1539 = vld [vmem:[#allocation2 + $0x8] sm:$0xf]
    %v1540 = vld [vmem:[#allocation3] sm:$0xf]
    %v1542 = vsel %vm198, %v1540, 0
    %1544 = vmatprep.subr.mxu0 0.0
    %1545 = vmatpush1.msra.mxu0 %v1199
    %1546 = vmatprep.subr.mxu0 0.0
    %1547 = vmatpush1.msra.mxu0 %v1200
    %1548 = vmatprep.subr.mxu0 0.0
    %1549 = vmatpush1.msra.mxu0 %v1201
    %1550 = vmatprep.subr.mxu0 0.0
    %1551 = vmatpush1.msra.mxu0 %v1202
    %1552 = vmatprep.subr.mxu0 0.0
    %1553 = vmatpush1.msra.mxu0 0.0
    %1554 = vmatprep.subr.mxu0 0.0
    %1555 = vmatpush1.msra.mxu0 0.0
    %1556 = vmatprep.subr.mxu0 0.0
    %1557 = vmatpush1.msra.mxu0 0.0
    %1558 = vmatprep.subr.mxu0 0.0
    %1559 = vmatpush1.msra.mxu0 0.0
    %1560 = vmatprep.subr.mxu0 0.0
    %1561 = vmatpush1.msra.mxu0 0.0
    %1562 = vmatprep.subr.mxu0 0.0
    %1563 = vmatpush1.msra.mxu0 0.0
    %1564 = vmatprep.subr.mxu0 0.0
    %1565 = vmatpush1.msra.mxu0 0.0
    %1566 = vmatprep.subr.mxu0 0.0
    %1567 = vmatpush1.msra.mxu0 0.0
    %1568 = vmatprep.subr.mxu0 0.0
    %1569 = vmatpush1.msra.mxu0 0.0
    %1570 = vmatprep.subr.mxu0 0.0
    %1571 = vmatpush1.msra.mxu0 0.0
    %1572 = vmatprep.subr.mxu0 0.0
    %1573 = vmatpush1.msra.mxu0 0.0
    %1574 = vmatprep.subr.mxu0 0.0
    %1575 = vmatpush1.msra.mxu0 0.0
    %1576 = vmatprep.subr.mxu0 0.0
    %1577 = vmatpush1.msra.mxu0 0.0
    %1578 = vmatprep.subr.mxu0 0.0
    %1579 = vmatpush1.msra.mxu0 0.0
    %1580 = vmatprep.subr.mxu0 0.0
    %1581 = vmatpush1.msra.mxu0 0.0
    %1582 = vmatprep.subr.mxu0 0.0
    %1583 = vmatpush1.msra.mxu0 0.0
    %1584 = vmatprep.subr.mxu0 0.0
    %1585 = vmatpush1.msra.mxu0 0.0
    %1586 = vmatprep.subr.mxu0 0.0
    %1587 = vmatpush1.msra.mxu0 0.0
    %1588 = vmatprep.subr.mxu0 0.0
    %1589 = vmatpush1.msra.mxu0 0.0
    %1590 = vmatprep.subr.mxu0 0.0
    %1591 = vmatpush1.msra.mxu0 0.0
    %1592 = vmatprep.subr.mxu0 0.0
    %1593 = vmatpush1.msra.mxu0 0.0
    %1594 = vmatprep.subr.mxu0 0.0
    %1595 = vmatpush1.msra.mxu0 0.0
    %1596 = vmatprep.subr.mxu0 0.0
    %1597 = vmatpush1.msra.mxu0 0.0
    %1598 = vmatprep.subr.mxu0 0.0
    %1599 = vmatpush1.msra.mxu0 0.0
    %1600 = vmatprep.subr.mxu0 0.0
    %1601 = vmatpush1.msra.mxu0 0.0
    %1602 = vmatprep.subr.mxu0 0.0
    %1603 = vmatpush1.msra.mxu0 0.0
    %1604 = vmatprep.subr.mxu0 0.0
    %1605 = vmatpush1.msra.mxu0 0.0
    %1606 = vmatprep.subr.mxu0 0.0
    %1607 = vmatpush1.msra.mxu0 0.0
    %1608 = vmatprep.mubr.f32.mxu0 0.0
    %1609 = vmatmul.mubr.f32.gmra.mrb[0].mxu0 %v1542
    %v1610 = vpop.f32.mrb[0].mxu0
    %v1611 = vadd.f32 %v1319, %v1610
    %v1612 = vpop.f32.mrb[0].mxu0
    %1613 = vdwg.mxu0
    %v1614 = vadd.f32 %v1539, %v1611
    %v1615 = vxor.u32 %v1614, 2147483648
    %v1616 = vmul.f32 %v1615, 1.442695
    %v1617 = vpow.pop %v1616
    %v1618 = vadd.f32 %v1617, 1.0
    %v1619 = vrcp.pop %v1618
    %v1620 = vmul.f32 1.0, %v1619
    %1622 = vrot.lane.b32.xlu0 %v1611, 64
    %v1623 = vpop.permute.xlu0 %1622
    %v1625 = vmul.f32 %v1620, %v1623
    %1627 = vrot.lane.b32.xlu0 %v1625, 64
    %v1628 = vpop.permute.xlu0 %1627
    %v1630 = vadd.f32 %v1539, %v1628
    %v1631 = vtanh.pop %v1630
    %v1632 = vsub.f32 1.0, %v1620
    %1634 = vrot.lane.b32.xlu0 %v1631, 96
    %v1635 = vpop.permute.xlu0 %1634
    %v1637 = vmul.f32 %v1632, %v1635
    %1638 = vrot.lane.b32.xlu0 %v1540, 32
    %v1639 = vpop.permute.xlu0 %1638
    %v1641 = vmul.f32 %v1620, %v1639
    %v1642 = vadd.f32 %v1637, %v1641
    %1644 = vrot.lane.b32.xlu0 %v1642, 96
    %v1645 = vpop.permute.xlu0 %1644
    %1647 = vst.msk [vmem:[#allocation3] sm:$0xf] %vm301, %v1645
    %1648 = vst.msk [vmem:[#allocation7 + $0x8] sm:$0xf] %vm301, %v1645
    %v1649 = vld [vmem:[#allocation2 + $0xc] sm:$0xf]
    %v1650 = vld [vmem:[#allocation3] sm:$0xf]
    %v1652 = vsel %vm198, %v1650, 0
    %1654 = vmatprep.subr.mxu0 0.0
    %1655 = vmatpush1.msra.mxu0 %v1199
    %1656 = vmatprep.subr.mxu0 0.0
    %1657 = vmatpush1.msra.mxu0 %v1200
    %1658 = vmatprep.subr.mxu0 0.0
    %1659 = vmatpush1.msra.mxu0 %v1201
    %1660 = vmatprep.subr.mxu0 0.0
    %1661 = vmatpush1.msra.mxu0 %v1202
    %1662 = vmatprep.subr.mxu0 0.0
    %1663 = vmatpush1.msra.mxu0 0.0
    %1664 = vmatprep.subr.mxu0 0.0
    %1665 = vmatpush1.msra.mxu0 0.0
    %1666 = vmatprep.subr.mxu0 0.0
    %1667 = vmatpush1.msra.mxu0 0.0
    %1668 = vmatprep.subr.mxu0 0.0
    %1669 = vmatpush1.msra.mxu0 0.0
    %1670 = vmatprep.subr.mxu0 0.0
    %1671 = vmatpush1.msra.mxu0 0.0
    %1672 = vmatprep.subr.mxu0 0.0
    %1673 = vmatpush1.msra.mxu0 0.0
    %1674 = vmatprep.subr.mxu0 0.0
    %1675 = vmatpush1.msra.mxu0 0.0
    %1676 = vmatprep.subr.mxu0 0.0
    %1677 = vmatpush1.msra.mxu0 0.0
    %1678 = vmatprep.subr.mxu0 0.0
    %1679 = vmatpush1.msra.mxu0 0.0
    %1680 = vmatprep.subr.mxu0 0.0
    %1681 = vmatpush1.msra.mxu0 0.0
    %1682 = vmatprep.subr.mxu0 0.0
    %1683 = vmatpush1.msra.mxu0 0.0
    %1684 = vmatprep.subr.mxu0 0.0
    %1685 = vmatpush1.msra.mxu0 0.0
    %1686 = vmatprep.subr.mxu0 0.0
    %1687 = vmatpush1.msra.mxu0 0.0
    %1688 = vmatprep.subr.mxu0 0.0
    %1689 = vmatpush1.msra.mxu0 0.0
    %1690 = vmatprep.subr.mxu0 0.0
    %1691 = vmatpush1.msra.mxu0 0.0
    %1692 = vmatprep.subr.mxu0 0.0
    %1693 = vmatpush1.msra.mxu0 0.0
    %1694 = vmatprep.subr.mxu0 0.0
    %1695 = vmatpush1.msra.mxu0 0.0
    %1696 = vmatprep.subr.mxu0 0.0
    %1697 = vmatpush1.msra.mxu0 0.0
    %1698 = vmatprep.subr.mxu0 0.0
    %1699 = vmatpush1.msra.mxu0 0.0
    %1700 = vmatprep.subr.mxu0 0.0
    %1701 = vmatpush1.msra.mxu0 0.0
    %1702 = vmatprep.subr.mxu0 0.0
    %1703 = vmatpush1.msra.mxu0 0.0
    %1704 = vmatprep.subr.mxu0 0.0
    %1705 = vmatpush1.msra.mxu0 0.0
    %1706 = vmatprep.subr.mxu0 0.0
    %1707 = vmatpush1.msra.mxu0 0.0
    %1708 = vmatprep.subr.mxu0 0.0
    %1709 = vmatpush1.msra.mxu0 0.0
    %1710 = vmatprep.subr.mxu0 0.0
    %1711 = vmatpush1.msra.mxu0 0.0
    %1712 = vmatprep.subr.mxu0 0.0
    %1713 = vmatpush1.msra.mxu0 0.0
    %1714 = vmatprep.subr.mxu0 0.0
    %1715 = vmatpush1.msra.mxu0 0.0
    %1716 = vmatprep.subr.mxu0 0.0
    %1717 = vmatpush1.msra.mxu0 0.0
    %1718 = vmatprep.mubr.f32.mxu0 0.0
    %1719 = vmatmul.mubr.f32.gmra.mrb[0].mxu0 %v1652
    %v1720 = vpop.f32.mrb[0].mxu0
    %v1721 = vadd.f32 %v1319, %v1720
    %v1722 = vpop.f32.mrb[0].mxu0
    %1723 = vdwg.mxu0
    %v1724 = vadd.f32 %v1649, %v1721
    %v1725 = vxor.u32 %v1724, 2147483648
    %v1726 = vmul.f32 %v1725, 1.442695
    %v1727 = vpow.pop %v1726
    %v1728 = vadd.f32 %v1727, 1.0
    %v1729 = vrcp.pop %v1728
    %v1730 = vmul.f32 1.0, %v1729
    %1732 = vrot.lane.b32.xlu0 %v1721, 64
    %v1733 = vpop.permute.xlu0 %1732
    %v1735 = vmul.f32 %v1730, %v1733
    %1737 = vrot.lane.b32.xlu0 %v1735, 64
    %v1738 = vpop.permute.xlu0 %1737
    %v1740 = vadd.f32 %v1649, %v1738
    %v1741 = vtanh.pop %v1740
    %v1742 = vsub.f32 1.0, %v1730
    %1744 = vrot.lane.b32.xlu0 %v1741, 96
    %v1745 = vpop.permute.xlu0 %1744
    %v1747 = vmul.f32 %v1742, %v1745
    %1748 = vrot.lane.b32.xlu0 %v1650, 32
    %v1749 = vpop.permute.xlu0 %1748
    %v1751 = vmul.f32 %v1730, %v1749
    %v1752 = vadd.f32 %v1747, %v1751
    %1754 = vrot.lane.b32.xlu0 %v1752, 96
    %v1755 = vpop.permute.xlu0 %1754
    %1757 = vst.msk [vmem:[#allocation3] sm:$0xf] %vm301, %v1755
    %1758 = vst.msk [vmem:[#allocation7 + $0xc] sm:$0xf] %vm301, %v1755
    %v1759 = vld [vmem:[#allocation2 + $0x10] sm:$0xf]
    %v1760 = vld [vmem:[#allocation3] sm:$0xf]
    %v1762 = vsel %vm198, %v1760, 0
    %1764 = vmatprep.subr.mxu0 0.0
    %1765 = vmatpush1.msra.mxu0 %v1199
    %1766 = vmatprep.subr.mxu0 0.0
    %1767 = vmatpush1.msra.mxu0 %v1200
    %1768 = vmatprep.subr.mxu0 0.0
    %1769 = vmatpush1.msra.mxu0 %v1201
    %1770 = vmatprep.subr.mxu0 0.0
    %1771 = vmatpush1.msra.mxu0 %v1202
    %1772 = vmatprep.subr.mxu0 0.0
    %1773 = vmatpush1.msra.mxu0 0.0
    %1774 = vmatprep.subr.mxu0 0.0
    %1775 = vmatpush1.msra.mxu0 0.0
    %1776 = vmatprep.subr.mxu0 0.0
    %1777 = vmatpush1.msra.mxu0 0.0
    %1778 = vmatprep.subr.mxu0 0.0
    %1779 = vmatpush1.msra.mxu0 0.0
    %1780 = vmatprep.subr.mxu0 0.0
    %1781 = vmatpush1.msra.mxu0 0.0
    %1782 = vmatprep.subr.mxu0 0.0
    %1783 = vmatpush1.msra.mxu0 0.0
    %1784 = vmatprep.subr.mxu0 0.0
    %1785 = vmatpush1.msra.mxu0 0.0
    %1786 = vmatprep.subr.mxu0 0.0
    %1787 = vmatpush1.msra.mxu0 0.0
    %1788 = vmatprep.subr.mxu0 0.0
    %1789 = vmatpush1.msra.mxu0 0.0
    %1790 = vmatprep.subr.mxu0 0.0
    %1791 = vmatpush1.msra.mxu0 0.0
    %1792 = vmatprep.subr.mxu0 0.0
    %1793 = vmatpush1.msra.mxu0 0.0
    %1794 = vmatprep.subr.mxu0 0.0
    %1795 = vmatpush1.msra.mxu0 0.0
    %1796 = vmatprep.subr.mxu0 0.0
    %1797 = vmatpush1.msra.mxu0 0.0
    %1798 = vmatprep.subr.mxu0 0.0
    %1799 = vmatpush1.msra.mxu0 0.0
    %1800 = vmatprep.subr.mxu0 0.0
    %1801 = vmatpush1.msra.mxu0 0.0
    %1802 = vmatprep.subr.mxu0 0.0
    %1803 = vmatpush1.msra.mxu0 0.0
    %1804 = vmatprep.subr.mxu0 0.0
    %1805 = vmatpush1.msra.mxu0 0.0
    %1806 = vmatprep.subr.mxu0 0.0
    %1807 = vmatpush1.msra.mxu0 0.0
    %1808 = vmatprep.subr.mxu0 0.0
    %1809 = vmatpush1.msra.mxu0 0.0
    %1810 = vmatprep.subr.mxu0 0.0
    %1811 = vmatpush1.msra.mxu0 0.0
    %1812 = vmatprep.subr.mxu0 0.0
    %1813 = vmatpush1.msra.mxu0 0.0
    %1814 = vmatprep.subr.mxu0 0.0
    %1815 = vmatpush1.msra.mxu0 0.0
    %1816 = vmatprep.subr.mxu0 0.0
    %1817 = vmatpush1.msra.mxu0 0.0
    %1818 = vmatprep.subr.mxu0 0.0
    %1819 = vmatpush1.msra.mxu0 0.0
    %1820 = vmatprep.subr.mxu0 0.0
    %1821 = vmatpush1.msra.mxu0 0.0
    %1822 = vmatprep.subr.mxu0 0.0
    %1823 = vmatpush1.msra.mxu0 0.0
    %1824 = vmatprep.subr.mxu0 0.0
    %1825 = vmatpush1.msra.mxu0 0.0
    %1826 = vmatprep.subr.mxu0 0.0
    %1827 = vmatpush1.msra.mxu0 0.0
    %1828 = vmatprep.mubr.f32.mxu0 0.0
    %1829 = vmatmul.mubr.f32.gmra.mrb[0].mxu0 %v1762
    %v1830 = vpop.f32.mrb[0].mxu0
    %v1831 = vadd.f32 %v1319, %v1830
    %v1832 = vpop.f32.mrb[0].mxu0
    %1833 = vdwg.mxu0
    %v1834 = vadd.f32 %v1759, %v1831
    %v1835 = vxor.u32 %v1834, 2147483648
    %v1836 = vmul.f32 %v1835, 1.442695
    %v1837 = vpow.pop %v1836
    %v1838 = vadd.f32 %v1837, 1.0
    %v1839 = vrcp.pop %v1838
    %v1840 = vmul.f32 1.0, %v1839
    %1842 = vrot.lane.b32.xlu0 %v1831, 64
    %v1843 = vpop.permute.xlu0 %1842
    %v1845 = vmul.f32 %v1840, %v1843
    %1847 = vrot.lane.b32.xlu0 %v1845, 64
    %v1848 = vpop.permute.xlu0 %1847
    %v1850 = vadd.f32 %v1759, %v1848
    %v1851 = vtanh.pop %v1850
    %v1852 = vsub.f32 1.0, %v1840
    %1854 = vrot.lane.b32.xlu0 %v1851, 96
    %v1855 = vpop.permute.xlu0 %1854
    %v1857 = vmul.f32 %v1852, %v1855
    %1858 = vrot.lane.b32.xlu0 %v1760, 32
    %v1859 = vpop.permute.xlu0 %1858
    %v1861 = vmul.f32 %v1840, %v1859
    %v1862 = vadd.f32 %v1857, %v1861
    %1864 = vrot.lane.b32.xlu0 %v1862, 96
    %v1865 = vpop.permute.xlu0 %1864
    %1867 = vst.msk [vmem:[#allocation3] sm:$0xf] %vm301, %v1865
    %1868 = vst.msk [vmem:[#allocation7 + $0x10] sm:$0xf] %vm301, %v1865
    %v1869 = vld [vmem:[#allocation2 + $0x14] sm:$0xf]
    %v1870 = vld [vmem:[#allocation3] sm:$0xf]
    %v1872 = vsel %vm198, %v1870, 0
    %1874 = vmatprep.subr.mxu0 0.0
    %1875 = vmatpush1.msra.mxu0 %v1199
    %1876 = vmatprep.subr.mxu0 0.0
    %1877 = vmatpush1.msra.mxu0 %v1200
    %1878 = vmatprep.subr.mxu0 0.0
    %1879 = vmatpush1.msra.mxu0 %v1201
    %1880 = vmatprep.subr.mxu0 0.0
    %1881 = vmatpush1.msra.mxu0 %v1202
    %1882 = vmatprep.subr.mxu0 0.0
    %1883 = vmatpush1.msra.mxu0 0.0
    %1884 = vmatprep.subr.mxu0 0.0
    %1885 = vmatpush1.msra.mxu0 0.0
    %1886 = vmatprep.subr.mxu0 0.0
    %1887 = vmatpush1.msra.mxu0 0.0
    %1888 = vmatprep.subr.mxu0 0.0
    %1889 = vmatpush1.msra.mxu0 0.0
    %1890 = vmatprep.subr.mxu0 0.0
    %1891 = vmatpush1.msra.mxu0 0.0
    %1892 = vmatprep.subr.mxu0 0.0
    %1893 = vmatpush1.msra.mxu0 0.0
    %1894 = vmatprep.subr.mxu0 0.0
    %1895 = vmatpush1.msra.mxu0 0.0
    %1896 = vmatprep.subr.mxu0 0.0
    %1897 = vmatpush1.msra.mxu0 0.0
    %1898 = vmatprep.subr.mxu0 0.0
    %1899 = vmatpush1.msra.mxu0 0.0
    %1900 = vmatprep.subr.mxu0 0.0
    %1901 = vmatpush1.msra.mxu0 0.0
    %1902 = vmatprep.subr.mxu0 0.0
    %1903 = vmatpush1.msra.mxu0 0.0
    %1904 = vmatprep.subr.mxu0 0.0
    %1905 = vmatpush1.msra.mxu0 0.0
    %1906 = vmatprep.subr.mxu0 0.0
    %1907 = vmatpush1.msra.mxu0 0.0
    %1908 = vmatprep.subr.mxu0 0.0
    %1909 = vmatpush1.msra.mxu0 0.0
    %1910 = vmatprep.subr.mxu0 0.0
    %1911 = vmatpush1.msra.mxu0 0.0
    %1912 = vmatprep.subr.mxu0 0.0
    %1913 = vmatpush1.msra.mxu0 0.0
    %1914 = vmatprep.subr.mxu0 0.0
    %1915 = vmatpush1.msra.mxu0 0.0
    %1916 = vmatprep.subr.mxu0 0.0
    %1917 = vmatpush1.msra.mxu0 0.0
    %1918 = vmatprep.subr.mxu0 0.0
    %1919 = vmatpush1.msra.mxu0 0.0
    %1920 = vmatprep.subr.mxu0 0.0
    %1921 = vmatpush1.msra.mxu0 0.0
    %1922 = vmatprep.subr.mxu0 0.0
    %1923 = vmatpush1.msra.mxu0 0.0
    %1924 = vmatprep.subr.mxu0 0.0
    %1925 = vmatpush1.msra.mxu0 0.0
    %1926 = vmatprep.subr.mxu0 0.0
    %1927 = vmatpush1.msra.mxu0 0.0
    %1928 = vmatprep.subr.mxu0 0.0
    %1929 = vmatpush1.msra.mxu0 0.0
    %1930 = vmatprep.subr.mxu0 0.0
    %1931 = vmatpush1.msra.mxu0 0.0
    %1932 = vmatprep.subr.mxu0 0.0
    %1933 = vmatpush1.msra.mxu0 0.0
    %1934 = vmatprep.subr.mxu0 0.0
    %1935 = vmatpush1.msra.mxu0 0.0
    %1936 = vmatprep.subr.mxu0 0.0
    %1937 = vmatpush1.msra.mxu0 0.0
    %1938 = vmatprep.mubr.f32.mxu0 0.0
    %1939 = vmatmul.mubr.f32.gmra.mrb[0].mxu0 %v1872
    %v1940 = vpop.f32.mrb[0].mxu0
    %v1941 = vadd.f32 %v1319, %v1940
    %v1942 = vpop.f32.mrb[0].mxu0
    %1943 = vdwg.mxu0
    %v1944 = vadd.f32 %v1869, %v1941
    %v1945 = vxor.u32 %v1944, 2147483648
    %v1946 = vmul.f32 %v1945, 1.442695
    %v1947 = vpow.pop %v1946
    %v1948 = vadd.f32 %v1947, 1.0
    %v1949 = vrcp.pop %v1948
    %v1950 = vmul.f32 1.0, %v1949
    %1952 = vrot.lane.b32.xlu0 %v1941, 64
    %v1953 = vpop.permute.xlu0 %1952
    %v1955 = vmul.f32 %v1950, %v1953
    %1957 = vrot.lane.b32.xlu0 %v1955, 64
    %v1958 = vpop.permute.xlu0 %1957
    %v1960 = vadd.f32 %v1869, %v1958
    %v1961 = vtanh.pop %v1960
    %v1962 = vsub.f32 1.0, %v1950
    %1964 = vrot.lane.b32.xlu0 %v1961, 96
    %v1965 = vpop.permute.xlu0 %1964
    %v1967 = vmul.f32 %v1962, %v1965
    %1968 = vrot.lane.b32.xlu0 %v1870, 32
    %v1969 = vpop.permute.xlu0 %1968
    %v1971 = vmul.f32 %v1950, %v1969
    %v1972 = vadd.f32 %v1967, %v1971
    %1974 = vrot.lane.b32.xlu0 %v1972, 96
    %v1975 = vpop.permute.xlu0 %1974
    %1977 = vst.msk [vmem:[#allocation3] sm:$0xf] %vm301, %v1975
    %1978 = vst.msk [vmem:[#allocation7 + $0x14] sm:$0xf] %vm301, %v1975
    %v1979 = vld [vmem:[#allocation2 + $0x18] sm:$0xf]
    %v1980 = vld [vmem:[#allocation3] sm:$0xf]
    %v1982 = vsel %vm198, %v1980, 0
    %1984 = vmatprep.subr.mxu0 0.0
    %1985 = vmatpush1.msra.mxu0 %v1199
    %1986 = vmatprep.subr.mxu0 0.0
    %1987 = vmatpush1.msra.mxu0 %v1200
    %1988 = vmatprep.subr.mxu0 0.0
    %1989 = vmatpush1.msra.mxu0 %v1201
    %1990 = vmatprep.subr.mxu0 0.0
    %1991 = vmatpush1.msra.mxu0 %v1202
    %1992 = vmatprep.subr.mxu0 0.0
    %1993 = vmatpush1.msra.mxu0 0.0
    %1994 = vmatprep.subr.mxu0 0.0
    %1995 = vmatpush1.msra.mxu0 0.0
    %1996 = vmatprep.subr.mxu0 0.0
    %1997 = vmatpush1.msra.mxu0 0.0
    %1998 = vmatprep.subr.mxu0 0.0
    %1999 = vmatpush1.msra.mxu0 0.0
    %2000 = vmatprep.subr.mxu0 0.0
    %2001 = vmatpush1.msra.mxu0 0.0
    %2002 = vmatprep.subr.mxu0 0.0
    %2003 = vmatpush1.msra.mxu0 0.0
    %2004 = vmatprep.subr.mxu0 0.0
    %2005 = vmatpush1.msra.mxu0 0.0
    %2006 = vmatprep.subr.mxu0 0.0
    %2007 = vmatpush1.msra.mxu0 0.0
    %2008 = vmatprep.subr.mxu0 0.0
    %2009 = vmatpush1.msra.mxu0 0.0
    %2010 = vmatprep.subr.mxu0 0.0
    %2011 = vmatpush1.msra.mxu0 0.0
    %2012 = vmatprep.subr.mxu0 0.0
    %2013 = vmatpush1.msra.mxu0 0.0
    %2014 = vmatprep.subr.mxu0 0.0
    %2015 = vmatpush1.msra.mxu0 0.0
    %2016 = vmatprep.subr.mxu0 0.0
    %2017 = vmatpush1.msra.mxu0 0.0
    %2018 = vmatprep.subr.mxu0 0.0
    %2019 = vmatpush1.msra.mxu0 0.0
    %2020 = vmatprep.subr.mxu0 0.0
    %2021 = vmatpush1.msra.mxu0 0.0
    %2022 = vmatprep.subr.mxu0 0.0
    %2023 = vmatpush1.msra.mxu0 0.0
    %2024 = vmatprep.subr.mxu0 0.0
    %2025 = vmatpush1.msra.mxu0 0.0
    %2026 = vmatprep.subr.mxu0 0.0
    %2027 = vmatpush1.msra.mxu0 0.0
    %2028 = vmatprep.subr.mxu0 0.0
    %2029 = vmatpush1.msra.mxu0 0.0
    %2030 = vmatprep.subr.mxu0 0.0
    %2031 = vmatpush1.msra.mxu0 0.0
    %2032 = vmatprep.subr.mxu0 0.0
    %2033 = vmatpush1.msra.mxu0 0.0
    %2034 = vmatprep.subr.mxu0 0.0
    %2035 = vmatpush1.msra.mxu0 0.0
    %2036 = vmatprep.subr.mxu0 0.0
    %2037 = vmatpush1.msra.mxu0 0.0
    %2038 = vmatprep.subr.mxu0 0.0
    %2039 = vmatpush1.msra.mxu0 0.0
    %2040 = vmatprep.subr.mxu0 0.0
    %2041 = vmatpush1.msra.mxu0 0.0
    %2042 = vmatprep.subr.mxu0 0.0
    %2043 = vmatpush1.msra.mxu0 0.0
    %2044 = vmatprep.subr.mxu0 0.0
    %2045 = vmatpush1.msra.mxu0 0.0
    %2046 = vmatprep.subr.mxu0 0.0
    %2047 = vmatpush1.msra.mxu0 0.0
    %2048 = vmatprep.mubr.f32.mxu0 0.0
    %2049 = vmatmul.mubr.f32.gmra.mrb[0].mxu0 %v1982
    %v2050 = vpop.f32.mrb[0].mxu0
    %v2051 = vadd.f32 %v1319, %v2050
    %v2052 = vpop.f32.mrb[0].mxu0
    %2053 = vdwg.mxu0
    %v2054 = vadd.f32 %v1979, %v2051
    %v2055 = vxor.u32 %v2054, 2147483648
    %v2056 = vmul.f32 %v2055, 1.442695
    %v2057 = vpow.pop %v2056
    %v2058 = vadd.f32 %v2057, 1.0
    %v2059 = vrcp.pop %v2058
    %v2060 = vmul.f32 1.0, %v2059
    %2062 = vrot.lane.b32.xlu0 %v2051, 64
    %v2063 = vpop.permute.xlu0 %2062
    %v2065 = vmul.f32 %v2060, %v2063
    %2067 = vrot.lane.b32.xlu0 %v2065, 64
    %v2068 = vpop.permute.xlu0 %2067
    %v2070 = vadd.f32 %v1979, %v2068
    %v2071 = vtanh.pop %v2070
    %v2072 = vsub.f32 1.0, %v2060
    %2074 = vrot.lane.b32.xlu0 %v2071, 96
    %v2075 = vpop.permute.xlu0 %2074
    %v2077 = vmul.f32 %v2072, %v2075
    %2078 = vrot.lane.b32.xlu0 %v1980, 32
    %v2079 = vpop.permute.xlu0 %2078
    %v2081 = vmul.f32 %v2060, %v2079
    %v2082 = vadd.f32 %v2077, %v2081
    %2084 = vrot.lane.b32.xlu0 %v2082, 96
    %v2085 = vpop.permute.xlu0 %2084
    %2087 = vst.msk [vmem:[#allocation3] sm:$0xf] %vm301, %v2085
    %2088 = vst.msk [vmem:[#allocation7 + $0x18] sm:$0xf] %vm301, %v2085
    %v2089 = vld [vmem:[#allocation2 + $0x1c] sm:$0xf]
    %v2090 = vld [vmem:[#allocation3] sm:$0xf]
    %v2092 = vsel %vm198, %v2090, 0
    %2094 = vmatprep.subr.mxu0 0.0
    %2095 = vmatpush1.msra.mxu0 %v1199
    %2096 = vmatprep.subr.mxu0 0.0
    %2097 = vmatpush1.msra.mxu0 %v1200
    %2098 = vmatprep.subr.mxu0 0.0
    %2099 = vmatpush1.msra.mxu0 %v1201
    %2100 = vmatprep.subr.mxu0 0.0
    %2101 = vmatpush1.msra.mxu0 %v1202
    %2102 = vmatprep.subr.mxu0 0.0
    %2103 = vmatpush1.msra.mxu0 0.0
    %2104 = vmatprep.subr.mxu0 0.0
    %2105 = vmatpush1.msra.mxu0 0.0
    %2106 = vmatprep.subr.mxu0 0.0
    %2107 = vmatpush1.msra.mxu0 0.0
    %2108 = vmatprep.subr.mxu0 0.0
    %2109 = vmatpush1.msra.mxu0 0.0
    %2110 = vmatprep.subr.mxu0 0.0
    %2111 = vmatpush1.msra.mxu0 0.0
    %2112 = vmatprep.subr.mxu0 0.0
    %2113 = vmatpush1.msra.mxu0 0.0
    %2114 = vmatprep.subr.mxu0 0.0
    %2115 = vmatpush1.msra.mxu0 0.0
    %2116 = vmatprep.subr.mxu0 0.0
    %2117 = vmatpush1.msra.mxu0 0.0
    %2118 = vmatprep.subr.mxu0 0.0
    %2119 = vmatpush1.msra.mxu0 0.0
    %2120 = vmatprep.subr.mxu0 0.0
    %2121 = vmatpush1.msra.mxu0 0.0
    %2122 = vmatprep.subr.mxu0 0.0
    %2123 = vmatpush1.msra.mxu0 0.0
    %2124 = vmatprep.subr.mxu0 0.0
    %2125 = vmatpush1.msra.mxu0 0.0
    %2126 = vmatprep.subr.mxu0 0.0
    %2127 = vmatpush1.msra.mxu0 0.0
    %2128 = vmatprep.subr.mxu0 0.0
    %2129 = vmatpush1.msra.mxu0 0.0
    %2130 = vmatprep.subr.mxu0 0.0
    %2131 = vmatpush1.msra.mxu0 0.0
    %2132 = vmatprep.subr.mxu0 0.0
    %2133 = vmatpush1.msra.mxu0 0.0
    %2134 = vmatprep.subr.mxu0 0.0
    %2135 = vmatpush1.msra.mxu0 0.0
    %2136 = vmatprep.subr.mxu0 0.0
    %2137 = vmatpush1.msra.mxu0 0.0
    %2138 = vmatprep.subr.mxu0 0.0
    %2139 = vmatpush1.msra.mxu0 0.0
    %2140 = vmatprep.subr.mxu0 0.0
    %2141 = vmatpush1.msra.mxu0 0.0
    %2142 = vmatprep.subr.mxu0 0.0
    %2143 = vmatpush1.msra.mxu0 0.0
    %2144 = vmatprep.subr.mxu0 0.0
    %2145 = vmatpush1.msra.mxu0 0.0
    %2146 = vmatprep.subr.mxu0 0.0
    %2147 = vmatpush1.msra.mxu0 0.0
    %2148 = vmatprep.subr.mxu0 0.0
    %2149 = vmatpush1.msra.mxu0 0.0
    %2150 = vmatprep.subr.mxu0 0.0
    %2151 = vmatpush1.msra.mxu0 0.0
    %2152 = vmatprep.subr.mxu0 0.0
    %2153 = vmatpush1.msra.mxu0 0.0
    %2154 = vmatprep.subr.mxu0 0.0
    %2155 = vmatpush1.msra.mxu0 0.0
    %2156 = vmatprep.subr.mxu0 0.0
    %2157 = vmatpush1.msra.mxu0 0.0
    %2158 = vmatprep.mubr.f32.mxu0 0.0
    %2159 = vmatmul.mubr.f32.gmra.mrb[0].mxu0 %v2092
    %v2160 = vpop.f32.mrb[0].mxu0
    %v2161 = vadd.f32 %v1319, %v2160
    %v2162 = vpop.f32.mrb[0].mxu0
    %2163 = vdwg.mxu0
    %v2164 = vadd.f32 %v2089, %v2161
    %v2165 = vxor.u32 %v2164, 2147483648
    %v2166 = vmul.f32 %v2165, 1.442695
    %v2167 = vpow.pop %v2166
    %v2168 = vadd.f32 %v2167, 1.0
    %v2169 = vrcp.pop %v2168
    %v2170 = vmul.f32 1.0, %v2169
    %2172 = vrot.lane.b32.xlu0 %v2161, 64
    %v2173 = vpop.permute.xlu0 %2172
    %v2175 = vmul.f32 %v2170, %v2173
    %2177 = vrot.lane.b32.xlu0 %v2175, 64
    %v2178 = vpop.permute.xlu0 %2177
    %v2180 = vadd.f32 %v2089, %v2178
    %v2181 = vtanh.pop %v2180
    %v2182 = vsub.f32 1.0, %v2170
    %2184 = vrot.lane.b32.xlu0 %v2181, 96
    %v2185 = vpop.permute.xlu0 %2184
    %v2187 = vmul.f32 %v2182, %v2185
    %2188 = vrot.lane.b32.xlu0 %v2090, 32
    %v2189 = vpop.permute.xlu0 %2188
    %v2191 = vmul.f32 %v2170, %v2189
    %v2192 = vadd.f32 %v2187, %v2191
    %2194 = vrot.lane.b32.xlu0 %v2192, 96
    %v2195 = vpop.permute.xlu0 %2194
    %2197 = vst.msk [vmem:[#allocation3] sm:$0xf] %vm301, %v2195
    %2198 = vst.msk [vmem:[#allocation7 + $0x1c] sm:$0xf] %vm301, %v2195
    %v2199 = vld [vmem:[#allocation3] sm:$0xf]
    %s2200 = scalar_lea.vmem [#allocation8], 4
    %2201 = vst.msk [vmem:[%s2200] sm:$0xf] %vm301, %v2199
    // Predicated region
    $region46: #{tpu_custom_call.1} parent=1 // pred_check
      _
    $region47: #{tpu_custom_call.1} parent=1 // pred_check_branch
      %2203 = sbr.rel (0) target = $region49
    $region48: #{tpu_custom_call.1} parent=1 // pred_region
      %s2205 = ssub.s32 512, 512
      %2206 = vsyncadd [#allocation6], %s2205
      %s2207 = sshll.u32 [#allocation7], 4
      %s2208 = int_to_ptr.vmem [resolvable:$true] %s2207
      %2213 = dma.vmem_to_hbm [thread:$0]  %s2208, 512, %s10, [#allocation6], 128, 128, 8
    $region49: #{tpu_custom_call.1} parent=1 // pred_fallthru
      _
    // Predicated region
    $region50: #{tpu_custom_call.1} parent=1 // pred_check
      _
    $region51: #{tpu_custom_call.1} parent=1 // pred_check_branch
      %2215 = sbr.rel (0) target = $region53
    $region52: #{tpu_custom_call.1} parent=1 // pred_region
      %s2217 = ssub.s32 128, 128
      %2218 = vsyncadd [#allocation9], %s2217
      %s2219 = sshll.u32 [#allocation8], 4
      %s2220 = int_to_ptr.vmem [resolvable:$true] %s2219
      %2225 = dma.vmem_to_hbm [thread:$0]  %s2220, 128, %s11, [#allocation9], 64, 64, 4
    $region53: #{tpu_custom_call.1} parent=1 // pred_fallthru
      _
    // Predicated region
    $region54: #{tpu_custom_call.1} parent=1 // pred_check
      _
    $region55: #{tpu_custom_call.1} parent=1 // pred_check_branch
      %2227 = sbr.rel (0) target = $region57
    $region56: #{tpu_custom_call.1} parent=1 // pred_region
      %2228 = dma.done [#allocation6], 512
    $region57: #{tpu_custom_call.1} parent=1 // pred_fallthru
      _
    // Predicated region
    $region58: #{tpu_custom_call.1} parent=1 // pred_check
      _
    $region59: #{tpu_custom_call.1} parent=1 // pred_check_branch
      %2230 = sbr.rel (0) target = $region61
    $region60: #{tpu_custom_call.1} parent=1 // pred_region
      %2231 = dma.done [#allocation9], 128
    $region61: #{tpu_custom_call.1} parent=1 // pred_fallthru
      _
    %2232 = vsyncpa [#allocation5], 1
    %2233 = vsyncpa [#allocation6], 1
    %2234 = vsyncpa [#allocation9], 1

</llo_original>
